<compile_context>
chip_gen: v6e
topology: v6e:2x2x1
jax: 0.10.0
libtpu: 0.0.40
codegen_flags: <defaults>
</compile_context>

<pallas_src>
import functools

import jax
import jax.numpy as jnp
import numpy as np
from jax import lax
from jax.experimental import pallas as pl
from jax.experimental.pallas import tpu as pltpu

_BN_EPS = 1e-5
_LANE = 128


def _round_up(x, m):
    return (x + m - 1) // m * m


# ------------------------------ Pallas kernels ------------------------------

def _matmul_stats_kernel(x_ref, w_ref, y_ref, stats_ref, acc_ref):
    """Pass 1: y = x @ w (bf16 in, f32 accumulate) + per-channel sum / sumsq.

    x_ref:     (TM, TK)   bf16  im2col'd activations (zero padded)
    w_ref:     (TK, CP)   bf16  flattened conv weights (zero padded)
    y_ref:     (TM, CP)   f32   conv output tile
    stats_ref: (1, 2, CP) f32   [row-sum, row-sum-of-squares] for this M tile
    acc_ref:   (TM, CP)   f32   VMEM accumulator (persists across the K grid axis)
    """
    k = pl.program_id(1)

    @pl.when(k == 0)
    def _():
        acc_ref[...] = jnp.zeros_like(acc_ref)

    acc_ref[...] += jnp.dot(x_ref[...], w_ref[...],
                            preferred_element_type=jnp.float32)

    @pl.when(k == pl.num_programs(1) - 1)
    def _():
        y = acc_ref[...]
        y_ref[...] = y
        s1 = jnp.sum(y, axis=0, keepdims=True)        # (1, CP)
        s2 = jnp.sum(y * y, axis=0, keepdims=True)    # (1, CP)
        stats_ref[...] = jnp.concatenate([s1, s2], axis=0)[None, :, :]


def _bn_relu_kernel(y_ref, scale_ref, shift_ref, o_ref):
    """Pass 2: o = relu(y * scale + shift) with the BN affine folded per channel."""
    o_ref[...] = jnp.maximum(y_ref[...] * scale_ref[...] + shift_ref[...], 0.0)


# ------------------------------ layer wrapper -------------------------------

def _conv_bn_relu_layer(x_ndhwc, w, gamma, beta, *, tm=256, tk=512):
    """One Conv3d(VALID, stride 1) + BatchNorm3d(training stats) + ReLU layer.

    x_ndhwc: (N, D, H, W, Cin) float32
    w:       (K, K, K, Cin, Cout) float32
    returns: (N, Do, Ho, Wo, Cout) float32
    """
    K = w.shape[0]
    N, D, H, W, Cin = x_ndhwc.shape
    Cout = w.shape[-1]
    Do, Ho, Wo = D - K + 1, H - K + 1, W - K + 1
    M = N * Do * Ho * Wo
    Kc = K * K * K * Cin

    # Lane-dense padded sizes / tile plan.
    CP = _round_up(Cout, _LANE)
    KP = _round_up(Kc, _LANE)
    if KP <= tk:
        tk = KP                      # tiny contraction: single K tile
    else:
        KP = _round_up(KP, tk)       # pad contraction up to a multiple of the K tile
    if M <= tm:
        tm = _round_up(M, 8)
    MP = _round_up(M, tm)
    mt, kt = MP // tm, KP // tk

    # --- im2col (plain-JAX glue), done in bf16 so the HBM slab is half size ---
    xb = x_ndhwc.astype(jnp.bfloat16)
    patches = []
    for kd in range(K):
        for kh in range(K):
            for kw in range(K):
                patches.append(xb[:, kd:kd + Do, kh:kh + Ho, kw:kw + Wo, :])
    xcol = jnp.concatenate(patches, axis=-1).reshape(M, Kc)
    xcol = jnp.pad(xcol, ((0, MP - M), (0, KP - Kc)))
    wcol = jnp.pad(w.reshape(Kc, Cout).astype(jnp.bfloat16),
                   ((0, KP - Kc), (0, CP - Cout)))

    # --- pass 1: tiled conv matmul + per-tile per-channel sum / sumsq ---------
    y2d, part = pl.pallas_call(
        _matmul_stats_kernel,
        out_shape=(jax.ShapeDtypeStruct((MP, CP), jnp.float32),
                   jax.ShapeDtypeStruct((mt, 2, CP), jnp.float32)),
        grid_spec=pltpu.PrefetchScalarGridSpec(
            num_scalar_prefetch=0,
            grid=(mt, kt),
            in_specs=[pl.BlockSpec((tm, tk), lambda m, k: (m, k)),
                      pl.BlockSpec((tk, CP), lambda m, k: (k, 0))],
            out_specs=[pl.BlockSpec((tm, CP), lambda m, k: (m, 0)),
                       pl.BlockSpec((1, 2, CP), lambda m, k: (m, 0, 0))],
            scratch_shapes=[pltpu.VMEM((tm, CP), jnp.float32)]),
        compiler_params=pltpu.CompilerParams(
            dimension_semantics=("parallel", "arbitrary"),
            vmem_limit_bytes=32 * 1024 * 1024),
    )(xcol, wcol)

    # --- fold BN (batch statistics, biased variance) into one scale/shift -----
    # Zero-padded rows/channels contribute 0 to the sums, so dividing by the true
    # M is exact.  The conv bias was dropped: train-mode BN cancels it exactly.
    s1 = jnp.sum(part[:, 0, :], axis=0)                    # (CP,)
    s2 = jnp.sum(part[:, 1, :], axis=0)                    # (CP,)
    mean = s1 / M
    var = jnp.maximum(s2 / M - mean * mean, 0.0)
    inv = lax.rsqrt(var + _BN_EPS)
    gp = jnp.pad(gamma, (0, CP - Cout))
    bp = jnp.pad(beta, (0, CP - Cout))
    sc = gp * inv
    scale = sc.reshape(1, CP)
    shift = (bp - mean * sc).reshape(1, CP)

    # --- pass 2: normalize + affine + ReLU, lane-dense output -----------------
    out2d = pl.pallas_call(
        _bn_relu_kernel,
        out_shape=jax.ShapeDtypeStruct((MP, CP), jnp.float32),
        grid_spec=pltpu.PrefetchScalarGridSpec(
            num_scalar_prefetch=0,
            grid=(mt,),
            in_specs=[pl.BlockSpec((tm, CP), lambda m: (m, 0)),
                      pl.BlockSpec((1, CP), lambda m: (0, 0)),
                      pl.BlockSpec((1, CP), lambda m: (0, 0))],
            out_specs=pl.BlockSpec((tm, CP), lambda m: (m, 0))),
        compiler_params=pltpu.CompilerParams(
            dimension_semantics=("parallel",),
            vmem_limit_bytes=32 * 1024 * 1024),
    )(y2d, scale, shift)

    return out2d[:M, :Cout].reshape(N, Do, Ho, Wo, Cout)


def conv3d_1_forward(x_ncdhw, params):
    """Forward pass of Conv3d_1.  x_ncdhw: (N, Cin, D, H, W) -> (N, Cout, D', H', W')."""
    x = jnp.transpose(x_ncdhw, (0, 2, 3, 4, 1))            # NCDHW -> NDHWC
    # conv biases are intentionally not passed to the kernels: a per-channel
    # constant added before a train-mode BatchNorm is exactly cancelled.
    x = _conv_bn_relu_layer(x, params["w1"], params["g1"], params["be1"])
    x = _conv_bn_relu_layer(x, params["w2"], params["g2"], params["be2"])
    return jnp.transpose(x, (0, 4, 1, 2, 3))               # NDHWC -> NCDHW


# ----------------------- pure-JAX references (for checking) ------------------

def _ref_layer_ncdhw(x, w, b, gamma, beta, *, bf16_inputs):
    if bf16_inputs:   # emulate the kernel's bf16 MXU-input rounding, f32 math
        x = x.astype(jnp.bfloat16).astype(jnp.float32)
        w = w.astype(jnp.bfloat16).astype(jnp.float32)
    w_oidhw = jnp.transpose(w, (4, 3, 0, 1, 2))
    y = lax.conv_general_dilated(
        x, w_oidhw, window_strides=(1, 1, 1), padding="VALID",
        dimension_numbers=("NCDHW", "OIDHW", "NCDHW"),
        preferred_element_type=jnp.float32,
        precision=lax.Precision.HIGHEST)
    y = y + b[None, :, None, None, None]
    mean = jnp.mean(y, axis=(0, 2, 3, 4), keepdims=True)
    var = jnp.mean(jnp.square(y - mean), axis=(0, 2, 3, 4), keepdims=True)
    y = (y - mean) * lax.rsqrt(var + _BN_EPS)
    y = y * gamma[None, :, None, None, None] + beta[None, :, None, None, None]
    return jnp.maximum(y, 0.0)


def conv3d_1_reference(x_ncdhw, params, *, bf16_inputs=False):
    y = _ref_layer_ncdhw(x_ncdhw, params["w1"], params["b1"], params["g1"],
                         params["be1"], bf16_inputs=bf16_inputs)
    y = _ref_layer_ncdhw(y, params["w2"], params["b2"], params["g2"],
                         params["be2"], bf16_inputs=bf16_inputs)
    return y


if __name__ == "__main__":
    # Small shapes consistent with the module: Conv3d_1(in_channels=4,
    # out_channels=32, kernel_size=3); input (N=2, C=4, D=H=W=12).
    N, Cin, S = 2, 4, 12
    K = 3
    Cmid, Cout = 128, 32   # conv1 out channels are hard-coded to 128 in the module

    key = jax.random.PRNGKey(0)
    ks = jax.random.split(key, 9)
    x = jax.random.normal(ks[0], (N, Cin, S, S, S), dtype=jnp.float32)

    params = {
        "w1": 0.05 * jax.random.normal(ks[1], (K, K, K, Cin, Cmid), jnp.float32),
        "b1": 0.05 * jax.random.normal(ks[2], (Cmid,), jnp.float32),
        "g1": 1.0 + 0.1 * jax.random.normal(ks[3], (Cmid,), jnp.float32),
        "be1": 0.1 * jax.random.normal(ks[4], (Cmid,), jnp.float32),
        "w2": 0.05 * jax.random.normal(ks[5], (K, K, K, Cmid, Cout), jnp.float32),
        "b2": 0.05 * jax.random.normal(ks[6], (Cout,), jnp.float32),
        "g2": 1.0 + 0.1 * jax.random.normal(ks[7], (Cout,), jnp.float32),
        "be2": 0.1 * jax.random.normal(ks[8], (Cout,), jnp.float32),
    }

    out = jax.block_until_ready(jax.jit(conv3d_1_forward)(x, params))

    So = S - 2 * (K - 1)
    expected_shape = (N, Cout, So, So, So)
    assert out.shape == expected_shape, (out.shape, expected_shape)

    # Check 1 (tight): reference with the same bf16 rounding of the conv inputs as
    # the MXU path -> validates tiling / two-pass BN / padding / bias-folding exactly.
    ref_bf16 = jax.block_until_ready(
        jax.jit(functools.partial(conv3d_1_reference, bf16_inputs=True))(x, params))
    np.testing.assert_allclose(np.asarray(out), np.asarray(ref_bf16),
                               atol=2e-3, rtol=2e-3)

    # Check 2 (loose): against the faithful f32 module semantics; the only difference
    # is the intended bf16 rounding of the MXU inputs.
    ref_f32 = jax.block_until_ready(jax.jit(conv3d_1_reference)(x, params))
    np.testing.assert_allclose(np.asarray(out), np.asarray(ref_f32),
                               atol=5e-2, rtol=5e-2)

    print("KERNEL_OK")
</pallas_src>

<mosaic_0001>
module attributes {stable_mosaic.version = 11 : i64} {
  func.func @_matmul_stats_kernel(%arg0: i32, %arg1: i32, %arg2: memref<256x128xbf16, #tpu.memory_space<vmem>>, %arg3: memref<128x128xbf16, #tpu.memory_space<vmem>>, %arg4: memref<256x128xf32, #tpu.memory_space<vmem>>, %arg5: memref<1x2x128xf32, #tpu.memory_space<vmem>>, %arg6: memref<256x128xf32, #tpu.memory_space<vmem>>) attributes {dimension_semantics = [#tpu.dimension_semantics<parallel>, #tpu.dimension_semantics<arbitrary>], iteration_bounds = array<i64: 8, 1>, scalar_prefetch = 0 : i64, scratch_operands = 1 : i64, tpu.core_type = #tpu.core_type<tc>, window_params = [{transform_indices = @transform_0, window_bounds = array<i64: 256, 128>}, {transform_indices = @transform_1, window_bounds = array<i64: 128, 128>}, {transform_indices = @transform_2, window_bounds = array<i64: 256, 128>}, {transform_indices = @transform_3, window_bounds = array<i64: 1, 2, 128>}]} {
    %c0_i32 = arith.constant 0 : i32
    %0 = arith.cmpi eq, %arg1, %c0_i32 : i32
    %1 = arith.extui %0 : i1 to i32
    %c0_i32_0 = arith.constant 0 : i32
    %2 = arith.cmpi ne, %1, %c0_i32_0 : i32
    scf.if %2 {
      %cst_10 = arith.constant 0.000000e+00 : f32
      %12 = vector.broadcast %cst_10 : f32 to vector<256x128xf32>
      %c0_11 = arith.constant 0 : index
      %c0_12 = arith.constant 0 : index
      %13 = vector.load %arg6[%c0_11, %c0_12] : memref<256x128xf32, #tpu.memory_space<vmem>>, vector<256x128xf32>
      tpu.vector_store %arg6[%c0_11, %c0_12], %12 {strides = array<i32>} : memref<256x128xf32, #tpu.memory_space<vmem>>, vector<256x128xf32>,
    } else {
    }
    %c0 = arith.constant 0 : index
    %c0_1 = arith.constant 0 : index
    %3 = vector.load %arg6[%c0, %c0_1] : memref<256x128xf32, #tpu.memory_space<vmem>>, vector<256x128xf32>
    %c0_2 = arith.constant 0 : index
    %c0_3 = arith.constant 0 : index
    %4 = vector.load %arg2[%c0_2, %c0_3] : memref<256x128xbf16, #tpu.memory_space<vmem>>, vector<256x128xbf16>
    %c0_4 = arith.constant 0 : index
    %c0_5 = arith.constant 0 : index
    %5 = vector.load %arg3[%c0_4, %c0_5] : memref<128x128xbf16, #tpu.memory_space<vmem>>, vector<128x128xbf16>
    %cst = arith.constant dense<0.000000e+00> : vector<256x128xf32>
    %6 = tpu.matmul %4, %5, %cst {dimension_numbers = #tpu.dot_dimension_numbers<[1], [0], [0], [1], [0, 0, 1, 1], [], []>} : vector<256x128xbf16>, vector<128x128xbf16>, vector<256x128xf32> -> vector<256x128xf32>
    %7 = arith.addf %3, %6 : vector<256x128xf32>
    %c0_6 = arith.constant 0 : index
    %c0_7 = arith.constant 0 : index
    %8 = vector.load %arg6[%c0_6, %c0_7] : memref<256x128xf32, #tpu.memory_space<vmem>>, vector<256x128xf32>
    tpu.vector_store %arg6[%c0_6, %c0_7], %7 {strides = array<i32>} : memref<256x128xf32, #tpu.memory_space<vmem>>, vector<256x128xf32>,
    %c0_i32_8 = arith.constant 0 : i32
    %9 = arith.cmpi eq, %arg1, %c0_i32_8 : i32
    %10 = arith.extui %9 : i1 to i32
    %c0_i32_9 = arith.constant 0 : i32
    %11 = arith.cmpi ne, %10, %c0_i32_9 : i32
    scf.if %11 {
      %c0_10 = arith.constant 0 : index
      %c0_11 = arith.constant 0 : index
      %12 = vector.load %arg6[%c0_10, %c0_11] : memref<256x128xf32, #tpu.memory_space<vmem>>, vector<256x128xf32>
      %c0_12 = arith.constant 0 : index
      %c0_13 = arith.constant 0 : index
      %13 = vector.load %arg4[%c0_12, %c0_13] : memref<256x128xf32, #tpu.memory_space<vmem>>, vector<256x128xf32>
      tpu.vector_store %arg4[%c0_12, %c0_13], %12 {strides = array<i32>} : memref<256x128xf32, #tpu.memory_space<vmem>>, vector<256x128xf32>,
      %cst_14 = arith.constant dense<0.000000e+00> : vector<128xf32>
      %14 = vector.multi_reduction <add>, %12, %cst_14 [0] : vector<256x128xf32> to vector<128xf32>
      %15 = vector.shape_cast %14 : vector<128xf32> to vector<1x128xf32>
      %16 = arith.mulf %12, %12 : vector<256x128xf32>
      %cst_15 = arith.constant dense<0.000000e+00> : vector<128xf32>
      %17 = vector.multi_reduction <add>, %16, %cst_15 [0] : vector<256x128xf32> to vector<128xf32>
      %18 = vector.shape_cast %17 : vector<128xf32> to vector<1x128xf32>
      %19 = tpu.concatenate %15, %18 in 0 : vector<1x128xf32>, vector<1x128xf32> -> vector<2x128xf32>
      %20 = vector.shape_cast %19 : vector<2x128xf32> to vector<1x2x128xf32>
      %c0_16 = arith.constant 0 : index
      %c0_17 = arith.constant 0 : index
      %c0_18 = arith.constant 0 : index
      %21 = vector.load %arg5[%c0_16, %c0_17, %c0_18] : memref<1x2x128xf32, #tpu.memory_space<vmem>>, vector<1x2x128xf32>
      tpu.vector_store %arg5[%c0_16, %c0_17, %c0_18], %20 {strides = array<i32>} : memref<1x2x128xf32, #tpu.memory_space<vmem>>, vector<1x2x128xf32>,
    } else {
    }
    return
  }
  func.func @transform_0(%arg0: i32, %arg1: i32) -> (i32, i32) {
    %c0_i32 = arith.constant 0 : i32
    return %arg0, %arg1 : i32, i32
  }
  func.func @transform_1(%arg0: i32, %arg1: i32) -> (i32, i32) {
    %c0_i32 = arith.constant 0 : i32
    %c0_i32_0 = arith.constant 0 : i32
    return %arg1, %c0_i32 : i32, i32
  }
  func.func @transform_2(%arg0: i32, %arg1: i32) -> (i32, i32) {
    %c0_i32 = arith.constant 0 : i32
    %c0_i32_0 = arith.constant 0 : i32
    return %arg0, %c0_i32 : i32, i32
  }
  func.func @transform_3(%arg0: i32, %arg1: i32) -> (i32, i32, i32) {
    %c0_i32 = arith.constant 0 : i32
    %c0_i32_0 = arith.constant 0 : i32
    %c0_i32_1 = arith.constant 0 : i32
    return %arg0, %c0_i32, %c0_i32_0 : i32, i32, i32
  }
}

module attributes {stable_mosaic.version = 11 : i64} {
  func.func @_bn_relu_kernel(%arg0: i32, %arg1: memref<256x128xf32, #tpu.memory_space<vmem>>, %arg2: memref<1x128xf32, #tpu.memory_space<vmem>>, %arg3: memref<1x128xf32, #tpu.memory_space<vmem>>, %arg4: memref<256x128xf32, #tpu.memory_space<vmem>>) attributes {dimension_semantics = [#tpu.dimension_semantics<parallel>], iteration_bounds = array<i64: 8>, scalar_prefetch = 0 : i64, scratch_operands = 0 : i64, tpu.core_type = #tpu.core_type<tc>, window_params = [{transform_indices = @transform_0, window_bounds = array<i64: 256, 128>}, {pipeline_mode = #tpu.pipeline_mode<synchronous>, transform_indices = @transform_1, window_bounds = array<i64: 1, 128>}, {pipeline_mode = #tpu.pipeline_mode<synchronous>, transform_indices = @transform_2, window_bounds = array<i64: 1, 128>}, {transform_indices = @transform_3, window_bounds = array<i64: 256, 128>}]} {
    %c0 = arith.constant 0 : index
    %c0_0 = arith.constant 0 : index
    %0 = vector.load %arg1[%c0, %c0_0] : memref<256x128xf32, #tpu.memory_space<vmem>>, vector<256x128xf32>
    %c0_1 = arith.constant 0 : index
    %c0_2 = arith.constant 0 : index
    %1 = vector.load %arg2[%c0_1, %c0_2] : memref<1x128xf32, #tpu.memory_space<vmem>>, vector<1x128xf32>
    %2 = vector.broadcast %1 : vector<1x128xf32> to vector<256x128xf32>
    %3 = arith.mulf %0, %2 : vector<256x128xf32>
    %c0_3 = arith.constant 0 : index
    %c0_4 = arith.constant 0 : index
    %4 = vector.load %arg3[%c0_3, %c0_4] : memref<1x128xf32, #tpu.memory_space<vmem>>, vector<1x128xf32>
    %5 = vector.broadcast %4 : vector<1x128xf32> to vector<256x128xf32>
    %6 = arith.addf %3, %5 : vector<256x128xf32>
    %cst = arith.constant 0.000000e+00 : f32
    %7 = vector.broadcast %cst : f32 to vector<256x128xf32>
    %8 = arith.maximumf %6, %7 : vector<256x128xf32>
    %c0_5 = arith.constant 0 : index
    %c0_6 = arith.constant 0 : index
    %9 = vector.load %arg4[%c0_5, %c0_6] : memref<256x128xf32, #tpu.memory_space<vmem>>, vector<256x128xf32>
    tpu.vector_store %arg4[%c0_5, %c0_6], %8 {strides = array<i32>} : memref<256x128xf32, #tpu.memory_space<vmem>>, vector<256x128xf32>,
    return
  }
  func.func @transform_0(%arg0: i32) -> (i32, i32) {
    %c0_i32 = arith.constant 0 : i32
    %c0_i32_0 = arith.constant 0 : i32
    return %arg0, %c0_i32 : i32, i32
  }
  func.func @transform_1(%arg0: i32) -> (i32, i32) {
    %c0_i32 = arith.constant 0 : i32
    %c0_i32_0 = arith.constant 0 : i32
    %c0_i32_1 = arith.constant 0 : i32
    return %c0_i32, %c0_i32_0 : i32, i32
  }
  func.func @transform_2(%arg0: i32) -> (i32, i32) {
    %c0_i32 = arith.constant 0 : i32
    %c0_i32_0 = arith.constant 0 : i32
    %c0_i32_1 = arith.constant 0 : i32
    return %c0_i32, %c0_i32_0 : i32, i32
  }
  func.func @transform_3(%arg0: i32) -> (i32, i32) {
    %c0_i32 = arith.constant 0 : i32
    %c0_i32_0 = arith.constant 0 : i32
    return %arg0, %c0_i32 : i32, i32
  }
}

module attributes {stable_mosaic.version = 11 : i64} {
  func.func @_matmul_stats_kernel(%arg0: i32, %arg1: i32, %arg2: memref<256x512xbf16, #tpu.memory_space<vmem>>, %arg3: memref<512x128xbf16, #tpu.memory_space<vmem>>, %arg4: memref<256x128xf32, #tpu.memory_space<vmem>>, %arg5: memref<1x2x128xf32, #tpu.memory_space<vmem>>, %arg6: memref<256x128xf32, #tpu.memory_space<vmem>>) attributes {dimension_semantics = [#tpu.dimension_semantics<parallel>, #tpu.dimension_semantics<arbitrary>], iteration_bounds = array<i64: 4, 7>, scalar_prefetch = 0 : i64, scratch_operands = 1 : i64, tpu.core_type = #tpu.core_type<tc>, window_params = [{transform_indices = @transform_0, window_bounds = array<i64: 256, 512>}, {transform_indices = @transform_1, window_bounds = array<i64: 512, 128>}, {transform_indices = @transform_2, window_bounds = array<i64: 256, 128>}, {transform_indices = @transform_3, window_bounds = array<i64: 1, 2, 128>}]} {
    %c0_i32 = arith.constant 0 : i32
    %0 = arith.cmpi eq, %arg1, %c0_i32 : i32
    %1 = arith.extui %0 : i1 to i32
    %c0_i32_0 = arith.constant 0 : i32
    %2 = arith.cmpi ne, %1, %c0_i32_0 : i32
    scf.if %2 {
      %cst_9 = arith.constant 0.000000e+00 : f32
      %12 = vector.broadcast %cst_9 : f32 to vector<256x128xf32>
      %c0_10 = arith.constant 0 : index
      %c0_11 = arith.constant 0 : index
      %13 = vector.load %arg6[%c0_10, %c0_11] : memref<256x128xf32, #tpu.memory_space<vmem>>, vector<256x128xf32>
      tpu.vector_store %arg6[%c0_10, %c0_11], %12 {strides = array<i32>} : memref<256x128xf32, #tpu.memory_space<vmem>>, vector<256x128xf32>,
    } else {
    }
    %c0 = arith.constant 0 : index
    %c0_1 = arith.constant 0 : index
    %3 = vector.load %arg6[%c0, %c0_1] : memref<256x128xf32, #tpu.memory_space<vmem>>, vector<256x128xf32>
    %c0_2 = arith.constant 0 : index
    %c0_3 = arith.constant 0 : index
    %4 = vector.load %arg2[%c0_2, %c0_3] : memref<256x512xbf16, #tpu.memory_space<vmem>>, vector<256x512xbf16>
    %c0_4 = arith.constant 0 : index
    %c0_5 = arith.constant 0 : index
    %5 = vector.load %arg3[%c0_4, %c0_5] : memref<512x128xbf16, #tpu.memory_space<vmem>>, vector<512x128xbf16>
    %cst = arith.constant dense<0.000000e+00> : vector<256x128xf32>
    %6 = tpu.matmul %4, %5, %cst {dimension_numbers = #tpu.dot_dimension_numbers<[1], [0], [0], [1], [0, 0, 1, 1], [], []>} : vector<256x512xbf16>, vector<512x128xbf16>, vector<256x128xf32> -> vector<256x128xf32>
    %7 = arith.addf %3, %6 : vector<256x128xf32>
    %c0_6 = arith.constant 0 : index
    %c0_7 = arith.constant 0 : index
    %8 = vector.load %arg6[%c0_6, %c0_7] : memref<256x128xf32, #tpu.memory_space<vmem>>, vector<256x128xf32>
    tpu.vector_store %arg6[%c0_6, %c0_7], %7 {strides = array<i32>} : memref<256x128xf32, #tpu.memory_space<vmem>>, vector<256x128xf32>,
    %c6_i32 = arith.constant 6 : i32
    %9 = arith.cmpi eq, %arg1, %c6_i32 : i32
    %10 = arith.extui %9 : i1 to i32
    %c0_i32_8 = arith.constant 0 : i32
    %11 = arith.cmpi ne, %10, %c0_i32_8 : i32
    scf.if %11 {
      %c0_9 = arith.constant 0 : index
      %c0_10 = arith.constant 0 : index
      %12 = vector.load %arg6[%c0_9, %c0_10] : memref<256x128xf32, #tpu.memory_space<vmem>>, vector<256x128xf32>
      %c0_11 = arith.constant 0 : index
      %c0_12 = arith.constant 0 : index
      %13 = vector.load %arg4[%c0_11, %c0_12] : memref<256x128xf32, #tpu.memory_space<vmem>>, vector<256x128xf32>
      tpu.vector_store %arg4[%c0_11, %c0_12], %12 {strides = array<i32>} : memref<256x128xf32, #tpu.memory_space<vmem>>, vector<256x128xf32>,
      %cst_13 = arith.constant dense<0.000000e+00> : vector<128xf32>
      %14 = vector.multi_reduction <add>, %12, %cst_13 [0] : vector<256x128xf32> to vector<128xf32>
      %15 = vector.shape_cast %14 : vector<128xf32> to vector<1x128xf32>
      %16 = arith.mulf %12, %12 : vector<256x128xf32>
      %cst_14 = arith.constant dense<0.000000e+00> : vector<128xf32>
      %17 = vector.multi_reduction <add>, %16, %cst_14 [0] : vector<256x128xf32> to vector<128xf32>
      %18 = vector.shape_cast %17 : vector<128xf32> to vector<1x128xf32>
      %19 = tpu.concatenate %15, %18 in 0 : vector<1x128xf32>, vector<1x128xf32> -> vector<2x128xf32>
      %20 = vector.shape_cast %19 : vector<2x128xf32> to vector<1x2x128xf32>
      %c0_15 = arith.constant 0 : index
      %c0_16 = arith.constant 0 : index
      %c0_17 = arith.constant 0 : index
      %21 = vector.load %arg5[%c0_15, %c0_16, %c0_17] : memref<1x2x128xf32, #tpu.memory_space<vmem>>, vector<1x2x128xf32>
      tpu.vector_store %arg5[%c0_15, %c0_16, %c0_17], %20 {strides = array<i32>} : memref<1x2x128xf32, #tpu.memory_space<vmem>>, vector<1x2x128xf32>,
    } else {
    }
    return
  }
  func.func @transform_0(%arg0: i32, %arg1: i32) -> (i32, i32) {
    %c0_i32 = arith.constant 0 : i32
    return %arg0, %arg1 : i32, i32
  }
  func.func @transform_1(%arg0: i32, %arg1: i32) -> (i32, i32) {
    %c0_i32 = arith.constant 0 : i32
    %c0_i32_0 = arith.constant 0 : i32
    return %arg1, %c0_i32 : i32, i32
  }
  func.func @transform_2(%arg0: i32, %arg1: i32) -> (i32, i32) {
    %c0_i32 = arith.constant 0 : i32
    %c0_i32_0 = arith.constant 0 : i32
    return %arg0, %c0_i32 : i32, i32
  }
  func.func @transform_3(%arg0: i32, %arg1: i32) -> (i32, i32, i32) {
    %c0_i32 = arith.constant 0 : i32
    %c0_i32_0 = arith.constant 0 : i32
    %c0_i32_1 = arith.constant 0 : i32
    return %arg0, %c0_i32, %c0_i32_0 : i32, i32, i32
  }
}

module attributes {stable_mosaic.version = 11 : i64} {
  func.func @_bn_relu_kernel(%arg0: i32, %arg1: memref<256x128xf32, #tpu.memory_space<vmem>>, %arg2: memref<1x128xf32, #tpu.memory_space<vmem>>, %arg3: memref<1x128xf32, #tpu.memory_space<vmem>>, %arg4: memref<256x128xf32, #tpu.memory_space<vmem>>) attributes {dimension_semantics = [#tpu.dimension_semantics<parallel>], iteration_bounds = array<i64: 4>, scalar_prefetch = 0 : i64, scratch_operands = 0 : i64, tpu.core_type = #tpu.core_type<tc>, window_params = [{transform_indices = @transform_0, window_bounds = array<i64: 256, 128>}, {pipeline_mode = #tpu.pipeline_mode<synchronous>, transform_indices = @transform_1, window_bounds = array<i64: 1, 128>}, {pipeline_mode = #tpu.pipeline_mode<synchronous>, transform_indices = @transform_2, window_bounds = array<i64: 1, 128>}, {transform_indices = @transform_3, window_bounds = array<i64: 256, 128>}]} {
    %c0 = arith.constant 0 : index
    %c0_0 = arith.constant 0 : index
    %0 = vector.load %arg1[%c0, %c0_0] : memref<256x128xf32, #tpu.memory_space<vmem>>, vector<256x128xf32>
    %c0_1 = arith.constant 0 : index
    %c0_2 = arith.constant 0 : index
    %1 = vector.load %arg2[%c0_1, %c0_2] : memref<1x128xf32, #tpu.memory_space<vmem>>, vector<1x128xf32>
    %2 = vector.broadcast %1 : vector<1x128xf32> to vector<256x128xf32>
    %3 = arith.mulf %0, %2 : vector<256x128xf32>
    %c0_3 = arith.constant 0 : index
    %c0_4 = arith.constant 0 : index
    %4 = vector.load %arg3[%c0_3, %c0_4] : memref<1x128xf32, #tpu.memory_space<vmem>>, vector<1x128xf32>
    %5 = vector.broadcast %4 : vector<1x128xf32> to vector<256x128xf32>
    %6 = arith.addf %3, %5 : vector<256x128xf32>
    %cst = arith.constant 0.000000e+00 : f32
    %7 = vector.broadcast %cst : f32 to vector<256x128xf32>
    %8 = arith.maximumf %6, %7 : vector<256x128xf32>
    %c0_5 = arith.constant 0 : index
    %c0_6 = arith.constant 0 : index
    %9 = vector.load %arg4[%c0_5, %c0_6] : memref<256x128xf32, #tpu.memory_space<vmem>>, vector<256x128xf32>
    tpu.vector_store %arg4[%c0_5, %c0_6], %8 {strides = array<i32>} : memref<256x128xf32, #tpu.memory_space<vmem>>, vector<256x128xf32>,
    return
  }
  func.func @transform_0(%arg0: i32) -> (i32, i32) {
    %c0_i32 = arith.constant 0 : i32
    %c0_i32_0 = arith.constant 0 : i32
    return %arg0, %c0_i32 : i32, i32
  }
  func.func @transform_1(%arg0: i32) -> (i32, i32) {
    %c0_i32 = arith.constant 0 : i32
    %c0_i32_0 = arith.constant 0 : i32
    %c0_i32_1 = arith.constant 0 : i32
    return %c0_i32, %c0_i32_0 : i32, i32
  }
  func.func @transform_2(%arg0: i32) -> (i32, i32) {
    %c0_i32 = arith.constant 0 : i32
    %c0_i32_0 = arith.constant 0 : i32
    %c0_i32_1 = arith.constant 0 : i32
    return %c0_i32, %c0_i32_0 : i32, i32
  }
  func.func @transform_3(%arg0: i32) -> (i32, i32) {
    %c0_i32 = arith.constant 0 : i32
    %c0_i32_0 = arith.constant 0 : i32
    return %arg0, %c0_i32 : i32, i32
  }
}

</mosaic_0001>

<llo_original>
// kernel: conv3d_1_forward.4
$region0: #{conv3d_1_forward.4}
  #allocation0 [shape = 'u32[]', space=smem, size = 0x4, offset = 0x4, fixed_abs, tag = 'smem constant byte address 0x4 - core index']
  #allocation1 [shape = 'u32[144,128]{1,0:T(1,128)}', space=vmem, size = 0x12000, scoped, tag = 'internal scratch']
  #allocation2 [shape = 'f32[256,128]{1,0:T(8,128)}', space=vmem, size = 0x20000, scoped, tag = 'scratch operand']
  %s0 = inlined_call_operand.vmem [shape: bf16[2048,128], index: 0, kind: input, shape index: {}]
  %s1 = inlined_call_operand.vmem [shape: bf16[128,128], index: 1, kind: input, shape index: {}]
  %s2 = inlined_call_operand.vmem [shape: f32[2048,128], index: 2, kind: output, shape index: {0}]
  %s3 = inlined_call_operand.vmem [shape: f32[8,2,128], index: 3, kind: output, shape index: {1}]
  %4 = xla_tuple %s2, %s3
  %s5 = sld [smem:[#allocation0]]
  $region57: #{conv3d_1_forward.4} parent=0
    _
  %s7 = ssub.s32 1, %s5
  %s8 = scalar_select 0, %s7, %s5
  loop: start=0, step=1, limit=10
  $region2: #{conv3d_1_forward.4} parent=0 // loop_pre_header
    _
  $region3: #{conv3d_1_forward.4} parent=0 // loop_header
    %s10 = sphi 0, %s14
    %p11 = scmp.ge.s32.totalorder %s10, 10
    %s17 = sphi 0, %s29
    %s18 = sphi 0, %s25
    %s19 = sphi 0, %s17
    %s20 = sphi 0, %s18
    %s21 = sphi 0, %s19
    %s22 = sphi 0, %s20
    %s34 = sphi 0, %s36
    %s37 = sphi 0, %s34
    %s38 = sphi 0, %s37
    %s54 = sphi 0, %s38
    %s60 = sphi 0, %s62
    %s63 = sphi 0, %s60
    %s64 = sphi 0, %s63
    %s80 = sphi 0, %s64
    %s86 = sphi 0, %s88
    %s89 = sphi 0, %s86
    %s90 = sphi 0, %s89
    %s106 = sphi 0, %s90
    %s112 = sphi 0, %s114
    %s115 = sphi 0, %s112
    %s116 = sphi 0, %s115
    %s132 = sphi 0, %s116
  $region4: #{conv3d_1_forward.4} parent=0 // loop_header_branch
    %13 = sbr.rel (%p11) target = $region8
  $region5: #{conv3d_1_forward.4} parent=0 // loop_body
    %s15 = ssub.s32 %s10, 1
    %s16 = ssub.s32 %s10, 2
    %s23 = sadd.s32 1, %s18
    %p24 = scmp.ge.s32.totalorder %s23, 1
    %s25 = scalar_select %p24, 0, %s23
    %s26 = sadd.s32 1, %s17
    %s27 = scalar_select %p24, %s26, %s17
    %p28 = scmp.ge.s32.totalorder %s27, 8
    %s29 = scalar_select %p28, 0, %s27
    %s30 = ssub.s32 %s17, %s29
    %s31 = ssub.s32 %s18, %s25
    %s32 = sor.u32 %s30, %s31
    %p33 = scmp.eq.s32.totalorder %s32, 0
    %s35 = sadd.s32 %s34, 1
    %s36 = scalar_select %p33, %s34, %s35
    %p39 = pneg %p33
    %p40 = scmp.eq.s32.totalorder %s10, 7
    %p41 = por %p39, %p40
    %p42 = scmp.ne.s32.totalorder %s34, %s37
    %p43 = scmp.eq.s32.totalorder %s10, 0
    %p44 = por %p42, %p43
    %p45 = scmp.ne.s32.totalorder %s34, %s37
    %p46 = scmp.eq.s32.totalorder %s15, 7
    %p47 = por %p45, %p46
    %p48 = scmp.ne.s32.totalorder %s37, %s38
    %p49 = scmp.eq.s32.totalorder %s15, 0
    %p50 = por %p48, %p49
    %p51 = scmp.ne.s32.totalorder %s37, %s38
    %p52 = scmp.eq.s32.totalorder %s16, 7
    %p53 = por %p51, %p52
    %p55 = scmp.ne.s32.totalorder %s38, %s54
    %p56 = scmp.eq.s32.totalorder %s16, 0
    %p57 = por %p55, %p56
    %s58 = ssub.s32 %s18, %s25
    %p59 = scmp.eq.s32.totalorder %s58, 0
    %s61 = sadd.s32 %s60, 1
    %s62 = scalar_select %p59, %s60, %s61
    %p65 = pneg %p59
    %p66 = scmp.eq.s32.totalorder %s10, 7
    %p67 = por %p65, %p66
    %p68 = scmp.ne.s32.totalorder %s60, %s63
    %p69 = scmp.eq.s32.totalorder %s10, 0
    %p70 = por %p68, %p69
    %p71 = scmp.ne.s32.totalorder %s60, %s63
    %p72 = scmp.eq.s32.totalorder %s15, 7
    %p73 = por %p71, %p72
    %p74 = scmp.ne.s32.totalorder %s63, %s64
    %p75 = scmp.eq.s32.totalorder %s15, 0
    %p76 = por %p74, %p75
    %p77 = scmp.ne.s32.totalorder %s63, %s64
    %p78 = scmp.eq.s32.totalorder %s16, 7
    %p79 = por %p77, %p78
    %p81 = scmp.ne.s32.totalorder %s64, %s80
    %p82 = scmp.eq.s32.totalorder %s16, 0
    %p83 = por %p81, %p82
    %s84 = ssub.s32 %s17, %s29
    %p85 = scmp.eq.s32.totalorder %s84, 0
    %s87 = sadd.s32 %s86, 1
    %s88 = scalar_select %p85, %s86, %s87
    %p91 = pneg %p85
    %p92 = scmp.eq.s32.totalorder %s10, 7
    %p93 = por %p91, %p92
    %p94 = scmp.ne.s32.totalorder %s86, %s89
    %p95 = scmp.eq.s32.totalorder %s10, 0
    %p96 = por %p94, %p95
    %p97 = scmp.ne.s32.totalorder %s86, %s89
    %p98 = scmp.eq.s32.totalorder %s15, 7
    %p99 = por %p97, %p98
    %p100 = scmp.ne.s32.totalorder %s89, %s90
    %p101 = scmp.eq.s32.totalorder %s15, 0
    %p102 = por %p100, %p101
    %p103 = scmp.ne.s32.totalorder %s89, %s90
    %p104 = scmp.eq.s32.totalorder %s16, 7
    %p105 = por %p103, %p104
    %p107 = scmp.ne.s32.totalorder %s90, %s106
    %p108 = scmp.eq.s32.totalorder %s16, 0
    %p109 = por %p107, %p108
    %s110 = ssub.s32 %s17, %s29
    %p111 = scmp.eq.s32.totalorder %s110, 0
    %s113 = sadd.s32 %s112, 1
    %s114 = scalar_select %p111, %s112, %s113
    %p117 = pneg %p111
    %p118 = scmp.eq.s32.totalorder %s10, 7
    %p119 = por %p117, %p118
    %p120 = scmp.ne.s32.totalorder %s112, %s115
    %p121 = scmp.eq.s32.totalorder %s10, 0
    %p122 = por %p120, %p121
    %p123 = scmp.ne.s32.totalorder %s112, %s115
    %p124 = scmp.eq.s32.totalorder %s15, 7
    %p125 = por %p123, %p124
    %p126 = scmp.ne.s32.totalorder %s115, %s116
    %p127 = scmp.eq.s32.totalorder %s15, 0
    %p128 = por %p126, %p127
    %p129 = scmp.ne.s32.totalorder %s115, %s116
    %p130 = scmp.eq.s32.totalorder %s16, 7
    %p131 = por %p129, %p130
    %p133 = scmp.ne.s32.totalorder %s116, %s132
    %p134 = scmp.eq.s32.totalorder %s16, 0
    %p135 = por %p133, %p134
    %p136 = scmp.le.s32.totalorder 1, %s10
    %p137 = scmp.lt.s32.totalorder %s10, 9
    %p138 = pnand %p136, %p137
    %p139 = pneg %p138
    // Predicated region
    $region9: #{conv3d_1_forward.4} parent=5 // pred_check
      _
    $region10: #{conv3d_1_forward.4} parent=5 // pred_check_branch
      %141 = sbr.rel (%p138) target = $region12
    $region11: #{conv3d_1_forward.4} parent=5 // pred_region
      %s142 = ssub.s32 %s10, 1
      // Predicated region
      $region13: #{conv3d_1_forward.4} parent=11 // pred_check
        %p143 = pneg %p76
      $region14: #{conv3d_1_forward.4} parent=11 // pred_check_branch
        %145 = sbr.rel (%p143) target = $region16
      $region15: #{conv3d_1_forward.4} parent=11 // pred_region
        %s146 = smul.u32 16, %s20
        %p147 = scmp.lt.s32.totalorder %s146, 15
        %s148 = scalar_select %p147, %s146, 15
        %s149 = smul.addr %s148, 4
        %s150 = scalar_lea.vmem %s1, %s149
        %s151 = smul.u32 16, %s20
      $region16: #{conv3d_1_forward.4} parent=11 // pred_fallthru
        _
    $region12: #{conv3d_1_forward.4} parent=5 // pred_fallthru
      _
    %p152 = scmp.lt.s32.totalorder %s10, 8
    // Predicated region
    $region17: #{conv3d_1_forward.4} parent=5 // pred_check
      %p153 = pneg %p152
    $region18: #{conv3d_1_forward.4} parent=5 // pred_check_branch
      %155 = sbr.rel (%p153) target = $region20
    $region19: #{conv3d_1_forward.4} parent=5 // pred_region
      // Predicated region
      $region21: #{conv3d_1_forward.4} parent=19 // pred_check
        %p156 = pneg %p44
      $region22: #{conv3d_1_forward.4} parent=19 // pred_check_branch
        %158 = sbr.rel (%p156) target = $region24
      $region23: #{conv3d_1_forward.4} parent=19 // pred_region
        %s159 = smul.u32 32, %s17
        %p160 = scmp.lt.s32.totalorder %s159, 255
        %s161 = scalar_select %p160, %s159, 255
        %p162 = scmp.lt.s32.totalorder %s18, 0
        %s163 = scalar_select %p162, %s18, 0
        %s164 = sadd.s32 %s163, %s161
        %s165 = smul.addr %s164, 4
        %s166 = scalar_lea.vmem %s0, %s165
        %s167 = smul.u32 32, %s17
      $region24: #{conv3d_1_forward.4} parent=19 // pred_fallthru
        _
    $region20: #{conv3d_1_forward.4} parent=5 // pred_fallthru
      _
    %p168 = scmp.le.s32.totalorder 1, %s10
    %p169 = scmp.lt.s32.totalorder %s10, 9
    %p170 = pnand %p168, %p169
    %p171 = pneg %p170
    // Predicated region
    $region25: #{conv3d_1_forward.4} parent=5 // pred_check
      _
    $region26: #{conv3d_1_forward.4} parent=5 // pred_check_branch
      %173 = sbr.rel (%p170) target = $region28
    $region27: #{conv3d_1_forward.4} parent=5 // pred_region
      %s174 = ssub.s32 %s10, 1
      %s175 = smul.u32 32, %s19
      %p176 = scmp.lt.s32.totalorder %s175, 255
      %s177 = scalar_select %p176, %s175, 255
      %p178 = scmp.lt.s32.totalorder %s20, 0
      %s179 = scalar_select %p178, %s20, 0
      %s180 = sadd.s32 %s179, %s177
      %s181 = smul.addr %s180, 4
      %s182 = scalar_lea.vmem %s0, %s181
      %p183 = pneg %p50
      %p184 = pneg %p47
      %s185 = smul.u32 16, %s20
      %p186 = scmp.lt.s32.totalorder %s185, 15
      %s187 = scalar_select %p186, %s185, 15
      %s188 = smul.addr %s187, 4
      %s189 = scalar_lea.vmem %s1, %s188
      %p190 = pneg %p76
      %p191 = pneg %p73
      %p192 = pneg %p102
      %p193 = pneg %p99
      %s194 = smul.u32 32, %s19
      %p195 = scmp.lt.s32.totalorder %s194, 255
      %s196 = scalar_select %p195, %s194, 255
      %s197 = smul.addr %s196, 8
      %s198 = scalar_lea.vmem %s2, %s197
      %p199 = pneg %p128
      %p200 = pneg %p125
      %p201 = scmp.lt.s32.totalorder %s19, 7
      %s202 = scalar_select %p201, %s19, 7
      %s203 = smul.addr %s202, 2
      %s204 = scalar_lea.vmem %s3, %s203
      %s205 = smul.u32 32, %s19
      %p206 = scmp.lt.s32.totalorder %s205, 255
      %s207 = scalar_select %p206, %s205, 255
      %p208 = scmp.lt.s32.totalorder %s20, 0
      %s209 = scalar_select %p208, %s20, 0
      %s210 = sadd.s32 %s209, %s207
      %s211 = smul.addr %s210, 4
      %s212 = scalar_lea.vmem %s0, %s211
      %s213 = smul.u32 32, %s19
      %s214 = smul.u32 16, %s20
      %p215 = scmp.lt.s32.totalorder %s214, 15
      %s216 = scalar_select %p215, %s214, 15
      %s217 = smul.addr %s216, 4
      %s218 = scalar_lea.vmem %s1, %s217
      %s219 = smul.u32 16, %s20
      %s220 = smul.u32 32, %s19
      %p221 = scmp.lt.s32.totalorder %s220, 255
      %s222 = scalar_select %p221, %s220, 255
      %s223 = smul.addr %s222, 8
      %s224 = scalar_lea.vmem %s2, %s223
      %s225 = smul.u32 32, %s19
      %p226 = scmp.lt.s32.totalorder %s19, 7
      %s227 = scalar_select %p226, %s19, 7
      %s228 = smul.addr %s227, 2
      %s229 = scalar_lea.vmem %s3, %s228
      %p231 = scmp.eq.s32.totalorder %s20, 0
      // Predicated region
      $region29: #{conv3d_1_forward.4} parent=27 // pred_check
        %p232 = pneg %p231
      $region30: #{conv3d_1_forward.4} parent=27 // pred_check_branch
        %234 = sbr.rel (%p232) target = $region32
      $region31: #{conv3d_1_forward.4} parent=27 // pred_region
        %235 = vst [vmem:[#allocation2] sm:$0xff] 0.0
        %236 = vst [vmem:[#allocation2 + $0x8] sm:$0xff] 0.0
        %237 = vst [vmem:[#allocation2 + $0x10] sm:$0xff] 0.0
        %238 = vst [vmem:[#allocation2 + $0x18] sm:$0xff] 0.0
        %239 = vst [vmem:[#allocation2 + $0x20] sm:$0xff] 0.0
        %240 = vst [vmem:[#allocation2 + $0x28] sm:$0xff] 0.0
        %241 = vst [vmem:[#allocation2 + $0x30] sm:$0xff] 0.0
        %242 = vst [vmem:[#allocation2 + $0x38] sm:$0xff] 0.0
        %243 = vst [vmem:[#allocation2 + $0x40] sm:$0xff] 0.0
        %244 = vst [vmem:[#allocation2 + $0x48] sm:$0xff] 0.0
        %245 = vst [vmem:[#allocation2 + $0x50] sm:$0xff] 0.0
        %246 = vst [vmem:[#allocation2 + $0x58] sm:$0xff] 0.0
        %247 = vst [vmem:[#allocation2 + $0x60] sm:$0xff] 0.0
        %248 = vst [vmem:[#allocation2 + $0x68] sm:$0xff] 0.0
        %249 = vst [vmem:[#allocation2 + $0x70] sm:$0xff] 0.0
        %250 = vst [vmem:[#allocation2 + $0x78] sm:$0xff] 0.0
        %251 = vst [vmem:[#allocation2 + $0x80] sm:$0xff] 0.0
        %252 = vst [vmem:[#allocation2 + $0x88] sm:$0xff] 0.0
        %253 = vst [vmem:[#allocation2 + $0x90] sm:$0xff] 0.0
        %254 = vst [vmem:[#allocation2 + $0x98] sm:$0xff] 0.0
        %255 = vst [vmem:[#allocation2 + $0xa0] sm:$0xff] 0.0
        %256 = vst [vmem:[#allocation2 + $0xa8] sm:$0xff] 0.0
        %257 = vst [vmem:[#allocation2 + $0xb0] sm:$0xff] 0.0
        %258 = vst [vmem:[#allocation2 + $0xb8] sm:$0xff] 0.0
        %259 = vst [vmem:[#allocation2 + $0xc0] sm:$0xff] 0.0
        %260 = vst [vmem:[#allocation2 + $0xc8] sm:$0xff] 0.0
        %261 = vst [vmem:[#allocation2 + $0xd0] sm:$0xff] 0.0
        %262 = vst [vmem:[#allocation2 + $0xd8] sm:$0xff] 0.0
        %263 = vst [vmem:[#allocation2 + $0xe0] sm:$0xff] 0.0
        %264 = vst [vmem:[#allocation2 + $0xe8] sm:$0xff] 0.0
        %265 = vst [vmem:[#allocation2 + $0xf0] sm:$0xff] 0.0
        %266 = vst [vmem:[#allocation2 + $0xf8] sm:$0xff] 0.0
      $region32: #{conv3d_1_forward.4} parent=27 // pred_fallthru
        _
      %v267 = vld [vmem:[#allocation2] sm:$0xff]
      %v268 = vld [vmem:[#allocation2 + $0x8] sm:$0xff]
      %v269 = vld [vmem:[#allocation2 + $0x10] sm:$0xff]
      %v270 = vld [vmem:[#allocation2 + $0x18] sm:$0xff]
      %v271 = vld [vmem:[#allocation2 + $0x20] sm:$0xff]
      %v272 = vld [vmem:[#allocation2 + $0x28] sm:$0xff]
      %v273 = vld [vmem:[#allocation2 + $0x30] sm:$0xff]
      %v274 = vld [vmem:[#allocation2 + $0x38] sm:$0xff]
      %v275 = vld [vmem:[#allocation2 + $0x40] sm:$0xff]
      %v276 = vld [vmem:[#allocation2 + $0x48] sm:$0xff]
      %v277 = vld [vmem:[#allocation2 + $0x50] sm:$0xff]
      %v278 = vld [vmem:[#allocation2 + $0x58] sm:$0xff]
      %v279 = vld [vmem:[#allocation2 + $0x60] sm:$0xff]
      %v280 = vld [vmem:[#allocation2 + $0x68] sm:$0xff]
      %v281 = vld [vmem:[#allocation2 + $0x70] sm:$0xff]
      %v282 = vld [vmem:[#allocation2 + $0x78] sm:$0xff]
      %v283 = vld [vmem:[#allocation2 + $0x80] sm:$0xff]
      %v284 = vld [vmem:[#allocation2 + $0x88] sm:$0xff]
      %v285 = vld [vmem:[#allocation2 + $0x90] sm:$0xff]
      %v286 = vld [vmem:[#allocation2 + $0x98] sm:$0xff]
      %v287 = vld [vmem:[#allocation2 + $0xa0] sm:$0xff]
      %v288 = vld [vmem:[#allocation2 + $0xa8] sm:$0xff]
      %v289 = vld [vmem:[#allocation2 + $0xb0] sm:$0xff]
      %v290 = vld [vmem:[#allocation2 + $0xb8] sm:$0xff]
      %v291 = vld [vmem:[#allocation2 + $0xc0] sm:$0xff]
      %v292 = vld [vmem:[#allocation2 + $0xc8] sm:$0xff]
      %v293 = vld [vmem:[#allocation2 + $0xd0] sm:$0xff]
      %v294 = vld [vmem:[#allocation2 + $0xd8] sm:$0xff]
      %v295 = vld [vmem:[#allocation2 + $0xe0] sm:$0xff]
      %v296 = vld [vmem:[#allocation2 + $0xe8] sm:$0xff]
      %v297 = vld [vmem:[#allocation2 + $0xf0] sm:$0xff]
      %v298 = vld [vmem:[#allocation2 + $0xf8] sm:$0xff]
      %v299 = vld [vmem:[%s212] sm:$0xf]
      %v300 = vld [vmem:[%s212 + $0x4] sm:$0xf]
      %v301 = vld [vmem:[%s212 + $0x8] sm:$0xf]
      %v302 = vld [vmem:[%s212 + $0xc] sm:$0xf]
      %v303 = vld [vmem:[%s212 + $0x10] sm:$0xf]
      %v304 = vld [vmem:[%s212 + $0x14] sm:$0xf]
      %v305 = vld [vmem:[%s212 + $0x18] sm:$0xf]
      %v306 = vld [vmem:[%s212 + $0x1c] sm:$0xf]
      %v307 = vld [vmem:[%s212 + $0x20] sm:$0xf]
      %v308 = vld [vmem:[%s212 + $0x24] sm:$0xf]
      %v309 = vld [vmem:[%s212 + $0x28] sm:$0xf]
      %v310 = vld [vmem:[%s212 + $0x2c] sm:$0xf]
      %v311 = vld [vmem:[%s212 + $0x30] sm:$0xf]
      %v312 = vld [vmem:[%s212 + $0x34] sm:$0xf]
      %v313 = vld [vmem:[%s212 + $0x38] sm:$0xf]
      %v314 = vld [vmem:[%s212 + $0x3c] sm:$0xf]
      %v315 = vld [vmem:[%s212 + $0x40] sm:$0xf]
      %v316 = vld [vmem:[%s212 + $0x44] sm:$0xf]
      %v317 = vld [vmem:[%s212 + $0x48] sm:$0xf]
      %v318 = vld [vmem:[%s212 + $0x4c] sm:$0xf]
      %v319 = vld [vmem:[%s212 + $0x50] sm:$0xf]
      %v320 = vld [vmem:[%s212 + $0x54] sm:$0xf]
      %v321 = vld [vmem:[%s212 + $0x58] sm:$0xf]
      %v322 = vld [vmem:[%s212 + $0x5c] sm:$0xf]
      %v323 = vld [vmem:[%s212 + $0x60] sm:$0xf]
      %v324 = vld [vmem:[%s212 + $0x64] sm:$0xf]
      %v325 = vld [vmem:[%s212 + $0x68] sm:$0xf]
      %v326 = vld [vmem:[%s212 + $0x6c] sm:$0xf]
      %v327 = vld [vmem:[%s212 + $0x70] sm:$0xf]
      %v328 = vld [vmem:[%s212 + $0x74] sm:$0xf]
      %v329 = vld [vmem:[%s212 + $0x78] sm:$0xf]
      %v330 = vld [vmem:[%s212 + $0x7c] sm:$0xf]
      %v331 = vld [vmem:[%s218] sm:$0xf]
      %v332 = vld [vmem:[%s218 + $0x4] sm:$0xf]
      %v333 = vld [vmem:[%s218 + $0x8] sm:$0xf]
      %v334 = vld [vmem:[%s218 + $0xc] sm:$0xf]
      %v335 = vld [vmem:[%s218 + $0x10] sm:$0xf]
      %v336 = vld [vmem:[%s218 + $0x14] sm:$0xf]
      %v337 = vld [vmem:[%s218 + $0x18] sm:$0xf]
      %v338 = vld [vmem:[%s218 + $0x1c] sm:$0xf]
      %v339 = vld [vmem:[%s218 + $0x20] sm:$0xf]
      %v340 = vld [vmem:[%s218 + $0x24] sm:$0xf]
      %v341 = vld [vmem:[%s218 + $0x28] sm:$0xf]
      %v342 = vld [vmem:[%s218 + $0x2c] sm:$0xf]
      %v343 = vld [vmem:[%s218 + $0x30] sm:$0xf]
      %v344 = vld [vmem:[%s218 + $0x34] sm:$0xf]
      %v345 = vld [vmem:[%s218 + $0x38] sm:$0xf]
      %v346 = vld [vmem:[%s218 + $0x3c] sm:$0xf]
      %v379 = vunpack.c.l.b16 %v299
      %v380 = vunpack.c.l.b16 %v300
      %v381 = vunpack.c.l.b16 %v301
      %v382 = vunpack.c.l.b16 %v302
      %v383 = vunpack.c.l.b16 %v303
      %v384 = vunpack.c.l.b16 %v304
      %v385 = vunpack.c.l.b16 %v305
      %v386 = vunpack.c.l.b16 %v306
      %v387 = vunpack.c.l.b16 %v307
      %v388 = vunpack.c.l.b16 %v308
      %v389 = vunpack.c.l.b16 %v309
      %v390 = vunpack.c.l.b16 %v310
      %v391 = vunpack.c.l.b16 %v311
      %v392 = vunpack.c.l.b16 %v312
      %v393 = vunpack.c.l.b16 %v313
      %v394 = vunpack.c.l.b16 %v314
      %v395 = vunpack.c.l.b16 %v315
      %v396 = vunpack.c.l.b16 %v316
      %v397 = vunpack.c.l.b16 %v317
      %v398 = vunpack.c.l.b16 %v318
      %v399 = vunpack.c.l.b16 %v319
      %v400 = vunpack.c.l.b16 %v320
      %v401 = vunpack.c.l.b16 %v321
      %v402 = vunpack.c.l.b16 %v322
      %v403 = vunpack.c.l.b16 %v323
      %v404 = vunpack.c.l.b16 %v324
      %v405 = vunpack.c.l.b16 %v325
      %v406 = vunpack.c.l.b16 %v326
      %v407 = vunpack.c.l.b16 %v327
      %v408 = vunpack.c.l.b16 %v328
      %v409 = vunpack.c.l.b16 %v329
      %v410 = vunpack.c.l.b16 %v330
      %v411 = vpack.c.b16 %v380, %v379
      %v412 = vpack.c.b16 %v382, %v381
      %v413 = vpack.c.b16 %v384, %v383
      %v414 = vpack.c.b16 %v386, %v385
      %v415 = vpack.c.b16 %v388, %v387
      %v416 = vpack.c.b16 %v390, %v389
      %v417 = vpack.c.b16 %v392, %v391
      %v418 = vpack.c.b16 %v394, %v393
      %v419 = vpack.c.b16 %v396, %v395
      %v420 = vpack.c.b16 %v398, %v397
      %v421 = vpack.c.b16 %v400, %v399
      %v422 = vpack.c.b16 %v402, %v401
      %v423 = vpack.c.b16 %v404, %v403
      %v424 = vpack.c.b16 %v406, %v405
      %v425 = vpack.c.b16 %v408, %v407
      %v426 = vpack.c.b16 %v410, %v409
      %v459 = vunpack.c.l.b16 %v331
      %v460 = vunpack.c.l.b16 %v332
      %v461 = vunpack.c.l.b16 %v333
      %v462 = vunpack.c.l.b16 %v334
      %v463 = vunpack.c.l.b16 %v335
      %v464 = vunpack.c.l.b16 %v336
      %v465 = vunpack.c.l.b16 %v337
      %v466 = vunpack.c.l.b16 %v338
      %v467 = vunpack.c.l.b16 %v339
      %v468 = vunpack.c.l.b16 %v340
      %v469 = vunpack.c.l.b16 %v341
      %v470 = vunpack.c.l.b16 %v342
      %v471 = vunpack.c.l.b16 %v343
      %v472 = vunpack.c.l.b16 %v344
      %v473 = vunpack.c.l.b16 %v345
      %v474 = vunpack.c.l.b16 %v346
      %v475 = vpack.c.b16 %v460, %v459
      %v476 = vpack.c.b16 %v462, %v461
      %v477 = vpack.c.b16 %v464, %v463
      %v478 = vpack.c.b16 %v466, %v465
      %v479 = vpack.c.b16 %v468, %v467
      %v480 = vpack.c.b16 %v470, %v469
      %v481 = vpack.c.b16 %v472, %v471
      %v482 = vpack.c.b16 %v474, %v473
      %491 = vmatprep.subr.bf16.mxu0 0
      %492 = vmatpush1.bf16.msra.mxu0 %v482
      %493 = vmatprep.subr.bf16.mxu0 0
      %494 = vmatpush1.bf16.msra.mxu0 %v481
      %495 = vmatprep.subr.bf16.mxu0 0
      %496 = vmatpush1.bf16.msra.mxu0 %v480
      %497 = vmatprep.subr.bf16.mxu0 0
      %498 = vmatpush1.bf16.msra.mxu0 %v479
      %499 = vmatprep.subr.bf16.mxu0 0
      %500 = vmatpush1.bf16.msra.mxu0 %v478
      %501 = vmatprep.subr.bf16.mxu0 0
      %502 = vmatpush1.bf16.msra.mxu0 %v477
      %503 = vmatprep.subr.bf16.mxu0 0
      %504 = vmatpush1.bf16.msra.mxu0 %v476
      %505 = vmatprep.subr.bf16.mxu0 0
      %506 = vmatpush1.bf16.msra.mxu0 %v475
      %507 = vmatprep.subr.bf16.mxu0 0
      %508 = vmatpush2.bf16.msra.mxu0 0
      %509 = vmatprep.subr.bf16.mxu0 0
      %510 = vmatpush2.bf16.msra.mxu0 0
      %511 = vmatprep.subr.bf16.mxu0 0
      %512 = vmatpush2.bf16.msra.mxu0 0
      %513 = vmatprep.subr.bf16.mxu0 0
      %514 = vmatpush2.bf16.msra.mxu0 0
      %515 = vmatprep.subr.bf16.mxu0 0
      %516 = vmatpush2.bf16.msra.mxu0 0
      %517 = vmatprep.subr.bf16.mxu0 0
      %518 = vmatpush2.bf16.msra.mxu0 0
      %519 = vmatprep.subr.bf16.mxu0 0
      %520 = vmatpush2.bf16.msra.mxu0 0
      %521 = vmatprep.subr.bf16.mxu0 0
      %522 = vmatpush2.bf16.msra.mxu0 0
      %523 = vmatprep.mubr.bf16.mxu0 0
      %524 = vmatmul.mubr.bf16.gmra.mxu0 %v411
      %v525 = vpop.f32.mrf.mxu0
      %v526 = vadd.f32 0.0, %v525
      %v527 = vpop.f32.mrf.mxu0
      %v528 = vpop.f32.mrf.mxu0
      %v529 = vadd.f32 0.0, %v528
      %v530 = vpop.f32.mrf.mxu0
      %531 = vmatprep.mubr.bf16.mxu0 0
      %532 = vmatmul.mubr.bf16.gmra.mxu0 %v412
      %v533 = vpop.f32.mrf.mxu0
      %v534 = vadd.f32 0.0, %v533
      %v535 = vpop.f32.mrf.mxu0
      %v536 = vpop.f32.mrf.mxu0
      %v537 = vadd.f32 0.0, %v536
      %v538 = vpop.f32.mrf.mxu0
      %539 = vmatprep.mubr.bf16.mxu0 0
      %540 = vmatmul.mubr.bf16.gmra.mxu0 %v413
      %v541 = vpop.f32.mrf.mxu0
      %v542 = vadd.f32 0.0, %v541
      %v543 = vpop.f32.mrf.mxu0
      %v544 = vpop.f32.mrf.mxu0
      %v545 = vadd.f32 0.0, %v544
      %v546 = vpop.f32.mrf.mxu0
      %547 = vmatprep.mubr.bf16.mxu0 0
      %548 = vmatmul.mubr.bf16.gmra.mxu0 %v414
      %v549 = vpop.f32.mrf.mxu0
      %v550 = vadd.f32 0.0, %v549
      %v551 = vpop.f32.mrf.mxu0
      %v552 = vpop.f32.mrf.mxu0
      %v553 = vadd.f32 0.0, %v552
      %v554 = vpop.f32.mrf.mxu0
      %555 = vmatprep.mubr.bf16.mxu0 0
      %556 = vmatmul.mubr.bf16.gmra.mxu0 %v415
      %v557 = vpop.f32.mrf.mxu0
      %v558 = vadd.f32 0.0, %v557
      %v559 = vpop.f32.mrf.mxu0
      %v560 = vpop.f32.mrf.mxu0
      %v561 = vadd.f32 0.0, %v560
      %v562 = vpop.f32.mrf.mxu0
      %563 = vmatprep.mubr.bf16.mxu0 0
      %564 = vmatmul.mubr.bf16.gmra.mxu0 %v416
      %v565 = vpop.f32.mrf.mxu0
      %v566 = vadd.f32 0.0, %v565
      %v567 = vpop.f32.mrf.mxu0
      %v568 = vpop.f32.mrf.mxu0
      %v569 = vadd.f32 0.0, %v568
      %v570 = vpop.f32.mrf.mxu0
      %571 = vmatprep.mubr.bf16.mxu0 0
      %572 = vmatmul.mubr.bf16.gmra.mxu0 %v417
      %v573 = vpop.f32.mrf.mxu0
      %v574 = vadd.f32 0.0, %v573
      %v575 = vpop.f32.mrf.mxu0
      %v576 = vpop.f32.mrf.mxu0
      %v577 = vadd.f32 0.0, %v576
      %v578 = vpop.f32.mrf.mxu0
      %579 = vmatprep.mubr.bf16.mxu0 0
      %580 = vmatmul.mubr.bf16.gmra.mxu0 %v418
      %v581 = vpop.f32.mrf.mxu0
      %v582 = vadd.f32 0.0, %v581
      %v583 = vpop.f32.mrf.mxu0
      %v584 = vpop.f32.mrf.mxu0
      %v585 = vadd.f32 0.0, %v584
      %v586 = vpop.f32.mrf.mxu0
      %587 = vmatprep.mubr.bf16.mxu0 0
      %588 = vmatmul.mubr.bf16.gmra.mxu0 %v419
      %v589 = vpop.f32.mrf.mxu0
      %v590 = vadd.f32 0.0, %v589
      %v591 = vpop.f32.mrf.mxu0
      %v592 = vpop.f32.mrf.mxu0
      %v593 = vadd.f32 0.0, %v592
      %v594 = vpop.f32.mrf.mxu0
      %595 = vmatprep.mubr.bf16.mxu0 0
      %596 = vmatmul.mubr.bf16.gmra.mxu0 %v420
      %v597 = vpop.f32.mrf.mxu0
      %v598 = vadd.f32 0.0, %v597
      %v599 = vpop.f32.mrf.mxu0
      %v600 = vpop.f32.mrf.mxu0
      %v601 = vadd.f32 0.0, %v600
      %v602 = vpop.f32.mrf.mxu0
      %603 = vmatprep.mubr.bf16.mxu0 0
      %604 = vmatmul.mubr.bf16.gmra.mxu0 %v421
      %v605 = vpop.f32.mrf.mxu0
      %v606 = vadd.f32 0.0, %v605
      %v607 = vpop.f32.mrf.mxu0
      %v608 = vpop.f32.mrf.mxu0
      %v609 = vadd.f32 0.0, %v608
      %v610 = vpop.f32.mrf.mxu0
      %611 = vmatprep.mubr.bf16.mxu0 0
      %612 = vmatmul.mubr.bf16.gmra.mxu0 %v422
      %v613 = vpop.f32.mrf.mxu0
      %v614 = vadd.f32 0.0, %v613
      %v615 = vpop.f32.mrf.mxu0
      %v616 = vpop.f32.mrf.mxu0
      %v617 = vadd.f32 0.0, %v616
      %v618 = vpop.f32.mrf.mxu0
      %619 = vmatprep.mubr.bf16.mxu0 0
      %620 = vmatmul.mubr.bf16.gmra.mxu0 %v423
      %v621 = vpop.f32.mrf.mxu0
      %v622 = vadd.f32 0.0, %v621
      %v623 = vpop.f32.mrf.mxu0
      %v624 = vpop.f32.mrf.mxu0
      %v625 = vadd.f32 0.0, %v624
      %v626 = vpop.f32.mrf.mxu0
      %627 = vmatprep.mubr.bf16.mxu0 0
      %628 = vmatmul.mubr.bf16.gmra.mxu0 %v424
      %v629 = vpop.f32.mrf.mxu0
      %v630 = vadd.f32 0.0, %v629
      %v631 = vpop.f32.mrf.mxu0
      %v632 = vpop.f32.mrf.mxu0
      %v633 = vadd.f32 0.0, %v632
      %v634 = vpop.f32.mrf.mxu0
      %635 = vmatprep.mubr.bf16.mxu0 0
      %636 = vmatmul.mubr.bf16.gmra.mxu0 %v425
      %v637 = vpop.f32.mrf.mxu0
      %v638 = vadd.f32 0.0, %v637
      %v639 = vpop.f32.mrf.mxu0
      %v640 = vpop.f32.mrf.mxu0
      %v641 = vadd.f32 0.0, %v640
      %v642 = vpop.f32.mrf.mxu0
      %643 = vmatprep.mubr.bf16.mxu0 0
      %644 = vmatmul.mubr.bf16.gmra.mxu0 %v426
      %v645 = vpop.f32.mrf.mxu0
      %v646 = vadd.f32 0.0, %v645
      %v647 = vpop.f32.mrf.mxu0
      %v648 = vpop.f32.mrf.mxu0
      %v649 = vadd.f32 0.0, %v648
      %v650 = vpop.f32.mrf.mxu0
      %651 = vdwg.mxu0
      %v652 = vadd.f32 %v267, %v526
      %v653 = vadd.f32 %v268, %v529
      %v654 = vadd.f32 %v269, %v534
      %v655 = vadd.f32 %v270, %v537
      %v656 = vadd.f32 %v271, %v542
      %v657 = vadd.f32 %v272, %v545
      %v658 = vadd.f32 %v273, %v550
      %v659 = vadd.f32 %v274, %v553
      %v660 = vadd.f32 %v275, %v558
      %v661 = vadd.f32 %v276, %v561
      %v662 = vadd.f32 %v277, %v566
      %v663 = vadd.f32 %v278, %v569
      %v664 = vadd.f32 %v279, %v574
      %v665 = vadd.f32 %v280, %v577
      %v666 = vadd.f32 %v281, %v582
      %v667 = vadd.f32 %v282, %v585
      %v668 = vadd.f32 %v283, %v590
      %v669 = vadd.f32 %v284, %v593
      %v670 = vadd.f32 %v285, %v598
      %v671 = vadd.f32 %v286, %v601
      %v672 = vadd.f32 %v287, %v606
      %v673 = vadd.f32 %v288, %v609
      %v674 = vadd.f32 %v289, %v614
      %v675 = vadd.f32 %v290, %v617
      %v676 = vadd.f32 %v291, %v622
      %v677 = vadd.f32 %v292, %v625
      %v678 = vadd.f32 %v293, %v630
      %v679 = vadd.f32 %v294, %v633
      %v680 = vadd.f32 %v295, %v638
      %v681 = vadd.f32 %v296, %v641
      %v682 = vadd.f32 %v297, %v646
      %v683 = vadd.f32 %v298, %v649
      %684 = vst [vmem:[#allocation2] sm:$0xff] %v652
      %685 = vst [vmem:[#allocation2 + $0x8] sm:$0xff] %v653
      %686 = vst [vmem:[#allocation2 + $0x10] sm:$0xff] %v654
      %687 = vst [vmem:[#allocation2 + $0x18] sm:$0xff] %v655
      %688 = vst [vmem:[#allocation2 + $0x20] sm:$0xff] %v656
      %689 = vst [vmem:[#allocation2 + $0x28] sm:$0xff] %v657
      %690 = vst [vmem:[#allocation2 + $0x30] sm:$0xff] %v658
      %691 = vst [vmem:[#allocation2 + $0x38] sm:$0xff] %v659
      %692 = vst [vmem:[#allocation2 + $0x40] sm:$0xff] %v660
      %693 = vst [vmem:[#allocation2 + $0x48] sm:$0xff] %v661
      %694 = vst [vmem:[#allocation2 + $0x50] sm:$0xff] %v662
      %695 = vst [vmem:[#allocation2 + $0x58] sm:$0xff] %v663
      %696 = vst [vmem:[#allocation2 + $0x60] sm:$0xff] %v664
      %697 = vst [vmem:[#allocation2 + $0x68] sm:$0xff] %v665
      %698 = vst [vmem:[#allocation2 + $0x70] sm:$0xff] %v666
      %699 = vst [vmem:[#allocation2 + $0x78] sm:$0xff] %v667
      %700 = vst [vmem:[#allocation2 + $0x80] sm:$0xff] %v668
      %701 = vst [vmem:[#allocation2 + $0x88] sm:$0xff] %v669
      %702 = vst [vmem:[#allocation2 + $0x90] sm:$0xff] %v670
      %703 = vst [vmem:[#allocation2 + $0x98] sm:$0xff] %v671
      %704 = vst [vmem:[#allocation2 + $0xa0] sm:$0xff] %v672
      %705 = vst [vmem:[#allocation2 + $0xa8] sm:$0xff] %v673
      %706 = vst [vmem:[#allocation2 + $0xb0] sm:$0xff] %v674
      %707 = vst [vmem:[#allocation2 + $0xb8] sm:$0xff] %v675
      %708 = vst [vmem:[#allocation2 + $0xc0] sm:$0xff] %v676
      %709 = vst [vmem:[#allocation2 + $0xc8] sm:$0xff] %v677
      %710 = vst [vmem:[#allocation2 + $0xd0] sm:$0xff] %v678
      %711 = vst [vmem:[#allocation2 + $0xd8] sm:$0xff] %v679
      %712 = vst [vmem:[#allocation2 + $0xe0] sm:$0xff] %v680
      %713 = vst [vmem:[#allocation2 + $0xe8] sm:$0xff] %v681
      %714 = vst [vmem:[#allocation2 + $0xf0] sm:$0xff] %v682
      %715 = vst [vmem:[#allocation2 + $0xf8] sm:$0xff] %v683
      // Predicated region
      $region33: #{conv3d_1_forward.4} parent=27 // pred_check
        %p716 = pneg %p231
      $region34: #{conv3d_1_forward.4} parent=27 // pred_check_branch
        %718 = sbr.rel (%p716) target = $region36
      $region35: #{conv3d_1_forward.4} parent=27 // pred_region
        %v719 = vld [vmem:[#allocation2] sm:$0xff]
        %v720 = vld [vmem:[#allocation2 + $0x8] sm:$0xff]
        %v721 = vld [vmem:[#allocation2 + $0x10] sm:$0xff]
        %v722 = vld [vmem:[#allocation2 + $0x18] sm:$0xff]
        %v723 = vld [vmem:[#allocation2 + $0x20] sm:$0xff]
        %v724 = vld [vmem:[#allocation2 + $0x28] sm:$0xff]
        %v725 = vld [vmem:[#allocation2 + $0x30] sm:$0xff]
        %v726 = vld [vmem:[#allocation2 + $0x38] sm:$0xff]
        %v727 = vld [vmem:[#allocation2 + $0x40] sm:$0xff]
        %v728 = vld [vmem:[#allocation2 + $0x48] sm:$0xff]
        %v729 = vld [vmem:[#allocation2 + $0x50] sm:$0xff]
        %v730 = vld [vmem:[#allocation2 + $0x58] sm:$0xff]
        %v731 = vld [vmem:[#allocation2 + $0x60] sm:$0xff]
        %v732 = vld [vmem:[#allocation2 + $0x68] sm:$0xff]
        %v733 = vld [vmem:[#allocation2 + $0x70] sm:$0xff]
        %v734 = vld [vmem:[#allocation2 + $0x78] sm:$0xff]
        %v735 = vld [vmem:[#allocation2 + $0x80] sm:$0xff]
        %v736 = vld [vmem:[#allocation2 + $0x88] sm:$0xff]
        %v737 = vld [vmem:[#allocation2 + $0x90] sm:$0xff]
        %v738 = vld [vmem:[#allocation2 + $0x98] sm:$0xff]
        %v739 = vld [vmem:[#allocation2 + $0xa0] sm:$0xff]
        %v740 = vld [vmem:[#allocation2 + $0xa8] sm:$0xff]
        %v741 = vld [vmem:[#allocation2 + $0xb0] sm:$0xff]
        %v742 = vld [vmem:[#allocation2 + $0xb8] sm:$0xff]
        %v743 = vld [vmem:[#allocation2 + $0xc0] sm:$0xff]
        %v744 = vld [vmem:[#allocation2 + $0xc8] sm:$0xff]
        %v745 = vld [vmem:[#allocation2 + $0xd0] sm:$0xff]
        %v746 = vld [vmem:[#allocation2 + $0xd8] sm:$0xff]
        %v747 = vld [vmem:[#allocation2 + $0xe0] sm:$0xff]
        %v748 = vld [vmem:[#allocation2 + $0xe8] sm:$0xff]
        %v749 = vld [vmem:[#allocation2 + $0xf0] sm:$0xff]
        %v750 = vld [vmem:[#allocation2 + $0xf8] sm:$0xff]
        %751 = vst [vmem:[%s224] sm:$0xff] %v719
        %752 = vst [vmem:[%s224 + $0x8] sm:$0xff] %v720
        %753 = vst [vmem:[%s224 + $0x10] sm:$0xff] %v721
        %754 = vst [vmem:[%s224 + $0x18] sm:$0xff] %v722
        %755 = vst [vmem:[%s224 + $0x20] sm:$0xff] %v723
        %756 = vst [vmem:[%s224 + $0x28] sm:$0xff] %v724
        %757 = vst [vmem:[%s224 + $0x30] sm:$0xff] %v725
        %758 = vst [vmem:[%s224 + $0x38] sm:$0xff] %v726
        %759 = vst [vmem:[%s224 + $0x40] sm:$0xff] %v727
        %760 = vst [vmem:[%s224 + $0x48] sm:$0xff] %v728
        %761 = vst [vmem:[%s224 + $0x50] sm:$0xff] %v729
        %762 = vst [vmem:[%s224 + $0x58] sm:$0xff] %v730
        %763 = vst [vmem:[%s224 + $0x60] sm:$0xff] %v731
        %764 = vst [vmem:[%s224 + $0x68] sm:$0xff] %v732
        %765 = vst [vmem:[%s224 + $0x70] sm:$0xff] %v733
        %766 = vst [vmem:[%s224 + $0x78] sm:$0xff] %v734
        %767 = vst [vmem:[%s224 + $0x80] sm:$0xff] %v735
        %768 = vst [vmem:[%s224 + $0x88] sm:$0xff] %v736
        %769 = vst [vmem:[%s224 + $0x90] sm:$0xff] %v737
        %770 = vst [vmem:[%s224 + $0x98] sm:$0xff] %v738
        %771 = vst [vmem:[%s224 + $0xa0] sm:$0xff] %v739
        %772 = vst [vmem:[%s224 + $0xa8] sm:$0xff] %v740
        %773 = vst [vmem:[%s224 + $0xb0] sm:$0xff] %v741
        %774 = vst [vmem:[%s224 + $0xb8] sm:$0xff] %v742
        %775 = vst [vmem:[%s224 + $0xc0] sm:$0xff] %v743
        %776 = vst [vmem:[%s224 + $0xc8] sm:$0xff] %v744
        %777 = vst [vmem:[%s224 + $0xd0] sm:$0xff] %v745
        %778 = vst [vmem:[%s224 + $0xd8] sm:$0xff] %v746
        %779 = vst [vmem:[%s224 + $0xe0] sm:$0xff] %v747
        %780 = vst [vmem:[%s224 + $0xe8] sm:$0xff] %v748
        %781 = vst [vmem:[%s224 + $0xf0] sm:$0xff] %v749
        %782 = vst [vmem:[%s224 + $0xf8] sm:$0xff] %v750
        %v783 = vadd.f32 %v719, %v720
        %v784 = vadd.f32 %v783, %v721
        %v785 = vadd.f32 %v784, %v722
        %v786 = vadd.f32 %v785, %v723
        %v787 = vadd.f32 %v786, %v724
        %v788 = vadd.f32 %v787, %v725
        %v789 = vadd.f32 %v788, %v726
        %v790 = vadd.f32 %v789, %v727
        %v791 = vadd.f32 %v790, %v728
        %v792 = vadd.f32 %v791, %v729
        %v793 = vadd.f32 %v792, %v730
        %v794 = vadd.f32 %v793, %v731
        %v795 = vadd.f32 %v794, %v732
        %v796 = vadd.f32 %v795, %v733
        %v797 = vadd.f32 %v796, %v734
        %v798 = vadd.f32 %v797, %v735
        %v799 = vadd.f32 %v798, %v736
        %v800 = vadd.f32 %v799, %v737
        %v801 = vadd.f32 %v800, %v738
        %v802 = vadd.f32 %v801, %v739
        %v803 = vadd.f32 %v802, %v740
        %v804 = vadd.f32 %v803, %v741
        %v805 = vadd.f32 %v804, %v742
        %v806 = vadd.f32 %v805, %v743
        %v807 = vadd.f32 %v806, %v744
        %v808 = vadd.f32 %v807, %v745
        %v809 = vadd.f32 %v808, %v746
        %v810 = vadd.f32 %v809, %v747
        %v811 = vadd.f32 %v810, %v748
        %v812 = vadd.f32 %v811, %v749
        %v813 = vadd.f32 %v812, %v750
        %v814 = vrot.slane %v813, 4
        %v815 = vadd.f32 %v813, %v814
        %v816 = vrot.slane %v815, 2
        %v817 = vadd.f32 %v815, %v816
        %v818 = vrot.slane %v817, 1
        %v819 = vadd.f32 %v817, %v818
        %v820 = vmul.f32 %v719, %v719
        %v821 = vmul.f32 %v720, %v720
        %v822 = vmul.f32 %v721, %v721
        %v823 = vmul.f32 %v722, %v722
        %v824 = vmul.f32 %v723, %v723
        %v825 = vmul.f32 %v724, %v724
        %v826 = vmul.f32 %v725, %v725
        %v827 = vmul.f32 %v726, %v726
        %v828 = vmul.f32 %v727, %v727
        %v829 = vmul.f32 %v728, %v728
        %v830 = vmul.f32 %v729, %v729
        %v831 = vmul.f32 %v730, %v730
        %v832 = vmul.f32 %v731, %v731
        %v833 = vmul.f32 %v732, %v732
        %v834 = vmul.f32 %v733, %v733
        %v835 = vmul.f32 %v734, %v734
        %v836 = vmul.f32 %v735, %v735
        %v837 = vmul.f32 %v736, %v736
        %v838 = vmul.f32 %v737, %v737
        %v839 = vmul.f32 %v738, %v738
        %v840 = vmul.f32 %v739, %v739
        %v841 = vmul.f32 %v740, %v740
        %v842 = vmul.f32 %v741, %v741
        %v843 = vmul.f32 %v742, %v742
        %v844 = vmul.f32 %v743, %v743
        %v845 = vmul.f32 %v744, %v744
        %v846 = vmul.f32 %v745, %v745
        %v847 = vmul.f32 %v746, %v746
        %v848 = vmul.f32 %v747, %v747
        %v849 = vmul.f32 %v748, %v748
        %v850 = vmul.f32 %v749, %v749
        %v851 = vmul.f32 %v750, %v750
        %v852 = vadd.f32 %v820, %v821
        %v853 = vadd.f32 %v852, %v822
        %v854 = vadd.f32 %v853, %v823
        %v855 = vadd.f32 %v854, %v824
        %v856 = vadd.f32 %v855, %v825
        %v857 = vadd.f32 %v856, %v826
        %v858 = vadd.f32 %v857, %v827
        %v859 = vadd.f32 %v858, %v828
        %v860 = vadd.f32 %v859, %v829
        %v861 = vadd.f32 %v860, %v830
        %v862 = vadd.f32 %v861, %v831
        %v863 = vadd.f32 %v862, %v832
        %v864 = vadd.f32 %v863, %v833
        %v865 = vadd.f32 %v864, %v834
        %v866 = vadd.f32 %v865, %v835
        %v867 = vadd.f32 %v866, %v836
        %v868 = vadd.f32 %v867, %v837
        %v869 = vadd.f32 %v868, %v838
        %v870 = vadd.f32 %v869, %v839
        %v871 = vadd.f32 %v870, %v840
        %v872 = vadd.f32 %v871, %v841
        %v873 = vadd.f32 %v872, %v842
        %v874 = vadd.f32 %v873, %v843
        %v875 = vadd.f32 %v874, %v844
        %v876 = vadd.f32 %v875, %v845
        %v877 = vadd.f32 %v876, %v846
        %v878 = vadd.f32 %v877, %v847
        %v879 = vadd.f32 %v878, %v848
        %v880 = vadd.f32 %v879, %v849
        %v881 = vadd.f32 %v880, %v850
        %v882 = vadd.f32 %v881, %v851
        %v883 = vrot.slane %v882, 4
        %v884 = vadd.f32 %v882, %v883
        %v885 = vrot.slane %v884, 2
        %v886 = vadd.f32 %v884, %v885
        %v887 = vrot.slane %v886, 1
        %v888 = vadd.f32 %v886, %v887
        %vm889 = vcmask 1040384
        %v890 = vsel %vm889, %v819, %v888
        %891 = vst [vmem:[%s229] sm:$0x3] %v890
      $region36: #{conv3d_1_forward.4} parent=27 // pred_fallthru
        _
      %s892 = smul.u32 32, %s19
      %p893 = scmp.lt.s32.totalorder %s892, 255
      %s894 = scalar_select %p893, %s892, 255
      %s895 = smul.addr %s894, 8
      %s896 = scalar_lea.vmem %s2, %s895
      %p897 = scmp.lt.s32.totalorder %s19, 7
      %s898 = scalar_select %p897, %s19, 7
      %s899 = smul.addr %s898, 2
      %s900 = scalar_lea.vmem %s3, %s899
      // Predicated region
      $region37: #{conv3d_1_forward.4} parent=27 // pred_check
        %p901 = pneg %p99
      $region38: #{conv3d_1_forward.4} parent=27 // pred_check_branch
        %903 = sbr.rel (%p901) target = $region40
      $region39: #{conv3d_1_forward.4} parent=27 // pred_region
        %s904 = smul.u32 32, %s19
      $region40: #{conv3d_1_forward.4} parent=27 // pred_fallthru
        _
      // Predicated region
      $region41: #{conv3d_1_forward.4} parent=27 // pred_check
        %p905 = pneg %p125
      $region42: #{conv3d_1_forward.4} parent=27 // pred_check_branch
        %907 = sbr.rel (%p905) target = $region44
      $region43: #{conv3d_1_forward.4} parent=27 // pred_region
        _
      $region44: #{conv3d_1_forward.4} parent=27 // pred_fallthru
        _
    $region28: #{conv3d_1_forward.4} parent=5 // pred_fallthru
      _
    %p908 = scmp.le.s32.totalorder 2, %s10
    // Predicated region
    $region45: #{conv3d_1_forward.4} parent=5 // pred_check
      %p909 = pneg %p908
    $region46: #{conv3d_1_forward.4} parent=5 // pred_check_branch
      %911 = sbr.rel (%p909) target = $region48
    $region47: #{conv3d_1_forward.4} parent=5 // pred_region
      %s912 = ssub.s32 %s10, 2
      // Predicated region
      $region49: #{conv3d_1_forward.4} parent=47 // pred_check
        %p913 = pneg %p105
      $region50: #{conv3d_1_forward.4} parent=47 // pred_check_branch
        %915 = sbr.rel (%p913) target = $region52
      $region51: #{conv3d_1_forward.4} parent=47 // pred_region
        %s916 = smul.u32 32, %s21
        %p917 = scmp.lt.s32.totalorder %s916, 255
        %s918 = scalar_select %p917, %s916, 255
        %s919 = smul.addr %s918, 8
        %s920 = scalar_lea.vmem %s2, %s919
      $region52: #{conv3d_1_forward.4} parent=47 // pred_fallthru
        _
      // Predicated region
      $region53: #{conv3d_1_forward.4} parent=47 // pred_check
        %p921 = pneg %p131
      $region54: #{conv3d_1_forward.4} parent=47 // pred_check_branch
        %923 = sbr.rel (%p921) target = $region56
      $region55: #{conv3d_1_forward.4} parent=47 // pred_region
        %p924 = scmp.lt.s32.totalorder %s21, 7
        %s925 = scalar_select %p924, %s21, 7
        %s926 = smul.addr %s925, 2
        %s927 = scalar_lea.vmem %s3, %s926
      $region56: #{conv3d_1_forward.4} parent=47 // pred_fallthru
        _
    $region48: #{conv3d_1_forward.4} parent=5 // pred_fallthru
      _
  $region6: #{conv3d_1_forward.4} parent=0 // loop_footer
    %s14 = sadd.s32 1, %s10
  $region7: #{conv3d_1_forward.4} parent=0 // loop_footer_branch
    %9 = sbr.rel target = $region3
  $region8: #{conv3d_1_forward.4} parent=0 // loop_exit
    _

// kernel: conv3d_1_forward.5
$region0: #{conv3d_1_forward.5}
  #allocation0 [shape = 'u32[]', space=smem, size = 0x4, offset = 0x4, fixed_abs, tag = 'smem constant byte address 0x4 - core index']
  #allocation1 [shape = 'u32[144,128]{1,0:T(1,128)}', space=vmem, size = 0x12000, scoped, tag = 'internal scratch']
  %s0 = inlined_call_operand.vmem [shape: f32[2048,128], index: 0, kind: input, shape index: {}]
  %s1 = inlined_call_operand.vmem [shape: f32[1,128], index: 1, kind: input, shape index: {}]
  %s2 = inlined_call_operand.vmem [shape: f32[1,128], index: 2, kind: input, shape index: {}]
  %s3 = inlined_call_operand.vmem [shape: f32[2048,128], index: 3, kind: output, shape index: {}]
  %s4 = sld [smem:[#allocation0]]
  $region45: #{conv3d_1_forward.5} parent=0
    _
  %s6 = ssub.s32 1, %s4
  %s7 = scalar_select 0, %s6, %s4
  loop: start=0, step=1, limit=10
  $region2: #{conv3d_1_forward.5} parent=0 // loop_pre_header
    _
  $region3: #{conv3d_1_forward.5} parent=0 // loop_header
    %s9 = sphi 0, %s13
    %p10 = scmp.ge.s32.totalorder %s9, 10
    %s19 = sphi 0, %s21
    %s22 = sphi 0, %s19
    %s23 = sphi 0, %s22
    %s39 = sphi 0, %s23
    %s43 = sphi 0, %s43
    %s45 = sphi 0, %s43
    %s46 = sphi 0, %s45
    %s60 = sphi 0, %s46
    %s64 = sphi 0, %s64
    %s66 = sphi 0, %s64
    %s67 = sphi 0, %s66
    %s81 = sphi 0, %s67
    %s87 = sphi 0, %s89
    %s90 = sphi 0, %s87
    %s91 = sphi 0, %s90
    %s107 = sphi 0, %s91
  $region4: #{conv3d_1_forward.5} parent=0 // loop_header_branch
    %12 = sbr.rel (%p10) target = $region8
  $region5: #{conv3d_1_forward.5} parent=0 // loop_body
    %s14 = ssub.s32 %s9, 1
    %s15 = ssub.s32 %s9, 2
    %s16 = sadd.s32 %s9, 1
    %s17 = ssub.s32 %s9, %s16
    %p18 = scmp.eq.s32.totalorder %s17, 0
    %s20 = sadd.s32 %s19, 1
    %s21 = scalar_select %p18, %s19, %s20
    %p24 = pneg %p18
    %p25 = scmp.eq.s32.totalorder %s9, 7
    %p26 = por %p24, %p25
    %p27 = scmp.ne.s32.totalorder %s19, %s22
    %p28 = scmp.eq.s32.totalorder %s9, 0
    %p29 = por %p27, %p28
    %p30 = scmp.ne.s32.totalorder %s19, %s22
    %p31 = scmp.eq.s32.totalorder %s14, 7
    %p32 = por %p30, %p31
    %p33 = scmp.ne.s32.totalorder %s22, %s23
    %p34 = scmp.eq.s32.totalorder %s14, 0
    %p35 = por %p33, %p34
    %p36 = scmp.ne.s32.totalorder %s22, %s23
    %p37 = scmp.eq.s32.totalorder %s15, 7
    %p38 = por %p36, %p37
    %p40 = scmp.ne.s32.totalorder %s23, %s39
    %p41 = scmp.eq.s32.totalorder %s15, 0
    %p42 = por %p40, %p41
    %s44 = sadd.s32 %s43, 1
    %p47 = scmp.eq.s32.totalorder %s9, 7
    %p48 = scmp.ne.s32.totalorder %s43, %s45
    %p49 = scmp.eq.s32.totalorder %s9, 0
    %p50 = por %p48, %p49
    %p51 = scmp.ne.s32.totalorder %s43, %s45
    %p52 = scmp.eq.s32.totalorder %s14, 7
    %p53 = por %p51, %p52
    %p54 = scmp.ne.s32.totalorder %s45, %s46
    %p55 = scmp.eq.s32.totalorder %s14, 0
    %p56 = por %p54, %p55
    %p57 = scmp.ne.s32.totalorder %s45, %s46
    %p58 = scmp.eq.s32.totalorder %s15, 7
    %p59 = por %p57, %p58
    %p61 = scmp.ne.s32.totalorder %s46, %s60
    %p62 = scmp.eq.s32.totalorder %s15, 0
    %p63 = por %p61, %p62
    %s65 = sadd.s32 %s64, 1
    %p68 = scmp.eq.s32.totalorder %s9, 7
    %p69 = scmp.ne.s32.totalorder %s64, %s66
    %p70 = scmp.eq.s32.totalorder %s9, 0
    %p71 = por %p69, %p70
    %p72 = scmp.ne.s32.totalorder %s64, %s66
    %p73 = scmp.eq.s32.totalorder %s14, 7
    %p74 = por %p72, %p73
    %p75 = scmp.ne.s32.totalorder %s66, %s67
    %p76 = scmp.eq.s32.totalorder %s14, 0
    %p77 = por %p75, %p76
    %p78 = scmp.ne.s32.totalorder %s66, %s67
    %p79 = scmp.eq.s32.totalorder %s15, 7
    %p80 = por %p78, %p79
    %p82 = scmp.ne.s32.totalorder %s67, %s81
    %p83 = scmp.eq.s32.totalorder %s15, 0
    %p84 = por %p82, %p83
    %s85 = ssub.s32 %s9, %s16
    %p86 = scmp.eq.s32.totalorder %s85, 0
    %s88 = sadd.s32 %s87, 1
    %s89 = scalar_select %p86, %s87, %s88
    %p92 = pneg %p86
    %p93 = scmp.eq.s32.totalorder %s9, 7
    %p94 = por %p92, %p93
    %p95 = scmp.ne.s32.totalorder %s87, %s90
    %p96 = scmp.eq.s32.totalorder %s9, 0
    %p97 = por %p95, %p96
    %p98 = scmp.ne.s32.totalorder %s87, %s90
    %p99 = scmp.eq.s32.totalorder %s14, 7
    %p100 = por %p98, %p99
    %p101 = scmp.ne.s32.totalorder %s90, %s91
    %p102 = scmp.eq.s32.totalorder %s14, 0
    %p103 = por %p101, %p102
    %p104 = scmp.ne.s32.totalorder %s90, %s91
    %p105 = scmp.eq.s32.totalorder %s15, 7
    %p106 = por %p104, %p105
    %p108 = scmp.ne.s32.totalorder %s91, %s107
    %p109 = scmp.eq.s32.totalorder %s15, 0
    %p110 = por %p108, %p109
    %p111 = scmp.le.s32.totalorder 1, %s9
    %p112 = scmp.lt.s32.totalorder %s9, 9
    %p113 = pnand %p111, %p112
    %p114 = pneg %p113
    // Predicated region
    $region9: #{conv3d_1_forward.5} parent=5 // pred_check
      _
    $region10: #{conv3d_1_forward.5} parent=5 // pred_check_branch
      %116 = sbr.rel (%p113) target = $region12
    $region11: #{conv3d_1_forward.5} parent=5 // pred_region
      %s117 = ssub.s32 %s9, 1
      // Predicated region
      $region13: #{conv3d_1_forward.5} parent=11 // pred_check
        %p118 = pneg %p56
      $region14: #{conv3d_1_forward.5} parent=11 // pred_check_branch
        %120 = sbr.rel (%p118) target = $region16
      $region15: #{conv3d_1_forward.5} parent=11 // pred_region
        _
      $region16: #{conv3d_1_forward.5} parent=11 // pred_fallthru
        _
      // Predicated region
      $region17: #{conv3d_1_forward.5} parent=11 // pred_check
        %p121 = pneg %p77
      $region18: #{conv3d_1_forward.5} parent=11 // pred_check_branch
        %123 = sbr.rel (%p121) target = $region20
      $region19: #{conv3d_1_forward.5} parent=11 // pred_region
        _
      $region20: #{conv3d_1_forward.5} parent=11 // pred_fallthru
        _
    $region12: #{conv3d_1_forward.5} parent=5 // pred_fallthru
      _
    %p124 = scmp.lt.s32.totalorder %s9, 8
    // Predicated region
    $region21: #{conv3d_1_forward.5} parent=5 // pred_check
      %p125 = pneg %p124
    $region22: #{conv3d_1_forward.5} parent=5 // pred_check_branch
      %127 = sbr.rel (%p125) target = $region24
    $region23: #{conv3d_1_forward.5} parent=5 // pred_region
      // Predicated region
      $region25: #{conv3d_1_forward.5} parent=23 // pred_check
        %p128 = pneg %p29
      $region26: #{conv3d_1_forward.5} parent=23 // pred_check_branch
        %130 = sbr.rel (%p128) target = $region28
      $region27: #{conv3d_1_forward.5} parent=23 // pred_region
        %s131 = smul.u32 32, %s9
        %p132 = scmp.lt.s32.totalorder %s131, 255
        %s133 = scalar_select %p132, %s131, 255
        %s134 = smul.addr %s133, 8
        %s135 = scalar_lea.vmem %s0, %s134
        %s136 = smul.u32 32, %s9
      $region28: #{conv3d_1_forward.5} parent=23 // pred_fallthru
        _
    $region24: #{conv3d_1_forward.5} parent=5 // pred_fallthru
      _
    %p137 = scmp.le.s32.totalorder 1, %s9
    %p138 = scmp.lt.s32.totalorder %s9, 9
    %p139 = pnand %p137, %p138
    %p140 = pneg %p139
    // Predicated region
    $region29: #{conv3d_1_forward.5} parent=5 // pred_check
      _
    $region30: #{conv3d_1_forward.5} parent=5 // pred_check_branch
      %142 = sbr.rel (%p139) target = $region32
    $region31: #{conv3d_1_forward.5} parent=5 // pred_region
      %s143 = ssub.s32 %s9, 1
      %s144 = smul.u32 32, %s14
      %p145 = scmp.lt.s32.totalorder %s144, 255
      %s146 = scalar_select %p145, %s144, 255
      %s147 = smul.addr %s146, 8
      %s148 = scalar_lea.vmem %s0, %s147
      %p149 = pneg %p35
      %p150 = pneg %p32
      %p151 = pneg %p56
      %p152 = pneg %p53
      %p153 = pneg %p77
      %p154 = pneg %p74
      %p155 = pneg %p103
      %p156 = pneg %p100
      %s157 = smul.u32 32, %s14
      %p158 = scmp.lt.s32.totalorder %s157, 255
      %s159 = scalar_select %p158, %s157, 255
      %s160 = smul.addr %s159, 8
      %s161 = scalar_lea.vmem %s3, %s160
      %s162 = smul.u32 32, %s14
      %p163 = scmp.lt.s32.totalorder %s162, 255
      %s164 = scalar_select %p163, %s162, 255
      %s165 = smul.addr %s164, 8
      %s166 = scalar_lea.vmem %s0, %s165
      %s167 = smul.u32 32, %s14
      %s168 = smul.u32 32, %s14
      %p169 = scmp.lt.s32.totalorder %s168, 255
      %s170 = scalar_select %p169, %s168, 255
      %s171 = smul.addr %s170, 8
      %s172 = scalar_lea.vmem %s3, %s171
      %s173 = smul.u32 32, %s14
      %v174 = vld [vmem:[%s166] sm:$0xff]
      %v175 = vld [vmem:[%s166 + $0x8] sm:$0xff]
      %v176 = vld [vmem:[%s166 + $0x10] sm:$0xff]
      %v177 = vld [vmem:[%s166 + $0x18] sm:$0xff]
      %v178 = vld [vmem:[%s166 + $0x20] sm:$0xff]
      %v179 = vld [vmem:[%s166 + $0x28] sm:$0xff]
      %v180 = vld [vmem:[%s166 + $0x30] sm:$0xff]
      %v181 = vld [vmem:[%s166 + $0x38] sm:$0xff]
      %v182 = vld [vmem:[%s166 + $0x40] sm:$0xff]
      %v183 = vld [vmem:[%s166 + $0x48] sm:$0xff]
      %v184 = vld [vmem:[%s166 + $0x50] sm:$0xff]
      %v185 = vld [vmem:[%s166 + $0x58] sm:$0xff]
      %v186 = vld [vmem:[%s166 + $0x60] sm:$0xff]
      %v187 = vld [vmem:[%s166 + $0x68] sm:$0xff]
      %v188 = vld [vmem:[%s166 + $0x70] sm:$0xff]
      %v189 = vld [vmem:[%s166 + $0x78] sm:$0xff]
      %v190 = vld [vmem:[%s166 + $0x80] sm:$0xff]
      %v191 = vld [vmem:[%s166 + $0x88] sm:$0xff]
      %v192 = vld [vmem:[%s166 + $0x90] sm:$0xff]
      %v193 = vld [vmem:[%s166 + $0x98] sm:$0xff]
      %v194 = vld [vmem:[%s166 + $0xa0] sm:$0xff]
      %v195 = vld [vmem:[%s166 + $0xa8] sm:$0xff]
      %v196 = vld [vmem:[%s166 + $0xb0] sm:$0xff]
      %v197 = vld [vmem:[%s166 + $0xb8] sm:$0xff]
      %v198 = vld [vmem:[%s166 + $0xc0] sm:$0xff]
      %v199 = vld [vmem:[%s166 + $0xc8] sm:$0xff]
      %v200 = vld [vmem:[%s166 + $0xd0] sm:$0xff]
      %v201 = vld [vmem:[%s166 + $0xd8] sm:$0xff]
      %v202 = vld [vmem:[%s166 + $0xe0] sm:$0xff]
      %v203 = vld [vmem:[%s166 + $0xe8] sm:$0xff]
      %v204 = vld [vmem:[%s166 + $0xf0] sm:$0xff]
      %v205 = vld [vmem:[%s166 + $0xf8] sm:$0xff]
      %v206 = vld [vmem:[%s1] sm:$0x1]
      %v208 = vlaneseq
      %v209 = vshrl.u32 %v208, 7
      %v210 = vsub.s32 0, %v209
      %v211 = vrot.slane %v206, %v210
      %v213 = vmul.f32 %v174, %v211
      %v214 = vmul.f32 %v175, %v211
      %v215 = vmul.f32 %v176, %v211
      %v216 = vmul.f32 %v177, %v211
      %v217 = vmul.f32 %v178, %v211
      %v218 = vmul.f32 %v179, %v211
      %v219 = vmul.f32 %v180, %v211
      %v220 = vmul.f32 %v181, %v211
      %v221 = vmul.f32 %v182, %v211
      %v222 = vmul.f32 %v183, %v211
      %v223 = vmul.f32 %v184, %v211
      %v224 = vmul.f32 %v185, %v211
      %v225 = vmul.f32 %v186, %v211
      %v226 = vmul.f32 %v187, %v211
      %v227 = vmul.f32 %v188, %v211
      %v228 = vmul.f32 %v189, %v211
      %v229 = vmul.f32 %v190, %v211
      %v230 = vmul.f32 %v191, %v211
      %v231 = vmul.f32 %v192, %v211
      %v232 = vmul.f32 %v193, %v211
      %v233 = vmul.f32 %v194, %v211
      %v234 = vmul.f32 %v195, %v211
      %v235 = vmul.f32 %v196, %v211
      %v236 = vmul.f32 %v197, %v211
      %v237 = vmul.f32 %v198, %v211
      %v238 = vmul.f32 %v199, %v211
      %v239 = vmul.f32 %v200, %v211
      %v240 = vmul.f32 %v201, %v211
      %v241 = vmul.f32 %v202, %v211
      %v242 = vmul.f32 %v203, %v211
      %v243 = vmul.f32 %v204, %v211
      %v244 = vmul.f32 %v205, %v211
      %v245 = vld [vmem:[%s2] sm:$0x1]
      %v247 = vlaneseq
      %v248 = vshrl.u32 %v247, 7
      %v249 = vsub.s32 0, %v248
      %v250 = vrot.slane %v245, %v249
      %v252 = vadd.f32 %v213, %v250
      %v253 = vadd.f32 %v214, %v250
      %v254 = vadd.f32 %v215, %v250
      %v255 = vadd.f32 %v216, %v250
      %v256 = vadd.f32 %v217, %v250
      %v257 = vadd.f32 %v218, %v250
      %v258 = vadd.f32 %v219, %v250
      %v259 = vadd.f32 %v220, %v250
      %v260 = vadd.f32 %v221, %v250
      %v261 = vadd.f32 %v222, %v250
      %v262 = vadd.f32 %v223, %v250
      %v263 = vadd.f32 %v224, %v250
      %v264 = vadd.f32 %v225, %v250
      %v265 = vadd.f32 %v226, %v250
      %v266 = vadd.f32 %v227, %v250
      %v267 = vadd.f32 %v228, %v250
      %v268 = vadd.f32 %v229, %v250
      %v269 = vadd.f32 %v230, %v250
      %v270 = vadd.f32 %v231, %v250
      %v271 = vadd.f32 %v232, %v250
      %v272 = vadd.f32 %v233, %v250
      %v273 = vadd.f32 %v234, %v250
      %v274 = vadd.f32 %v235, %v250
      %v275 = vadd.f32 %v236, %v250
      %v276 = vadd.f32 %v237, %v250
      %v277 = vadd.f32 %v238, %v250
      %v278 = vadd.f32 %v239, %v250
      %v279 = vadd.f32 %v240, %v250
      %v280 = vadd.f32 %v241, %v250
      %v281 = vadd.f32 %v242, %v250
      %v282 = vadd.f32 %v243, %v250
      %v283 = vadd.f32 %v244, %v250
      %v284 = vmax.f32 %v252, 0.0
      %v285 = vmax.f32 %v253, 0.0
      %v286 = vmax.f32 %v254, 0.0
      %v287 = vmax.f32 %v255, 0.0
      %v288 = vmax.f32 %v256, 0.0
      %v289 = vmax.f32 %v257, 0.0
      %v290 = vmax.f32 %v258, 0.0
      %v291 = vmax.f32 %v259, 0.0
      %v292 = vmax.f32 %v260, 0.0
      %v293 = vmax.f32 %v261, 0.0
      %v294 = vmax.f32 %v262, 0.0
      %v295 = vmax.f32 %v263, 0.0
      %v296 = vmax.f32 %v264, 0.0
      %v297 = vmax.f32 %v265, 0.0
      %v298 = vmax.f32 %v266, 0.0
      %v299 = vmax.f32 %v267, 0.0
      %v300 = vmax.f32 %v268, 0.0
      %v301 = vmax.f32 %v269, 0.0
      %v302 = vmax.f32 %v270, 0.0
      %v303 = vmax.f32 %v271, 0.0
      %v304 = vmax.f32 %v272, 0.0
      %v305 = vmax.f32 %v273, 0.0
      %v306 = vmax.f32 %v274, 0.0
      %v307 = vmax.f32 %v275, 0.0
      %v308 = vmax.f32 %v276, 0.0
      %v309 = vmax.f32 %v277, 0.0
      %v310 = vmax.f32 %v278, 0.0
      %v311 = vmax.f32 %v279, 0.0
      %v312 = vmax.f32 %v280, 0.0
      %v313 = vmax.f32 %v281, 0.0
      %v314 = vmax.f32 %v282, 0.0
      %v315 = vmax.f32 %v283, 0.0
      %316 = vst [vmem:[%s172] sm:$0xff] %v284
      %317 = vst [vmem:[%s172 + $0x8] sm:$0xff] %v285
      %318 = vst [vmem:[%s172 + $0x10] sm:$0xff] %v286
      %319 = vst [vmem:[%s172 + $0x18] sm:$0xff] %v287
      %320 = vst [vmem:[%s172 + $0x20] sm:$0xff] %v288
      %321 = vst [vmem:[%s172 + $0x28] sm:$0xff] %v289
      %322 = vst [vmem:[%s172 + $0x30] sm:$0xff] %v290
      %323 = vst [vmem:[%s172 + $0x38] sm:$0xff] %v291
      %324 = vst [vmem:[%s172 + $0x40] sm:$0xff] %v292
      %325 = vst [vmem:[%s172 + $0x48] sm:$0xff] %v293
      %326 = vst [vmem:[%s172 + $0x50] sm:$0xff] %v294
      %327 = vst [vmem:[%s172 + $0x58] sm:$0xff] %v295
      %328 = vst [vmem:[%s172 + $0x60] sm:$0xff] %v296
      %329 = vst [vmem:[%s172 + $0x68] sm:$0xff] %v297
      %330 = vst [vmem:[%s172 + $0x70] sm:$0xff] %v298
      %331 = vst [vmem:[%s172 + $0x78] sm:$0xff] %v299
      %332 = vst [vmem:[%s172 + $0x80] sm:$0xff] %v300
      %333 = vst [vmem:[%s172 + $0x88] sm:$0xff] %v301
      %334 = vst [vmem:[%s172 + $0x90] sm:$0xff] %v302
      %335 = vst [vmem:[%s172 + $0x98] sm:$0xff] %v303
      %336 = vst [vmem:[%s172 + $0xa0] sm:$0xff] %v304
      %337 = vst [vmem:[%s172 + $0xa8] sm:$0xff] %v305
      %338 = vst [vmem:[%s172 + $0xb0] sm:$0xff] %v306
      %339 = vst [vmem:[%s172 + $0xb8] sm:$0xff] %v307
      %340 = vst [vmem:[%s172 + $0xc0] sm:$0xff] %v308
      %341 = vst [vmem:[%s172 + $0xc8] sm:$0xff] %v309
      %342 = vst [vmem:[%s172 + $0xd0] sm:$0xff] %v310
      %343 = vst [vmem:[%s172 + $0xd8] sm:$0xff] %v311
      %344 = vst [vmem:[%s172 + $0xe0] sm:$0xff] %v312
      %345 = vst [vmem:[%s172 + $0xe8] sm:$0xff] %v313
      %346 = vst [vmem:[%s172 + $0xf0] sm:$0xff] %v314
      %347 = vst [vmem:[%s172 + $0xf8] sm:$0xff] %v315
      %s348 = smul.u32 32, %s14
      %p349 = scmp.lt.s32.totalorder %s348, 255
      %s350 = scalar_select %p349, %s348, 255
      %s351 = smul.addr %s350, 8
      %s352 = scalar_lea.vmem %s3, %s351
      // Predicated region
      $region33: #{conv3d_1_forward.5} parent=31 // pred_check
        %p353 = pneg %p100
      $region34: #{conv3d_1_forward.5} parent=31 // pred_check_branch
        %355 = sbr.rel (%p353) target = $region36
      $region35: #{conv3d_1_forward.5} parent=31 // pred_region
        %s356 = smul.u32 32, %s14
      $region36: #{conv3d_1_forward.5} parent=31 // pred_fallthru
        _
    $region32: #{conv3d_1_forward.5} parent=5 // pred_fallthru
      _
    %p357 = scmp.le.s32.totalorder 2, %s9
    // Predicated region
    $region37: #{conv3d_1_forward.5} parent=5 // pred_check
      %p358 = pneg %p357
    $region38: #{conv3d_1_forward.5} parent=5 // pred_check_branch
      %360 = sbr.rel (%p358) target = $region40
    $region39: #{conv3d_1_forward.5} parent=5 // pred_region
      %s361 = ssub.s32 %s9, 2
      // Predicated region
      $region41: #{conv3d_1_forward.5} parent=39 // pred_check
        %p362 = pneg %p106
      $region42: #{conv3d_1_forward.5} parent=39 // pred_check_branch
        %364 = sbr.rel (%p362) target = $region44
      $region43: #{conv3d_1_forward.5} parent=39 // pred_region
        %s365 = smul.u32 32, %s15
        %p366 = scmp.lt.s32.totalorder %s365, 255
        %s367 = scalar_select %p366, %s365, 255
        %s368 = smul.addr %s367, 8
        %s369 = scalar_lea.vmem %s3, %s368
      $region44: #{conv3d_1_forward.5} parent=39 // pred_fallthru
        _
    $region40: #{conv3d_1_forward.5} parent=5 // pred_fallthru
      _
  $region6: #{conv3d_1_forward.5} parent=0 // loop_footer
    %s13 = sadd.s32 1, %s9
  $region7: #{conv3d_1_forward.5} parent=0 // loop_footer_branch
    %8 = sbr.rel target = $region3
  $region8: #{conv3d_1_forward.5} parent=0 // loop_exit
    _

// kernel: conv3d_1_forward.6
$region0: #{conv3d_1_forward.6}
  #allocation0 [shape = 'u32[]', space=smem, size = 0x4, offset = 0x4, fixed_abs, tag = 'smem constant byte address 0x4 - core index']
  #allocation1 [shape = 'u32[144,128]{1,0:T(1,128)}', space=vmem, size = 0x12000, scoped, tag = 'internal scratch']
  #allocation2 [shape = 'f32[256,128]{1,0:T(8,128)}', space=vmem, size = 0x20000, scoped, tag = 'scratch operand']
  %s0 = inlined_call_operand.vmem [shape: bf16[1024,3584], index: 0, kind: input, shape index: {}]
  %s1 = inlined_call_operand.vmem [shape: bf16[3584,128], index: 1, kind: input, shape index: {}]
  %s2 = inlined_call_operand.vmem [shape: f32[1024,128], index: 2, kind: output, shape index: {0}]
  %s3 = inlined_call_operand.vmem [shape: f32[4,2,128], index: 3, kind: output, shape index: {1}]
  %4 = xla_tuple %s2, %s3
  %s5 = sld [smem:[#allocation0]]
  $region80: #{conv3d_1_forward.6} parent=0
    _
  %s7 = ssub.s32 1, %s5
  %s8 = scalar_select 0, %s7, %s5
  $region1: #{conv3d_1_forward.6} parent=0
    #allocation3 [shape = 'u8[524288]{0}', space=vmem, size = 0x80000, scoped, tag = 'input window, operand 0']
    loop: start=0, step=1, limit=30
    $region2: #{conv3d_1_forward.6} parent=1 // loop_pre_header
      _
    $region3: #{conv3d_1_forward.6} parent=1 // loop_header
      %s10 = sphi 0, %s14
      %p11 = scmp.ge.s32.totalorder %s10, 30
      %s17 = sphi 0, %s29
      %s18 = sphi 0, %s25
      %s19 = sphi 0, %s17
      %s20 = sphi 0, %s18
      %s21 = sphi 0, %s19
      %s22 = sphi 0, %s20
      %s34 = sphi 0, %s36
      %s37 = sphi 0, %s34
      %s38 = sphi 0, %s37
      %s54 = sphi 0, %s38
      %s60 = sphi 0, %s62
      %s63 = sphi 0, %s60
      %s64 = sphi 0, %s63
      %s80 = sphi 0, %s64
      %s86 = sphi 0, %s88
      %s89 = sphi 0, %s86
      %s90 = sphi 0, %s89
      %s106 = sphi 0, %s90
      %s112 = sphi 0, %s114
      %s115 = sphi 0, %s112
      %s116 = sphi 0, %s115
      %s132 = sphi 0, %s116
    $region4: #{conv3d_1_forward.6} parent=1 // loop_header_branch
      %13 = sbr.rel (%p11) target = $region8
    $region5: #{conv3d_1_forward.6} parent=1 // loop_body
      %s15 = ssub.s32 %s10, 1
      %s16 = ssub.s32 %s10, 2
      %s23 = sadd.s32 1, %s18
      %p24 = scmp.ge.s32.totalorder %s23, 7
      %s25 = scalar_select %p24, 0, %s23
      %s26 = sadd.s32 1, %s17
      %s27 = scalar_select %p24, %s26, %s17
      %p28 = scmp.ge.s32.totalorder %s27, 4
      %s29 = scalar_select %p28, 0, %s27
      %s30 = ssub.s32 %s17, %s29
      %s31 = ssub.s32 %s18, %s25
      %s32 = sor.u32 %s30, %s31
      %p33 = scmp.eq.s32.totalorder %s32, 0
      %s35 = sadd.s32 %s34, 1
      %s36 = scalar_select %p33, %s34, %s35
      %p39 = pneg %p33
      %p40 = scmp.eq.s32.totalorder %s10, 27
      %p41 = por %p39, %p40
      %p42 = scmp.ne.s32.totalorder %s34, %s37
      %p43 = scmp.eq.s32.totalorder %s10, 0
      %p44 = por %p42, %p43
      %p45 = scmp.ne.s32.totalorder %s34, %s37
      %p46 = scmp.eq.s32.totalorder %s15, 27
      %p47 = por %p45, %p46
      %p48 = scmp.ne.s32.totalorder %s37, %s38
      %p49 = scmp.eq.s32.totalorder %s15, 0
      %p50 = por %p48, %p49
      %p51 = scmp.ne.s32.totalorder %s37, %s38
      %p52 = scmp.eq.s32.totalorder %s16, 27
      %p53 = por %p51, %p52
      %p55 = scmp.ne.s32.totalorder %s38, %s54
      %p56 = scmp.eq.s32.totalorder %s16, 0
      %p57 = por %p55, %p56
      %s58 = ssub.s32 %s18, %s25
      %p59 = scmp.eq.s32.totalorder %s58, 0
      %s61 = sadd.s32 %s60, 1
      %s62 = scalar_select %p59, %s60, %s61
      %p65 = pneg %p59
      %p66 = scmp.eq.s32.totalorder %s10, 27
      %p67 = por %p65, %p66
      %p68 = scmp.ne.s32.totalorder %s60, %s63
      %p69 = scmp.eq.s32.totalorder %s10, 0
      %p70 = por %p68, %p69
      %p71 = scmp.ne.s32.totalorder %s60, %s63
      %p72 = scmp.eq.s32.totalorder %s15, 27
      %p73 = por %p71, %p72
      %p74 = scmp.ne.s32.totalorder %s63, %s64
      %p75 = scmp.eq.s32.totalorder %s15, 0
      %p76 = por %p74, %p75
      %p77 = scmp.ne.s32.totalorder %s63, %s64
      %p78 = scmp.eq.s32.totalorder %s16, 27
      %p79 = por %p77, %p78
      %p81 = scmp.ne.s32.totalorder %s64, %s80
      %p82 = scmp.eq.s32.totalorder %s16, 0
      %p83 = por %p81, %p82
      %s84 = ssub.s32 %s17, %s29
      %p85 = scmp.eq.s32.totalorder %s84, 0
      %s87 = sadd.s32 %s86, 1
      %s88 = scalar_select %p85, %s86, %s87
      %p91 = pneg %p85
      %p92 = scmp.eq.s32.totalorder %s10, 27
      %p93 = por %p91, %p92
      %p94 = scmp.ne.s32.totalorder %s86, %s89
      %p95 = scmp.eq.s32.totalorder %s10, 0
      %p96 = por %p94, %p95
      %p97 = scmp.ne.s32.totalorder %s86, %s89
      %p98 = scmp.eq.s32.totalorder %s15, 27
      %p99 = por %p97, %p98
      %p100 = scmp.ne.s32.totalorder %s89, %s90
      %p101 = scmp.eq.s32.totalorder %s15, 0
      %p102 = por %p100, %p101
      %p103 = scmp.ne.s32.totalorder %s89, %s90
      %p104 = scmp.eq.s32.totalorder %s16, 27
      %p105 = por %p103, %p104
      %p107 = scmp.ne.s32.totalorder %s90, %s106
      %p108 = scmp.eq.s32.totalorder %s16, 0
      %p109 = por %p107, %p108
      %s110 = ssub.s32 %s17, %s29
      %p111 = scmp.eq.s32.totalorder %s110, 0
      %s113 = sadd.s32 %s112, 1
      %s114 = scalar_select %p111, %s112, %s113
      %p117 = pneg %p111
      %p118 = scmp.eq.s32.totalorder %s10, 27
      %p119 = por %p117, %p118
      %p120 = scmp.ne.s32.totalorder %s112, %s115
      %p121 = scmp.eq.s32.totalorder %s10, 0
      %p122 = por %p120, %p121
      %p123 = scmp.ne.s32.totalorder %s112, %s115
      %p124 = scmp.eq.s32.totalorder %s15, 27
      %p125 = por %p123, %p124
      %p126 = scmp.ne.s32.totalorder %s115, %s116
      %p127 = scmp.eq.s32.totalorder %s15, 0
      %p128 = por %p126, %p127
      %p129 = scmp.ne.s32.totalorder %s115, %s116
      %p130 = scmp.eq.s32.totalorder %s16, 27
      %p131 = por %p129, %p130
      %p133 = scmp.ne.s32.totalorder %s116, %s132
      %p134 = scmp.eq.s32.totalorder %s16, 0
      %p135 = por %p133, %p134
      %p136 = scmp.le.s32.totalorder 1, %s10
      %p137 = scmp.lt.s32.totalorder %s10, 29
      %p138 = pnand %p136, %p137
      %p139 = pneg %p138
      // Predicated region
      $region9: #{conv3d_1_forward.6} parent=5 // pred_check
        _
      $region10: #{conv3d_1_forward.6} parent=5 // pred_check_branch
        %141 = sbr.rel (%p138) target = $region12
      $region11: #{conv3d_1_forward.6} parent=5 // pred_region
        %s142 = ssub.s32 %s10, 1
      $region12: #{conv3d_1_forward.6} parent=5 // pred_fallthru
        _
      %p143 = scmp.lt.s32.totalorder %s10, 28
      // Predicated region
      $region13: #{conv3d_1_forward.6} parent=5 // pred_check
        %p144 = pneg %p143
      $region14: #{conv3d_1_forward.6} parent=5 // pred_check_branch
        %146 = sbr.rel (%p144) target = $region16
      $region15: #{conv3d_1_forward.6} parent=5 // pred_region
        // Predicated region
        $region17: #{conv3d_1_forward.6} parent=15 // pred_check
          %p147 = pneg %p44
        $region18: #{conv3d_1_forward.6} parent=15 // pred_check_branch
          %149 = sbr.rel (%p147) target = $region20
        $region19: #{conv3d_1_forward.6} parent=15 // pred_region
          %s150 = sand.u32 %s34, 1
          %s151 = sand.u32 %s34, 1
          %s152 = smul.addr %s151, 512
          %s153 = scalar_lea.vmem [#allocation3], %s152
          %s154 = smul.u32 32, %s17
          %s155 = smul.u32 4, %s18
          %s156 = smul.addr %s154, 28
          %s157 = sadd.s32 %s155, %s156
          %s158 = smul.addr %s157, 4
          %s159 = scalar_lea.vmem %s0, %s158
          // Predicated region
          $region21: #{conv3d_1_forward.6} parent=19 // pred_check
            _
          $region22: #{conv3d_1_forward.6} parent=19 // pred_check_branch
            %161 = sbr.rel (0) target = $region24
          $region23: #{conv3d_1_forward.6} parent=19 // pred_region
            // Predicated region
            $region25: #{conv3d_1_forward.6} parent=23 // pred_check
              _
            $region26: #{conv3d_1_forward.6} parent=23 // pred_check_branch
              %163 = sbr.rel (0) target = $region28
            $region27: #{conv3d_1_forward.6} parent=23 // pred_region
              loop: start=0, step=1, limit=1
              $region29: #{conv3d_1_forward.6} parent=27 // loop_pre_header
                _
              $region30: #{conv3d_1_forward.6} parent=27 // loop_header
                %s165 = sphi 0, %s169
                %p166 = scmp.ge.s32.totalorder %s165, 1
                %s170 = sphi %s159, %s159
                %s171 = sphi %s153, %s153
              $region31: #{conv3d_1_forward.6} parent=27 // loop_header_branch
                %168 = sbr.rel (%p166) target = $region35
              $region32: #{conv3d_1_forward.6} parent=27 // loop_body
                %v172 = vld [vmem:[%s170] sm:$0xff]
                %173 = vst [vmem:[%s171] sm:$0xff] %v172
                %v174 = vld [vmem:[%s170 + $0x8] sm:$0xff]
                %175 = vst [vmem:[%s171 + $0x8] sm:$0xff] %v174
                %v176 = vld [vmem:[%s170 + $0x70] sm:$0xff]
                %177 = vst [vmem:[%s171 + $0x10] sm:$0xff] %v176
                %v178 = vld [vmem:[%s170 + $0x78] sm:$0xff]
                %179 = vst [vmem:[%s171 + $0x18] sm:$0xff] %v178
                %v180 = vld [vmem:[%s170 + $0xe0] sm:$0xff]
                %181 = vst [vmem:[%s171 + $0x20] sm:$0xff] %v180
                %v182 = vld [vmem:[%s170 + $0xe8] sm:$0xff]
                %183 = vst [vmem:[%s171 + $0x28] sm:$0xff] %v182
                %v184 = vld [vmem:[%s170 + $0x150] sm:$0xff]
                %185 = vst [vmem:[%s171 + $0x30] sm:$0xff] %v184
                %v186 = vld [vmem:[%s170 + $0x158] sm:$0xff]
                %187 = vst [vmem:[%s171 + $0x38] sm:$0xff] %v186
                %v188 = vld [vmem:[%s170 + $0x1c0] sm:$0xff]
                %189 = vst [vmem:[%s171 + $0x40] sm:$0xff] %v188
                %v190 = vld [vmem:[%s170 + $0x1c8] sm:$0xff]
                %191 = vst [vmem:[%s171 + $0x48] sm:$0xff] %v190
                %v192 = vld [vmem:[%s170 + $0x230] sm:$0xff]
                %193 = vst [vmem:[%s171 + $0x50] sm:$0xff] %v192
                %v194 = vld [vmem:[%s170 + $0x238] sm:$0xff]
                %195 = vst [vmem:[%s171 + $0x58] sm:$0xff] %v194
                %v196 = vld [vmem:[%s170 + $0x2a0] sm:$0xff]
                %197 = vst [vmem:[%s171 + $0x60] sm:$0xff] %v196
                %v198 = vld [vmem:[%s170 + $0x2a8] sm:$0xff]
                %199 = vst [vmem:[%s171 + $0x68] sm:$0xff] %v198
                %v200 = vld [vmem:[%s170 + $0x310] sm:$0xff]
                %201 = vst [vmem:[%s171 + $0x70] sm:$0xff] %v200
                %v202 = vld [vmem:[%s170 + $0x318] sm:$0xff]
                %203 = vst [vmem:[%s171 + $0x78] sm:$0xff] %v202
                %v204 = vld [vmem:[%s170 + $0x380] sm:$0xff]
                %205 = vst [vmem:[%s171 + $0x80] sm:$0xff] %v204
                %v206 = vld [vmem:[%s170 + $0x388] sm:$0xff]
                %207 = vst [vmem:[%s171 + $0x88] sm:$0xff] %v206
                %v208 = vld [vmem:[%s170 + $0x3f0] sm:$0xff]
                %209 = vst [vmem:[%s171 + $0x90] sm:$0xff] %v208
                %v210 = vld [vmem:[%s170 + $0x3f8] sm:$0xff]
                %211 = vst [vmem:[%s171 + $0x98] sm:$0xff] %v210
                %v212 = vld [vmem:[%s170 + $0x460] sm:$0xff]
                %213 = vst [vmem:[%s171 + $0xa0] sm:$0xff] %v212
                %v214 = vld [vmem:[%s170 + $0x468] sm:$0xff]
                %215 = vst [vmem:[%s171 + $0xa8] sm:$0xff] %v214
                %v216 = vld [vmem:[%s170 + $0x4d0] sm:$0xff]
                %217 = vst [vmem:[%s171 + $0xb0] sm:$0xff] %v216
                %v218 = vld [vmem:[%s170 + $0x4d8] sm:$0xff]
                %219 = vst [vmem:[%s171 + $0xb8] sm:$0xff] %v218
                %v220 = vld [vmem:[%s170 + $0x540] sm:$0xff]
                %221 = vst [vmem:[%s171 + $0xc0] sm:$0xff] %v220
                %v222 = vld [vmem:[%s170 + $0x548] sm:$0xff]
                %223 = vst [vmem:[%s171 + $0xc8] sm:$0xff] %v222
                %v224 = vld [vmem:[%s170 + $0x5b0] sm:$0xff]
                %225 = vst [vmem:[%s171 + $0xd0] sm:$0xff] %v224
                %v226 = vld [vmem:[%s170 + $0x5b8] sm:$0xff]
                %227 = vst [vmem:[%s171 + $0xd8] sm:$0xff] %v226
                %v228 = vld [vmem:[%s170 + $0x620] sm:$0xff]
                %229 = vst [vmem:[%s171 + $0xe0] sm:$0xff] %v228
                %v230 = vld [vmem:[%s170 + $0x628] sm:$0xff]
                %231 = vst [vmem:[%s171 + $0xe8] sm:$0xff] %v230
                %v232 = vld [vmem:[%s170 + $0x690] sm:$0xff]
                %233 = vst [vmem:[%s171 + $0xf0] sm:$0xff] %v232
                %v234 = vld [vmem:[%s170 + $0x698] sm:$0xff]
                %235 = vst [vmem:[%s171 + $0xf8] sm:$0xff] %v234
                %v236 = vld [vmem:[%s170 + $0x700] sm:$0xff]
                %237 = vst [vmem:[%s171 + $0x100] sm:$0xff] %v236
                %v238 = vld [vmem:[%s170 + $0x708] sm:$0xff]
                %239 = vst [vmem:[%s171 + $0x108] sm:$0xff] %v238
                %v240 = vld [vmem:[%s170 + $0x770] sm:$0xff]
                %241 = vst [vmem:[%s171 + $0x110] sm:$0xff] %v240
                %v242 = vld [vmem:[%s170 + $0x778] sm:$0xff]
                %243 = vst [vmem:[%s171 + $0x118] sm:$0xff] %v242
                %v244 = vld [vmem:[%s170 + $0x7e0] sm:$0xff]
                %245 = vst [vmem:[%s171 + $0x120] sm:$0xff] %v244
                %v246 = vld [vmem:[%s170 + $0x7e8] sm:$0xff]
                %247 = vst [vmem:[%s171 + $0x128] sm:$0xff] %v246
                %v248 = vld [vmem:[%s170 + $0x850] sm:$0xff]
                %249 = vst [vmem:[%s171 + $0x130] sm:$0xff] %v248
                %v250 = vld [vmem:[%s170 + $0x858] sm:$0xff]
                %251 = vst [vmem:[%s171 + $0x138] sm:$0xff] %v250
                %v252 = vld [vmem:[%s170 + $0x8c0] sm:$0xff]
                %253 = vst [vmem:[%s171 + $0x140] sm:$0xff] %v252
                %v254 = vld [vmem:[%s170 + $0x8c8] sm:$0xff]
                %255 = vst [vmem:[%s171 + $0x148] sm:$0xff] %v254
                %v256 = vld [vmem:[%s170 + $0x930] sm:$0xff]
                %257 = vst [vmem:[%s171 + $0x150] sm:$0xff] %v256
                %v258 = vld [vmem:[%s170 + $0x938] sm:$0xff]
                %259 = vst [vmem:[%s171 + $0x158] sm:$0xff] %v258
                %v260 = vld [vmem:[%s170 + $0x9a0] sm:$0xff]
                %261 = vst [vmem:[%s171 + $0x160] sm:$0xff] %v260
                %v262 = vld [vmem:[%s170 + $0x9a8] sm:$0xff]
                %263 = vst [vmem:[%s171 + $0x168] sm:$0xff] %v262
                %v264 = vld [vmem:[%s170 + $0xa10] sm:$0xff]
                %265 = vst [vmem:[%s171 + $0x170] sm:$0xff] %v264
                %v266 = vld [vmem:[%s170 + $0xa18] sm:$0xff]
                %267 = vst [vmem:[%s171 + $0x178] sm:$0xff] %v266
                %v268 = vld [vmem:[%s170 + $0xa80] sm:$0xff]
                %269 = vst [vmem:[%s171 + $0x180] sm:$0xff] %v268
                %v270 = vld [vmem:[%s170 + $0xa88] sm:$0xff]
                %271 = vst [vmem:[%s171 + $0x188] sm:$0xff] %v270
                %v272 = vld [vmem:[%s170 + $0xaf0] sm:$0xff]
                %273 = vst [vmem:[%s171 + $0x190] sm:$0xff] %v272
                %v274 = vld [vmem:[%s170 + $0xaf8] sm:$0xff]
                %275 = vst [vmem:[%s171 + $0x198] sm:$0xff] %v274
                %v276 = vld [vmem:[%s170 + $0xb60] sm:$0xff]
                %277 = vst [vmem:[%s171 + $0x1a0] sm:$0xff] %v276
                %v278 = vld [vmem:[%s170 + $0xb68] sm:$0xff]
                %279 = vst [vmem:[%s171 + $0x1a8] sm:$0xff] %v278
                %v280 = vld [vmem:[%s170 + $0xbd0] sm:$0xff]
                %281 = vst [vmem:[%s171 + $0x1b0] sm:$0xff] %v280
                %v282 = vld [vmem:[%s170 + $0xbd8] sm:$0xff]
                %283 = vst [vmem:[%s171 + $0x1b8] sm:$0xff] %v282
                %v284 = vld [vmem:[%s170 + $0xc40] sm:$0xff]
                %285 = vst [vmem:[%s171 + $0x1c0] sm:$0xff] %v284
                %v286 = vld [vmem:[%s170 + $0xc48] sm:$0xff]
                %287 = vst [vmem:[%s171 + $0x1c8] sm:$0xff] %v286
                %v288 = vld [vmem:[%s170 + $0xcb0] sm:$0xff]
                %289 = vst [vmem:[%s171 + $0x1d0] sm:$0xff] %v288
                %v290 = vld [vmem:[%s170 + $0xcb8] sm:$0xff]
                %291 = vst [vmem:[%s171 + $0x1d8] sm:$0xff] %v290
                %v292 = vld [vmem:[%s170 + $0xd20] sm:$0xff]
                %293 = vst [vmem:[%s171 + $0x1e0] sm:$0xff] %v292
                %v294 = vld [vmem:[%s170 + $0xd28] sm:$0xff]
                %295 = vst [vmem:[%s171 + $0x1e8] sm:$0xff] %v294
                %v296 = vld [vmem:[%s170 + $0xd90] sm:$0xff]
                %297 = vst [vmem:[%s171 + $0x1f0] sm:$0xff] %v296
                %v298 = vld [vmem:[%s170 + $0xd98] sm:$0xff]
                %299 = vst [vmem:[%s171 + $0x1f8] sm:$0xff] %v298
              $region33: #{conv3d_1_forward.6} parent=27 // loop_footer
                %s169 = sadd.s32 1, %s165
              $region34: #{conv3d_1_forward.6} parent=27 // loop_footer_branch
                %164 = sbr.rel target = $region30
              $region35: #{conv3d_1_forward.6} parent=27 // loop_exit
                _
            $region28: #{conv3d_1_forward.6} parent=23 // pred_fallthru
              _
            // Predicated region
            $region36: #{conv3d_1_forward.6} parent=23 // pred_check
              _
            $region37: #{conv3d_1_forward.6} parent=23 // pred_check_branch
              %301 = sbr.rel target = $region39
            $region38: #{conv3d_1_forward.6} parent=23 // pred_region
              _
            $region39: #{conv3d_1_forward.6} parent=23 // pred_fallthru
              _
          $region24: #{conv3d_1_forward.6} parent=19 // pred_fallthru
            _
          %302 = vnop
        $region20: #{conv3d_1_forward.6} parent=15 // pred_fallthru
          _
        // Predicated region
        $region40: #{conv3d_1_forward.6} parent=15 // pred_check
          %p303 = pneg %p70
        $region41: #{conv3d_1_forward.6} parent=15 // pred_check_branch
          %305 = sbr.rel (%p303) target = $region43
        $region42: #{conv3d_1_forward.6} parent=15 // pred_region
          %s306 = smul.u32 64, %s18
          %p307 = scmp.lt.s32.totalorder %s306, 447
          %s308 = scalar_select %p307, %s306, 447
          %s309 = smul.addr %s308, 4
          %s310 = scalar_lea.vmem %s1, %s309
          %s311 = smul.u32 64, %s18
        $region43: #{conv3d_1_forward.6} parent=15 // pred_fallthru
          _
      $region16: #{conv3d_1_forward.6} parent=5 // pred_fallthru
        _
      %p312 = scmp.le.s32.totalorder 1, %s10
      %p313 = scmp.lt.s32.totalorder %s10, 29
      %p314 = pnand %p312, %p313
      %p315 = pneg %p314
      // Predicated region
      $region44: #{conv3d_1_forward.6} parent=5 // pred_check
        _
      $region45: #{conv3d_1_forward.6} parent=5 // pred_check_branch
        %317 = sbr.rel (%p314) target = $region47
      $region46: #{conv3d_1_forward.6} parent=5 // pred_region
        %s318 = ssub.s32 %s10, 1
        %s319 = sand.u32 %s37, 1
        %s320 = sand.u32 %s37, 1
        %s321 = smul.addr %s320, 512
        %s322 = scalar_lea.vmem [#allocation3], %s321
        // Predicated region
        $region48: #{conv3d_1_forward.6} parent=46 // pred_check
          %p323 = pneg %p50
        $region49: #{conv3d_1_forward.6} parent=46 // pred_check_branch
          %325 = sbr.rel (%p323) target = $region51
        $region50: #{conv3d_1_forward.6} parent=46 // pred_region
          _
        $region51: #{conv3d_1_forward.6} parent=46 // pred_fallthru
          _
        %s326 = sand.u32 %s37, 1
        %s327 = sand.u32 %s37, 1
        %s328 = smul.addr %s327, 512
        %s329 = scalar_lea.vmem [#allocation3], %s328
        %p330 = pneg %p50
        %p331 = pneg %p47
        %s332 = smul.u32 64, %s20
        %p333 = scmp.lt.s32.totalorder %s332, 447
        %s334 = scalar_select %p333, %s332, 447
        %s335 = smul.addr %s334, 4
        %s336 = scalar_lea.vmem %s1, %s335
        %p337 = pneg %p76
        %p338 = pneg %p73
        %p339 = pneg %p102
        %p340 = pneg %p99
        %s341 = smul.u32 32, %s19
        %p342 = scmp.lt.s32.totalorder %s341, 127
        %s343 = scalar_select %p342, %s341, 127
        %s344 = smul.addr %s343, 8
        %s345 = scalar_lea.vmem %s2, %s344
        %p346 = pneg %p128
        %p347 = pneg %p125
        %p348 = scmp.lt.s32.totalorder %s19, 3
        %s349 = scalar_select %p348, %s19, 3
        %s350 = smul.addr %s349, 2
        %s351 = scalar_lea.vmem %s3, %s350
        %s352 = smul.u32 32, %s19
        %s353 = smul.u32 4, %s20
        %s354 = smul.u32 64, %s20
        %p355 = scmp.lt.s32.totalorder %s354, 447
        %s356 = scalar_select %p355, %s354, 447
        %s357 = smul.addr %s356, 4
        %s358 = scalar_lea.vmem %s1, %s357
        %s359 = smul.u32 64, %s20
        %s360 = smul.u32 32, %s19
        %p361 = scmp.lt.s32.totalorder %s360, 127
        %s362 = scalar_select %p361, %s360, 127
        %s363 = smul.addr %s362, 8
        %s364 = scalar_lea.vmem %s2, %s363
        %s365 = smul.u32 32, %s19
        %p366 = scmp.lt.s32.totalorder %s19, 3
        %s367 = scalar_select %p366, %s19, 3
        %s368 = smul.addr %s367, 2
        %s369 = scalar_lea.vmem %s3, %s368
        %p371 = scmp.eq.s32.totalorder %s20, 0
        // Predicated region
        $region52: #{conv3d_1_forward.6} parent=46 // pred_check
          %p372 = pneg %p371
        $region53: #{conv3d_1_forward.6} parent=46 // pred_check_branch
          %374 = sbr.rel (%p372) target = $region55
        $region54: #{conv3d_1_forward.6} parent=46 // pred_region
          %375 = vst [vmem:[#allocation2] sm:$0xff] 0.0
          %376 = vst [vmem:[#allocation2 + $0x8] sm:$0xff] 0.0
          %377 = vst [vmem:[#allocation2 + $0x10] sm:$0xff] 0.0
          %378 = vst [vmem:[#allocation2 + $0x18] sm:$0xff] 0.0
          %379 = vst [vmem:[#allocation2 + $0x20] sm:$0xff] 0.0
          %380 = vst [vmem:[#allocation2 + $0x28] sm:$0xff] 0.0
          %381 = vst [vmem:[#allocation2 + $0x30] sm:$0xff] 0.0
          %382 = vst [vmem:[#allocation2 + $0x38] sm:$0xff] 0.0
          %383 = vst [vmem:[#allocation2 + $0x40] sm:$0xff] 0.0
          %384 = vst [vmem:[#allocation2 + $0x48] sm:$0xff] 0.0
          %385 = vst [vmem:[#allocation2 + $0x50] sm:$0xff] 0.0
          %386 = vst [vmem:[#allocation2 + $0x58] sm:$0xff] 0.0
          %387 = vst [vmem:[#allocation2 + $0x60] sm:$0xff] 0.0
          %388 = vst [vmem:[#allocation2 + $0x68] sm:$0xff] 0.0
          %389 = vst [vmem:[#allocation2 + $0x70] sm:$0xff] 0.0
          %390 = vst [vmem:[#allocation2 + $0x78] sm:$0xff] 0.0
          %391 = vst [vmem:[#allocation2 + $0x80] sm:$0xff] 0.0
          %392 = vst [vmem:[#allocation2 + $0x88] sm:$0xff] 0.0
          %393 = vst [vmem:[#allocation2 + $0x90] sm:$0xff] 0.0
          %394 = vst [vmem:[#allocation2 + $0x98] sm:$0xff] 0.0
          %395 = vst [vmem:[#allocation2 + $0xa0] sm:$0xff] 0.0
          %396 = vst [vmem:[#allocation2 + $0xa8] sm:$0xff] 0.0
          %397 = vst [vmem:[#allocation2 + $0xb0] sm:$0xff] 0.0
          %398 = vst [vmem:[#allocation2 + $0xb8] sm:$0xff] 0.0
          %399 = vst [vmem:[#allocation2 + $0xc0] sm:$0xff] 0.0
          %400 = vst [vmem:[#allocation2 + $0xc8] sm:$0xff] 0.0
          %401 = vst [vmem:[#allocation2 + $0xd0] sm:$0xff] 0.0
          %402 = vst [vmem:[#allocation2 + $0xd8] sm:$0xff] 0.0
          %403 = vst [vmem:[#allocation2 + $0xe0] sm:$0xff] 0.0
          %404 = vst [vmem:[#allocation2 + $0xe8] sm:$0xff] 0.0
          %405 = vst [vmem:[#allocation2 + $0xf0] sm:$0xff] 0.0
          %406 = vst [vmem:[#allocation2 + $0xf8] sm:$0xff] 0.0
        $region55: #{conv3d_1_forward.6} parent=46 // pred_fallthru
          _
        %v407 = vld [vmem:[#allocation2] sm:$0xff]
        %v408 = vld [vmem:[#allocation2 + $0x8] sm:$0xff]
        %v409 = vld [vmem:[#allocation2 + $0x10] sm:$0xff]
        %v410 = vld [vmem:[#allocation2 + $0x18] sm:$0xff]
        %v411 = vld [vmem:[#allocation2 + $0x20] sm:$0xff]
        %v412 = vld [vmem:[#allocation2 + $0x28] sm:$0xff]
        %v413 = vld [vmem:[#allocation2 + $0x30] sm:$0xff]
        %v414 = vld [vmem:[#allocation2 + $0x38] sm:$0xff]
        %v415 = vld [vmem:[#allocation2 + $0x40] sm:$0xff]
        %v416 = vld [vmem:[#allocation2 + $0x48] sm:$0xff]
        %v417 = vld [vmem:[#allocation2 + $0x50] sm:$0xff]
        %v418 = vld [vmem:[#allocation2 + $0x58] sm:$0xff]
        %v419 = vld [vmem:[#allocation2 + $0x60] sm:$0xff]
        %v420 = vld [vmem:[#allocation2 + $0x68] sm:$0xff]
        %v421 = vld [vmem:[#allocation2 + $0x70] sm:$0xff]
        %v422 = vld [vmem:[#allocation2 + $0x78] sm:$0xff]
        %v423 = vld [vmem:[#allocation2 + $0x80] sm:$0xff]
        %v424 = vld [vmem:[#allocation2 + $0x88] sm:$0xff]
        %v425 = vld [vmem:[#allocation2 + $0x90] sm:$0xff]
        %v426 = vld [vmem:[#allocation2 + $0x98] sm:$0xff]
        %v427 = vld [vmem:[#allocation2 + $0xa0] sm:$0xff]
        %v428 = vld [vmem:[#allocation2 + $0xa8] sm:$0xff]
        %v429 = vld [vmem:[#allocation2 + $0xb0] sm:$0xff]
        %v430 = vld [vmem:[#allocation2 + $0xb8] sm:$0xff]
        %v431 = vld [vmem:[#allocation2 + $0xc0] sm:$0xff]
        %v432 = vld [vmem:[#allocation2 + $0xc8] sm:$0xff]
        %v433 = vld [vmem:[#allocation2 + $0xd0] sm:$0xff]
        %v434 = vld [vmem:[#allocation2 + $0xd8] sm:$0xff]
        %v435 = vld [vmem:[#allocation2 + $0xe0] sm:$0xff]
        %v436 = vld [vmem:[#allocation2 + $0xe8] sm:$0xff]
        %v437 = vld [vmem:[#allocation2 + $0xf0] sm:$0xff]
        %v438 = vld [vmem:[#allocation2 + $0xf8] sm:$0xff]
        %v439 = vld [vmem:[%s322] sm:$0xff]
        %v440 = vld [vmem:[%s322 + $0x8] sm:$0xff]
        %v441 = vld [vmem:[%s322 + $0x10] sm:$0xff]
        %v442 = vld [vmem:[%s322 + $0x18] sm:$0xff]
        %v443 = vld [vmem:[%s322 + $0x20] sm:$0xff]
        %v444 = vld [vmem:[%s322 + $0x28] sm:$0xff]
        %v445 = vld [vmem:[%s322 + $0x30] sm:$0xff]
        %v446 = vld [vmem:[%s322 + $0x38] sm:$0xff]
        %v447 = vld [vmem:[%s322 + $0x40] sm:$0xff]
        %v448 = vld [vmem:[%s322 + $0x48] sm:$0xff]
        %v449 = vld [vmem:[%s322 + $0x50] sm:$0xff]
        %v450 = vld [vmem:[%s322 + $0x58] sm:$0xff]
        %v451 = vld [vmem:[%s322 + $0x60] sm:$0xff]
        %v452 = vld [vmem:[%s322 + $0x68] sm:$0xff]
        %v453 = vld [vmem:[%s322 + $0x70] sm:$0xff]
        %v454 = vld [vmem:[%s322 + $0x78] sm:$0xff]
        %v455 = vld [vmem:[%s322 + $0x80] sm:$0xff]
        %v456 = vld [vmem:[%s322 + $0x88] sm:$0xff]
        %v457 = vld [vmem:[%s322 + $0x90] sm:$0xff]
        %v458 = vld [vmem:[%s322 + $0x98] sm:$0xff]
        %v459 = vld [vmem:[%s322 + $0xa0] sm:$0xff]
        %v460 = vld [vmem:[%s322 + $0xa8] sm:$0xff]
        %v461 = vld [vmem:[%s322 + $0xb0] sm:$0xff]
        %v462 = vld [vmem:[%s322 + $0xb8] sm:$0xff]
        %v463 = vld [vmem:[%s322 + $0xc0] sm:$0xff]
        %v464 = vld [vmem:[%s322 + $0xc8] sm:$0xff]
        %v465 = vld [vmem:[%s322 + $0xd0] sm:$0xff]
        %v466 = vld [vmem:[%s322 + $0xd8] sm:$0xff]
        %v467 = vld [vmem:[%s322 + $0xe0] sm:$0xff]
        %v468 = vld [vmem:[%s322 + $0xe8] sm:$0xff]
        %v469 = vld [vmem:[%s322 + $0xf0] sm:$0xff]
        %v470 = vld [vmem:[%s322 + $0xf8] sm:$0xff]
        %v471 = vld [vmem:[%s322 + $0x100] sm:$0xff]
        %v472 = vld [vmem:[%s322 + $0x108] sm:$0xff]
        %v473 = vld [vmem:[%s322 + $0x110] sm:$0xff]
        %v474 = vld [vmem:[%s322 + $0x118] sm:$0xff]
        %v475 = vld [vmem:[%s322 + $0x120] sm:$0xff]
        %v476 = vld [vmem:[%s322 + $0x128] sm:$0xff]
        %v477 = vld [vmem:[%s322 + $0x130] sm:$0xff]
        %v478 = vld [vmem:[%s322 + $0x138] sm:$0xff]
        %v479 = vld [vmem:[%s322 + $0x140] sm:$0xff]
        %v480 = vld [vmem:[%s322 + $0x148] sm:$0xff]
        %v481 = vld [vmem:[%s322 + $0x150] sm:$0xff]
        %v482 = vld [vmem:[%s322 + $0x158] sm:$0xff]
        %v483 = vld [vmem:[%s322 + $0x160] sm:$0xff]
        %v484 = vld [vmem:[%s322 + $0x168] sm:$0xff]
        %v485 = vld [vmem:[%s322 + $0x170] sm:$0xff]
        %v486 = vld [vmem:[%s322 + $0x178] sm:$0xff]
        %v487 = vld [vmem:[%s322 + $0x180] sm:$0xff]
        %v488 = vld [vmem:[%s322 + $0x188] sm:$0xff]
        %v489 = vld [vmem:[%s322 + $0x190] sm:$0xff]
        %v490 = vld [vmem:[%s322 + $0x198] sm:$0xff]
        %v491 = vld [vmem:[%s322 + $0x1a0] sm:$0xff]
        %v492 = vld [vmem:[%s322 + $0x1a8] sm:$0xff]
        %v493 = vld [vmem:[%s322 + $0x1b0] sm:$0xff]
        %v494 = vld [vmem:[%s322 + $0x1b8] sm:$0xff]
        %v495 = vld [vmem:[%s322 + $0x1c0] sm:$0xff]
        %v496 = vld [vmem:[%s322 + $0x1c8] sm:$0xff]
        %v497 = vld [vmem:[%s322 + $0x1d0] sm:$0xff]
        %v498 = vld [vmem:[%s322 + $0x1d8] sm:$0xff]
        %v499 = vld [vmem:[%s322 + $0x1e0] sm:$0xff]
        %v500 = vld [vmem:[%s322 + $0x1e8] sm:$0xff]
        %v501 = vld [vmem:[%s322 + $0x1f0] sm:$0xff]
        %v502 = vld [vmem:[%s322 + $0x1f8] sm:$0xff]
        %v503 = vld [vmem:[%s358] sm:$0xf]
        %v504 = vld [vmem:[%s358 + $0x4] sm:$0xf]
        %v505 = vld [vmem:[%s358 + $0x8] sm:$0xf]
        %v506 = vld [vmem:[%s358 + $0xc] sm:$0xf]
        %v507 = vld [vmem:[%s358 + $0x10] sm:$0xf]
        %v508 = vld [vmem:[%s358 + $0x14] sm:$0xf]
        %v509 = vld [vmem:[%s358 + $0x18] sm:$0xf]
        %v510 = vld [vmem:[%s358 + $0x1c] sm:$0xf]
        %v511 = vld [vmem:[%s358 + $0x20] sm:$0xf]
        %v512 = vld [vmem:[%s358 + $0x24] sm:$0xf]
        %v513 = vld [vmem:[%s358 + $0x28] sm:$0xf]
        %v514 = vld [vmem:[%s358 + $0x2c] sm:$0xf]
        %v515 = vld [vmem:[%s358 + $0x30] sm:$0xf]
        %v516 = vld [vmem:[%s358 + $0x34] sm:$0xf]
        %v517 = vld [vmem:[%s358 + $0x38] sm:$0xf]
        %v518 = vld [vmem:[%s358 + $0x3c] sm:$0xf]
        %v519 = vld [vmem:[%s358 + $0x40] sm:$0xf]
        %v520 = vld [vmem:[%s358 + $0x44] sm:$0xf]
        %v521 = vld [vmem:[%s358 + $0x48] sm:$0xf]
        %v522 = vld [vmem:[%s358 + $0x4c] sm:$0xf]
        %v523 = vld [vmem:[%s358 + $0x50] sm:$0xf]
        %v524 = vld [vmem:[%s358 + $0x54] sm:$0xf]
        %v525 = vld [vmem:[%s358 + $0x58] sm:$0xf]
        %v526 = vld [vmem:[%s358 + $0x5c] sm:$0xf]
        %v527 = vld [vmem:[%s358 + $0x60] sm:$0xf]
        %v528 = vld [vmem:[%s358 + $0x64] sm:$0xf]
        %v529 = vld [vmem:[%s358 + $0x68] sm:$0xf]
        %v530 = vld [vmem:[%s358 + $0x6c] sm:$0xf]
        %v531 = vld [vmem:[%s358 + $0x70] sm:$0xf]
        %v532 = vld [vmem:[%s358 + $0x74] sm:$0xf]
        %v533 = vld [vmem:[%s358 + $0x78] sm:$0xf]
        %v534 = vld [vmem:[%s358 + $0x7c] sm:$0xf]
        %v535 = vld [vmem:[%s358 + $0x80] sm:$0xf]
        %v536 = vld [vmem:[%s358 + $0x84] sm:$0xf]
        %v537 = vld [vmem:[%s358 + $0x88] sm:$0xf]
        %v538 = vld [vmem:[%s358 + $0x8c] sm:$0xf]
        %v539 = vld [vmem:[%s358 + $0x90] sm:$0xf]
        %v540 = vld [vmem:[%s358 + $0x94] sm:$0xf]
        %v541 = vld [vmem:[%s358 + $0x98] sm:$0xf]
        %v542 = vld [vmem:[%s358 + $0x9c] sm:$0xf]
        %v543 = vld [vmem:[%s358 + $0xa0] sm:$0xf]
        %v544 = vld [vmem:[%s358 + $0xa4] sm:$0xf]
        %v545 = vld [vmem:[%s358 + $0xa8] sm:$0xf]
        %v546 = vld [vmem:[%s358 + $0xac] sm:$0xf]
        %v547 = vld [vmem:[%s358 + $0xb0] sm:$0xf]
        %v548 = vld [vmem:[%s358 + $0xb4] sm:$0xf]
        %v549 = vld [vmem:[%s358 + $0xb8] sm:$0xf]
        %v550 = vld [vmem:[%s358 + $0xbc] sm:$0xf]
        %v551 = vld [vmem:[%s358 + $0xc0] sm:$0xf]
        %v552 = vld [vmem:[%s358 + $0xc4] sm:$0xf]
        %v553 = vld [vmem:[%s358 + $0xc8] sm:$0xf]
        %v554 = vld [vmem:[%s358 + $0xcc] sm:$0xf]
        %v555 = vld [vmem:[%s358 + $0xd0] sm:$0xf]
        %v556 = vld [vmem:[%s358 + $0xd4] sm:$0xf]
        %v557 = vld [vmem:[%s358 + $0xd8] sm:$0xf]
        %v558 = vld [vmem:[%s358 + $0xdc] sm:$0xf]
        %v559 = vld [vmem:[%s358 + $0xe0] sm:$0xf]
        %v560 = vld [vmem:[%s358 + $0xe4] sm:$0xf]
        %v561 = vld [vmem:[%s358 + $0xe8] sm:$0xf]
        %v562 = vld [vmem:[%s358 + $0xec] sm:$0xf]
        %v563 = vld [vmem:[%s358 + $0xf0] sm:$0xf]
        %v564 = vld [vmem:[%s358 + $0xf4] sm:$0xf]
        %v565 = vld [vmem:[%s358 + $0xf8] sm:$0xf]
        %v566 = vld [vmem:[%s358 + $0xfc] sm:$0xf]
        %v631 = vunpack.c.l.b16 %v439
        %v632 = vunpack.c.h.b16 %v439
        %v633 = vunpack.c.l.b16 %v440
        %v634 = vunpack.c.h.b16 %v440
        %v635 = vunpack.c.l.b16 %v441
        %v636 = vunpack.c.h.b16 %v441
        %v637 = vunpack.c.l.b16 %v442
        %v638 = vunpack.c.h.b16 %v442
        %v639 = vunpack.c.l.b16 %v443
        %v640 = vunpack.c.h.b16 %v443
        %v641 = vunpack.c.l.b16 %v444
        %v642 = vunpack.c.h.b16 %v444
        %v643 = vunpack.c.l.b16 %v445
        %v644 = vunpack.c.h.b16 %v445
        %v645 = vunpack.c.l.b16 %v446
        %v646 = vunpack.c.h.b16 %v446
        %v647 = vunpack.c.l.b16 %v447
        %v648 = vunpack.c.h.b16 %v447
        %v649 = vunpack.c.l.b16 %v448
        %v650 = vunpack.c.h.b16 %v448
        %v651 = vunpack.c.l.b16 %v449
        %v652 = vunpack.c.h.b16 %v449
        %v653 = vunpack.c.l.b16 %v450
        %v654 = vunpack.c.h.b16 %v450
        %v655 = vunpack.c.l.b16 %v451
        %v656 = vunpack.c.h.b16 %v451
        %v657 = vunpack.c.l.b16 %v452
        %v658 = vunpack.c.h.b16 %v452
        %v659 = vunpack.c.l.b16 %v453
        %v660 = vunpack.c.h.b16 %v453
        %v661 = vunpack.c.l.b16 %v454
        %v662 = vunpack.c.h.b16 %v454
        %v663 = vunpack.c.l.b16 %v455
        %v664 = vunpack.c.h.b16 %v455
        %v665 = vunpack.c.l.b16 %v456
        %v666 = vunpack.c.h.b16 %v456
        %v667 = vunpack.c.l.b16 %v457
        %v668 = vunpack.c.h.b16 %v457
        %v669 = vunpack.c.l.b16 %v458
        %v670 = vunpack.c.h.b16 %v458
        %v671 = vunpack.c.l.b16 %v459
        %v672 = vunpack.c.h.b16 %v459
        %v673 = vunpack.c.l.b16 %v460
        %v674 = vunpack.c.h.b16 %v460
        %v675 = vunpack.c.l.b16 %v461
        %v676 = vunpack.c.h.b16 %v461
        %v677 = vunpack.c.l.b16 %v462
        %v678 = vunpack.c.h.b16 %v462
        %v679 = vunpack.c.l.b16 %v463
        %v680 = vunpack.c.h.b16 %v463
        %v681 = vunpack.c.l.b16 %v464
        %v682 = vunpack.c.h.b16 %v464
        %v683 = vunpack.c.l.b16 %v465
        %v684 = vunpack.c.h.b16 %v465
        %v685 = vunpack.c.l.b16 %v466
        %v686 = vunpack.c.h.b16 %v466
        %v687 = vunpack.c.l.b16 %v467
        %v688 = vunpack.c.h.b16 %v467
        %v689 = vunpack.c.l.b16 %v468
        %v690 = vunpack.c.h.b16 %v468
        %v691 = vunpack.c.l.b16 %v469
        %v692 = vunpack.c.h.b16 %v469
        %v693 = vunpack.c.l.b16 %v470
        %v694 = vunpack.c.h.b16 %v470
        %v695 = vunpack.c.l.b16 %v471
        %v696 = vunpack.c.h.b16 %v471
        %v697 = vunpack.c.l.b16 %v472
        %v698 = vunpack.c.h.b16 %v472
        %v699 = vunpack.c.l.b16 %v473
        %v700 = vunpack.c.h.b16 %v473
        %v701 = vunpack.c.l.b16 %v474
        %v702 = vunpack.c.h.b16 %v474
        %v703 = vunpack.c.l.b16 %v475
        %v704 = vunpack.c.h.b16 %v475
        %v705 = vunpack.c.l.b16 %v476
        %v706 = vunpack.c.h.b16 %v476
        %v707 = vunpack.c.l.b16 %v477
        %v708 = vunpack.c.h.b16 %v477
        %v709 = vunpack.c.l.b16 %v478
        %v710 = vunpack.c.h.b16 %v478
        %v711 = vunpack.c.l.b16 %v479
        %v712 = vunpack.c.h.b16 %v479
        %v713 = vunpack.c.l.b16 %v480
        %v714 = vunpack.c.h.b16 %v480
        %v715 = vunpack.c.l.b16 %v481
        %v716 = vunpack.c.h.b16 %v481
        %v717 = vunpack.c.l.b16 %v482
        %v718 = vunpack.c.h.b16 %v482
        %v719 = vunpack.c.l.b16 %v483
        %v720 = vunpack.c.h.b16 %v483
        %v721 = vunpack.c.l.b16 %v484
        %v722 = vunpack.c.h.b16 %v484
        %v723 = vunpack.c.l.b16 %v485
        %v724 = vunpack.c.h.b16 %v485
        %v725 = vunpack.c.l.b16 %v486
        %v726 = vunpack.c.h.b16 %v486
        %v727 = vunpack.c.l.b16 %v487
        %v728 = vunpack.c.h.b16 %v487
        %v729 = vunpack.c.l.b16 %v488
        %v730 = vunpack.c.h.b16 %v488
        %v731 = vunpack.c.l.b16 %v489
        %v732 = vunpack.c.h.b16 %v489
        %v733 = vunpack.c.l.b16 %v490
        %v734 = vunpack.c.h.b16 %v490
        %v735 = vunpack.c.l.b16 %v491
        %v736 = vunpack.c.h.b16 %v491
        %v737 = vunpack.c.l.b16 %v492
        %v738 = vunpack.c.h.b16 %v492
        %v739 = vunpack.c.l.b16 %v493
        %v740 = vunpack.c.h.b16 %v493
        %v741 = vunpack.c.l.b16 %v494
        %v742 = vunpack.c.h.b16 %v494
        %v743 = vunpack.c.l.b16 %v495
        %v744 = vunpack.c.h.b16 %v495
        %v745 = vunpack.c.l.b16 %v496
        %v746 = vunpack.c.h.b16 %v496
        %v747 = vunpack.c.l.b16 %v497
        %v748 = vunpack.c.h.b16 %v497
        %v749 = vunpack.c.l.b16 %v498
        %v750 = vunpack.c.h.b16 %v498
        %v751 = vunpack.c.l.b16 %v499
        %v752 = vunpack.c.h.b16 %v499
        %v753 = vunpack.c.l.b16 %v500
        %v754 = vunpack.c.h.b16 %v500
        %v755 = vunpack.c.l.b16 %v501
        %v756 = vunpack.c.h.b16 %v501
        %v757 = vunpack.c.l.b16 %v502
        %v758 = vunpack.c.h.b16 %v502
        %v759 = vpack.c.b16 %v635, %v631
        %v760 = vpack.c.b16 %v636, %v632
        %v761 = vpack.c.b16 %v637, %v633
        %v762 = vpack.c.b16 %v638, %v634
        %v763 = vpack.c.b16 %v643, %v639
        %v764 = vpack.c.b16 %v644, %v640
        %v765 = vpack.c.b16 %v645, %v641
        %v766 = vpack.c.b16 %v646, %v642
        %v767 = vpack.c.b16 %v651, %v647
        %v768 = vpack.c.b16 %v652, %v648
        %v769 = vpack.c.b16 %v653, %v649
        %v770 = vpack.c.b16 %v654, %v650
        %v771 = vpack.c.b16 %v659, %v655
        %v772 = vpack.c.b16 %v660, %v656
        %v773 = vpack.c.b16 %v661, %v657
        %v774 = vpack.c.b16 %v662, %v658
        %v775 = vpack.c.b16 %v667, %v663
        %v776 = vpack.c.b16 %v668, %v664
        %v777 = vpack.c.b16 %v669, %v665
        %v778 = vpack.c.b16 %v670, %v666
        %v779 = vpack.c.b16 %v675, %v671
        %v780 = vpack.c.b16 %v676, %v672
        %v781 = vpack.c.b16 %v677, %v673
        %v782 = vpack.c.b16 %v678, %v674
        %v783 = vpack.c.b16 %v683, %v679
        %v784 = vpack.c.b16 %v684, %v680
        %v785 = vpack.c.b16 %v685, %v681
        %v786 = vpack.c.b16 %v686, %v682
        %v787 = vpack.c.b16 %v691, %v687
        %v788 = vpack.c.b16 %v692, %v688
        %v789 = vpack.c.b16 %v693, %v689
        %v790 = vpack.c.b16 %v694, %v690
        %v791 = vpack.c.b16 %v699, %v695
        %v792 = vpack.c.b16 %v700, %v696
        %v793 = vpack.c.b16 %v701, %v697
        %v794 = vpack.c.b16 %v702, %v698
        %v795 = vpack.c.b16 %v707, %v703
        %v796 = vpack.c.b16 %v708, %v704
        %v797 = vpack.c.b16 %v709, %v705
        %v798 = vpack.c.b16 %v710, %v706
        %v799 = vpack.c.b16 %v715, %v711
        %v800 = vpack.c.b16 %v716, %v712
        %v801 = vpack.c.b16 %v717, %v713
        %v802 = vpack.c.b16 %v718, %v714
        %v803 = vpack.c.b16 %v723, %v719
        %v804 = vpack.c.b16 %v724, %v720
        %v805 = vpack.c.b16 %v725, %v721
        %v806 = vpack.c.b16 %v726, %v722
        %v807 = vpack.c.b16 %v731, %v727
        %v808 = vpack.c.b16 %v732, %v728
        %v809 = vpack.c.b16 %v733, %v729
        %v810 = vpack.c.b16 %v734, %v730
        %v811 = vpack.c.b16 %v739, %v735
        %v812 = vpack.c.b16 %v740, %v736
        %v813 = vpack.c.b16 %v741, %v737
        %v814 = vpack.c.b16 %v742, %v738
        %v815 = vpack.c.b16 %v747, %v743
        %v816 = vpack.c.b16 %v748, %v744
        %v817 = vpack.c.b16 %v749, %v745
        %v818 = vpack.c.b16 %v750, %v746
        %v819 = vpack.c.b16 %v755, %v751
        %v820 = vpack.c.b16 %v756, %v752
        %v821 = vpack.c.b16 %v757, %v753
        %v822 = vpack.c.b16 %v758, %v754
        %v951 = vunpack.c.l.b16 %v503
        %v952 = vunpack.c.l.b16 %v504
        %v953 = vunpack.c.l.b16 %v505
        %v954 = vunpack.c.l.b16 %v506
        %v955 = vunpack.c.l.b16 %v507
        %v956 = vunpack.c.l.b16 %v508
        %v957 = vunpack.c.l.b16 %v509
        %v958 = vunpack.c.l.b16 %v510
        %v959 = vunpack.c.l.b16 %v511
        %v960 = vunpack.c.l.b16 %v512
        %v961 = vunpack.c.l.b16 %v513
        %v962 = vunpack.c.l.b16 %v514
        %v963 = vunpack.c.l.b16 %v515
        %v964 = vunpack.c.l.b16 %v516
        %v965 = vunpack.c.l.b16 %v517
        %v966 = vunpack.c.l.b16 %v518
        %v967 = vunpack.c.l.b16 %v519
        %v968 = vunpack.c.l.b16 %v520
        %v969 = vunpack.c.l.b16 %v521
        %v970 = vunpack.c.l.b16 %v522
        %v971 = vunpack.c.l.b16 %v523
        %v972 = vunpack.c.l.b16 %v524
        %v973 = vunpack.c.l.b16 %v525
        %v974 = vunpack.c.l.b16 %v526
        %v975 = vunpack.c.l.b16 %v527
        %v976 = vunpack.c.l.b16 %v528
        %v977 = vunpack.c.l.b16 %v529
        %v978 = vunpack.c.l.b16 %v530
        %v979 = vunpack.c.l.b16 %v531
        %v980 = vunpack.c.l.b16 %v532
        %v981 = vunpack.c.l.b16 %v533
        %v982 = vunpack.c.l.b16 %v534
        %v983 = vunpack.c.l.b16 %v535
        %v984 = vunpack.c.l.b16 %v536
        %v985 = vunpack.c.l.b16 %v537
        %v986 = vunpack.c.l.b16 %v538
        %v987 = vunpack.c.l.b16 %v539
        %v988 = vunpack.c.l.b16 %v540
        %v989 = vunpack.c.l.b16 %v541
        %v990 = vunpack.c.l.b16 %v542
        %v991 = vunpack.c.l.b16 %v543
        %v992 = vunpack.c.l.b16 %v544
        %v993 = vunpack.c.l.b16 %v545
        %v994 = vunpack.c.l.b16 %v546
        %v995 = vunpack.c.l.b16 %v547
        %v996 = vunpack.c.l.b16 %v548
        %v997 = vunpack.c.l.b16 %v549
        %v998 = vunpack.c.l.b16 %v550
        %v999 = vunpack.c.l.b16 %v551
        %v1000 = vunpack.c.l.b16 %v552
        %v1001 = vunpack.c.l.b16 %v553
        %v1002 = vunpack.c.l.b16 %v554
        %v1003 = vunpack.c.l.b16 %v555
        %v1004 = vunpack.c.l.b16 %v556
        %v1005 = vunpack.c.l.b16 %v557
        %v1006 = vunpack.c.l.b16 %v558
        %v1007 = vunpack.c.l.b16 %v559
        %v1008 = vunpack.c.l.b16 %v560
        %v1009 = vunpack.c.l.b16 %v561
        %v1010 = vunpack.c.l.b16 %v562
        %v1011 = vunpack.c.l.b16 %v563
        %v1012 = vunpack.c.l.b16 %v564
        %v1013 = vunpack.c.l.b16 %v565
        %v1014 = vunpack.c.l.b16 %v566
        %v1015 = vpack.c.b16 %v952, %v951
        %v1016 = vpack.c.b16 %v954, %v953
        %v1017 = vpack.c.b16 %v956, %v955
        %v1018 = vpack.c.b16 %v958, %v957
        %v1019 = vpack.c.b16 %v960, %v959
        %v1020 = vpack.c.b16 %v962, %v961
        %v1021 = vpack.c.b16 %v964, %v963
        %v1022 = vpack.c.b16 %v966, %v965
        %v1023 = vpack.c.b16 %v968, %v967
        %v1024 = vpack.c.b16 %v970, %v969
        %v1025 = vpack.c.b16 %v972, %v971
        %v1026 = vpack.c.b16 %v974, %v973
        %v1027 = vpack.c.b16 %v976, %v975
        %v1028 = vpack.c.b16 %v978, %v977
        %v1029 = vpack.c.b16 %v980, %v979
        %v1030 = vpack.c.b16 %v982, %v981
        %v1031 = vpack.c.b16 %v984, %v983
        %v1032 = vpack.c.b16 %v986, %v985
        %v1033 = vpack.c.b16 %v988, %v987
        %v1034 = vpack.c.b16 %v990, %v989
        %v1035 = vpack.c.b16 %v992, %v991
        %v1036 = vpack.c.b16 %v994, %v993
        %v1037 = vpack.c.b16 %v996, %v995
        %v1038 = vpack.c.b16 %v998, %v997
        %v1039 = vpack.c.b16 %v1000, %v999
        %v1040 = vpack.c.b16 %v1002, %v1001
        %v1041 = vpack.c.b16 %v1004, %v1003
        %v1042 = vpack.c.b16 %v1006, %v1005
        %v1043 = vpack.c.b16 %v1008, %v1007
        %v1044 = vpack.c.b16 %v1010, %v1009
        %v1045 = vpack.c.b16 %v1012, %v1011
        %v1046 = vpack.c.b16 %v1014, %v1013
        %1079 = vmatprep.subr.bf16.mxu0 0
        %1080 = vmatpush1.bf16.msra.mxu0 %v1022
        %1081 = vmatprep.subr.bf16.mxu0 0
        %1082 = vmatpush1.bf16.msra.mxu0 %v1021
        %1083 = vmatprep.subr.bf16.mxu0 0
        %1084 = vmatpush1.bf16.msra.mxu0 %v1020
        %1085 = vmatprep.subr.bf16.mxu0 0
        %1086 = vmatpush1.bf16.msra.mxu0 %v1019
        %1087 = vmatprep.subr.bf16.mxu0 0
        %1088 = vmatpush1.bf16.msra.mxu0 %v1018
        %1089 = vmatprep.subr.bf16.mxu0 0
        %1090 = vmatpush1.bf16.msra.mxu0 %v1017
        %1091 = vmatprep.subr.bf16.mxu0 0
        %1092 = vmatpush1.bf16.msra.mxu0 %v1016
        %1093 = vmatprep.subr.bf16.mxu0 0
        %1094 = vmatpush1.bf16.msra.mxu0 %v1015
        %1095 = vmatprep.subr.bf16.mxu0 0
        %1096 = vmatpush2.bf16.msra.mxu0 %v1030
        %1097 = vmatprep.subr.bf16.mxu0 0
        %1098 = vmatpush2.bf16.msra.mxu0 %v1029
        %1099 = vmatprep.subr.bf16.mxu0 0
        %1100 = vmatpush2.bf16.msra.mxu0 %v1028
        %1101 = vmatprep.subr.bf16.mxu0 0
        %1102 = vmatpush2.bf16.msra.mxu0 %v1027
        %1103 = vmatprep.subr.bf16.mxu0 0
        %1104 = vmatpush2.bf16.msra.mxu0 %v1026
        %1105 = vmatprep.subr.bf16.mxu0 0
        %1106 = vmatpush2.bf16.msra.mxu0 %v1025
        %1107 = vmatprep.subr.bf16.mxu0 0
        %1108 = vmatpush2.bf16.msra.mxu0 %v1024
        %1109 = vmatprep.subr.bf16.mxu0 0
        %1110 = vmatpush2.bf16.msra.mxu0 %v1023
        %1111 = vmatprep.mubr.bf16.mxu0 %v760
        %1112 = vmatmul.mubr.bf16.gmra.mxu0 %v759
        %v1113 = vpop.f32.mrf.mxu0
        %v1114 = vadd.f32 0.0, %v1113
        %v1115 = vpop.f32.mrf.mxu0
        %v1116 = vpop.f32.mrf.mxu0
        %v1117 = vadd.f32 0.0, %v1116
        %v1118 = vpop.f32.mrf.mxu0
        %1119 = vmatprep.mubr.bf16.mxu0 %v764
        %1120 = vmatmul.mubr.bf16.gmra.mxu0 %v763
        %v1121 = vpop.f32.mrf.mxu0
        %v1122 = vadd.f32 0.0, %v1121
        %v1123 = vpop.f32.mrf.mxu0
        %v1124 = vpop.f32.mrf.mxu0
        %v1125 = vadd.f32 0.0, %v1124
        %v1126 = vpop.f32.mrf.mxu0
        %1127 = vmatprep.mubr.bf16.mxu0 %v768
        %1128 = vmatmul.mubr.bf16.gmra.mxu0 %v767
        %v1129 = vpop.f32.mrf.mxu0
        %v1130 = vadd.f32 0.0, %v1129
        %v1131 = vpop.f32.mrf.mxu0
        %v1132 = vpop.f32.mrf.mxu0
        %v1133 = vadd.f32 0.0, %v1132
        %v1134 = vpop.f32.mrf.mxu0
        %1135 = vmatprep.mubr.bf16.mxu0 %v772
        %1136 = vmatmul.mubr.bf16.gmra.mxu0 %v771
        %v1137 = vpop.f32.mrf.mxu0
        %v1138 = vadd.f32 0.0, %v1137
        %v1139 = vpop.f32.mrf.mxu0
        %v1140 = vpop.f32.mrf.mxu0
        %v1141 = vadd.f32 0.0, %v1140
        %v1142 = vpop.f32.mrf.mxu0
        %1143 = vmatprep.mubr.bf16.mxu0 %v776
        %1144 = vmatmul.mubr.bf16.gmra.mxu0 %v775
        %v1145 = vpop.f32.mrf.mxu0
        %v1146 = vadd.f32 0.0, %v1145
        %v1147 = vpop.f32.mrf.mxu0
        %v1148 = vpop.f32.mrf.mxu0
        %v1149 = vadd.f32 0.0, %v1148
        %v1150 = vpop.f32.mrf.mxu0
        %1151 = vmatprep.mubr.bf16.mxu0 %v780
        %1152 = vmatmul.mubr.bf16.gmra.mxu0 %v779
        %v1153 = vpop.f32.mrf.mxu0
        %v1154 = vadd.f32 0.0, %v1153
        %v1155 = vpop.f32.mrf.mxu0
        %v1156 = vpop.f32.mrf.mxu0
        %v1157 = vadd.f32 0.0, %v1156
        %v1158 = vpop.f32.mrf.mxu0
        %1159 = vmatprep.mubr.bf16.mxu0 %v784
        %1160 = vmatmul.mubr.bf16.gmra.mxu0 %v783
        %v1161 = vpop.f32.mrf.mxu0
        %v1162 = vadd.f32 0.0, %v1161
        %v1163 = vpop.f32.mrf.mxu0
        %v1164 = vpop.f32.mrf.mxu0
        %v1165 = vadd.f32 0.0, %v1164
        %v1166 = vpop.f32.mrf.mxu0
        %1167 = vmatprep.mubr.bf16.mxu0 %v788
        %1168 = vmatmul.mubr.bf16.gmra.mxu0 %v787
        %v1169 = vpop.f32.mrf.mxu0
        %v1170 = vadd.f32 0.0, %v1169
        %v1171 = vpop.f32.mrf.mxu0
        %v1172 = vpop.f32.mrf.mxu0
        %v1173 = vadd.f32 0.0, %v1172
        %v1174 = vpop.f32.mrf.mxu0
        %1175 = vmatprep.mubr.bf16.mxu0 %v792
        %1176 = vmatmul.mubr.bf16.gmra.mxu0 %v791
        %v1177 = vpop.f32.mrf.mxu0
        %v1178 = vadd.f32 0.0, %v1177
        %v1179 = vpop.f32.mrf.mxu0
        %v1180 = vpop.f32.mrf.mxu0
        %v1181 = vadd.f32 0.0, %v1180
        %v1182 = vpop.f32.mrf.mxu0
        %1183 = vmatprep.mubr.bf16.mxu0 %v796
        %1184 = vmatmul.mubr.bf16.gmra.mxu0 %v795
        %v1185 = vpop.f32.mrf.mxu0
        %v1186 = vadd.f32 0.0, %v1185
        %v1187 = vpop.f32.mrf.mxu0
        %v1188 = vpop.f32.mrf.mxu0
        %v1189 = vadd.f32 0.0, %v1188
        %v1190 = vpop.f32.mrf.mxu0
        %1191 = vmatprep.mubr.bf16.mxu0 %v800
        %1192 = vmatmul.mubr.bf16.gmra.mxu0 %v799
        %v1193 = vpop.f32.mrf.mxu0
        %v1194 = vadd.f32 0.0, %v1193
        %v1195 = vpop.f32.mrf.mxu0
        %v1196 = vpop.f32.mrf.mxu0
        %v1197 = vadd.f32 0.0, %v1196
        %v1198 = vpop.f32.mrf.mxu0
        %1199 = vmatprep.mubr.bf16.mxu0 %v804
        %1200 = vmatmul.mubr.bf16.gmra.mxu0 %v803
        %v1201 = vpop.f32.mrf.mxu0
        %v1202 = vadd.f32 0.0, %v1201
        %v1203 = vpop.f32.mrf.mxu0
        %v1204 = vpop.f32.mrf.mxu0
        %v1205 = vadd.f32 0.0, %v1204
        %v1206 = vpop.f32.mrf.mxu0
        %1207 = vmatprep.mubr.bf16.mxu0 %v808
        %1208 = vmatmul.mubr.bf16.gmra.mxu0 %v807
        %v1209 = vpop.f32.mrf.mxu0
        %v1210 = vadd.f32 0.0, %v1209
        %v1211 = vpop.f32.mrf.mxu0
        %v1212 = vpop.f32.mrf.mxu0
        %v1213 = vadd.f32 0.0, %v1212
        %v1214 = vpop.f32.mrf.mxu0
        %1215 = vmatprep.mubr.bf16.mxu0 %v812
        %1216 = vmatmul.mubr.bf16.gmra.mxu0 %v811
        %v1217 = vpop.f32.mrf.mxu0
        %v1218 = vadd.f32 0.0, %v1217
        %v1219 = vpop.f32.mrf.mxu0
        %v1220 = vpop.f32.mrf.mxu0
        %v1221 = vadd.f32 0.0, %v1220
        %v1222 = vpop.f32.mrf.mxu0
        %1223 = vmatprep.mubr.bf16.mxu0 %v816
        %1224 = vmatmul.mubr.bf16.gmra.mxu0 %v815
        %v1225 = vpop.f32.mrf.mxu0
        %v1226 = vadd.f32 0.0, %v1225
        %v1227 = vpop.f32.mrf.mxu0
        %v1228 = vpop.f32.mrf.mxu0
        %v1229 = vadd.f32 0.0, %v1228
        %v1230 = vpop.f32.mrf.mxu0
        %1231 = vmatprep.mubr.bf16.mxu0 %v820
        %1232 = vmatmul.mubr.bf16.gmra.mxu0 %v819
        %v1233 = vpop.f32.mrf.mxu0
        %v1234 = vadd.f32 0.0, %v1233
        %v1235 = vpop.f32.mrf.mxu0
        %v1236 = vpop.f32.mrf.mxu0
        %v1237 = vadd.f32 0.0, %v1236
        %v1238 = vpop.f32.mrf.mxu0
        %1239 = vdwg.mxu0
        %1240 = vmatprep.subr.bf16.mxu0 0
        %1241 = vmatpush1.bf16.msra.mxu0 %v1038
        %1242 = vmatprep.subr.bf16.mxu0 0
        %1243 = vmatpush1.bf16.msra.mxu0 %v1037
        %1244 = vmatprep.subr.bf16.mxu0 0
        %1245 = vmatpush1.bf16.msra.mxu0 %v1036
        %1246 = vmatprep.subr.bf16.mxu0 0
        %1247 = vmatpush1.bf16.msra.mxu0 %v1035
        %1248 = vmatprep.subr.bf16.mxu0 0
        %1249 = vmatpush1.bf16.msra.mxu0 %v1034
        %1250 = vmatprep.subr.bf16.mxu0 0
        %1251 = vmatpush1.bf16.msra.mxu0 %v1033
        %1252 = vmatprep.subr.bf16.mxu0 0
        %1253 = vmatpush1.bf16.msra.mxu0 %v1032
        %1254 = vmatprep.subr.bf16.mxu0 0
        %1255 = vmatpush1.bf16.msra.mxu0 %v1031
        %1256 = vmatprep.subr.bf16.mxu0 0
        %1257 = vmatpush2.bf16.msra.mxu0 %v1046
        %1258 = vmatprep.subr.bf16.mxu0 0
        %1259 = vmatpush2.bf16.msra.mxu0 %v1045
        %1260 = vmatprep.subr.bf16.mxu0 0
        %1261 = vmatpush2.bf16.msra.mxu0 %v1044
        %1262 = vmatprep.subr.bf16.mxu0 0
        %1263 = vmatpush2.bf16.msra.mxu0 %v1043
        %1264 = vmatprep.subr.bf16.mxu0 0
        %1265 = vmatpush2.bf16.msra.mxu0 %v1042
        %1266 = vmatprep.subr.bf16.mxu0 0
        %1267 = vmatpush2.bf16.msra.mxu0 %v1041
        %1268 = vmatprep.subr.bf16.mxu0 0
        %1269 = vmatpush2.bf16.msra.mxu0 %v1040
        %1270 = vmatprep.subr.bf16.mxu0 0
        %1271 = vmatpush2.bf16.msra.mxu0 %v1039
        %1272 = vmatprep.mubr.bf16.mxu0 %v762
        %1273 = vmatmul.mubr.bf16.gmra.mxu0 %v761
        %v1274 = vpop.f32.mrf.mxu0
        %v1275 = vadd.f32 %v1114, %v1274
        %v1276 = vpop.f32.mrf.mxu0
        %v1277 = vpop.f32.mrf.mxu0
        %v1278 = vadd.f32 %v1117, %v1277
        %v1279 = vpop.f32.mrf.mxu0
        %1280 = vmatprep.mubr.bf16.mxu0 %v766
        %1281 = vmatmul.mubr.bf16.gmra.mxu0 %v765
        %v1282 = vpop.f32.mrf.mxu0
        %v1283 = vadd.f32 %v1122, %v1282
        %v1284 = vpop.f32.mrf.mxu0
        %v1285 = vpop.f32.mrf.mxu0
        %v1286 = vadd.f32 %v1125, %v1285
        %v1287 = vpop.f32.mrf.mxu0
        %1288 = vmatprep.mubr.bf16.mxu0 %v770
        %1289 = vmatmul.mubr.bf16.gmra.mxu0 %v769
        %v1290 = vpop.f32.mrf.mxu0
        %v1291 = vadd.f32 %v1130, %v1290
        %v1292 = vpop.f32.mrf.mxu0
        %v1293 = vpop.f32.mrf.mxu0
        %v1294 = vadd.f32 %v1133, %v1293
        %v1295 = vpop.f32.mrf.mxu0
        %1296 = vmatprep.mubr.bf16.mxu0 %v774
        %1297 = vmatmul.mubr.bf16.gmra.mxu0 %v773
        %v1298 = vpop.f32.mrf.mxu0
        %v1299 = vadd.f32 %v1138, %v1298
        %v1300 = vpop.f32.mrf.mxu0
        %v1301 = vpop.f32.mrf.mxu0
        %v1302 = vadd.f32 %v1141, %v1301
        %v1303 = vpop.f32.mrf.mxu0
        %1304 = vmatprep.mubr.bf16.mxu0 %v778
        %1305 = vmatmul.mubr.bf16.gmra.mxu0 %v777
        %v1306 = vpop.f32.mrf.mxu0
        %v1307 = vadd.f32 %v1146, %v1306
        %v1308 = vpop.f32.mrf.mxu0
        %v1309 = vpop.f32.mrf.mxu0
        %v1310 = vadd.f32 %v1149, %v1309
        %v1311 = vpop.f32.mrf.mxu0
        %1312 = vmatprep.mubr.bf16.mxu0 %v782
        %1313 = vmatmul.mubr.bf16.gmra.mxu0 %v781
        %v1314 = vpop.f32.mrf.mxu0
        %v1315 = vadd.f32 %v1154, %v1314
        %v1316 = vpop.f32.mrf.mxu0
        %v1317 = vpop.f32.mrf.mxu0
        %v1318 = vadd.f32 %v1157, %v1317
        %v1319 = vpop.f32.mrf.mxu0
        %1320 = vmatprep.mubr.bf16.mxu0 %v786
        %1321 = vmatmul.mubr.bf16.gmra.mxu0 %v785
        %v1322 = vpop.f32.mrf.mxu0
        %v1323 = vadd.f32 %v1162, %v1322
        %v1324 = vpop.f32.mrf.mxu0
        %v1325 = vpop.f32.mrf.mxu0
        %v1326 = vadd.f32 %v1165, %v1325
        %v1327 = vpop.f32.mrf.mxu0
        %1328 = vmatprep.mubr.bf16.mxu0 %v790
        %1329 = vmatmul.mubr.bf16.gmra.mxu0 %v789
        %v1330 = vpop.f32.mrf.mxu0
        %v1331 = vadd.f32 %v1170, %v1330
        %v1332 = vpop.f32.mrf.mxu0
        %v1333 = vpop.f32.mrf.mxu0
        %v1334 = vadd.f32 %v1173, %v1333
        %v1335 = vpop.f32.mrf.mxu0
        %1336 = vmatprep.mubr.bf16.mxu0 %v794
        %1337 = vmatmul.mubr.bf16.gmra.mxu0 %v793
        %v1338 = vpop.f32.mrf.mxu0
        %v1339 = vadd.f32 %v1178, %v1338
        %v1340 = vpop.f32.mrf.mxu0
        %v1341 = vpop.f32.mrf.mxu0
        %v1342 = vadd.f32 %v1181, %v1341
        %v1343 = vpop.f32.mrf.mxu0
        %1344 = vmatprep.mubr.bf16.mxu0 %v798
        %1345 = vmatmul.mubr.bf16.gmra.mxu0 %v797
        %v1346 = vpop.f32.mrf.mxu0
        %v1347 = vadd.f32 %v1186, %v1346
        %v1348 = vpop.f32.mrf.mxu0
        %v1349 = vpop.f32.mrf.mxu0
        %v1350 = vadd.f32 %v1189, %v1349
        %v1351 = vpop.f32.mrf.mxu0
        %1352 = vmatprep.mubr.bf16.mxu0 %v802
        %1353 = vmatmul.mubr.bf16.gmra.mxu0 %v801
        %v1354 = vpop.f32.mrf.mxu0
        %v1355 = vadd.f32 %v1194, %v1354
        %v1356 = vpop.f32.mrf.mxu0
        %v1357 = vpop.f32.mrf.mxu0
        %v1358 = vadd.f32 %v1197, %v1357
        %v1359 = vpop.f32.mrf.mxu0
        %1360 = vmatprep.mubr.bf16.mxu0 %v806
        %1361 = vmatmul.mubr.bf16.gmra.mxu0 %v805
        %v1362 = vpop.f32.mrf.mxu0
        %v1363 = vadd.f32 %v1202, %v1362
        %v1364 = vpop.f32.mrf.mxu0
        %v1365 = vpop.f32.mrf.mxu0
        %v1366 = vadd.f32 %v1205, %v1365
        %v1367 = vpop.f32.mrf.mxu0
        %1368 = vmatprep.mubr.bf16.mxu0 %v810
        %1369 = vmatmul.mubr.bf16.gmra.mxu0 %v809
        %v1370 = vpop.f32.mrf.mxu0
        %v1371 = vadd.f32 %v1210, %v1370
        %v1372 = vpop.f32.mrf.mxu0
        %v1373 = vpop.f32.mrf.mxu0
        %v1374 = vadd.f32 %v1213, %v1373
        %v1375 = vpop.f32.mrf.mxu0
        %1376 = vmatprep.mubr.bf16.mxu0 %v814
        %1377 = vmatmul.mubr.bf16.gmra.mxu0 %v813
        %v1378 = vpop.f32.mrf.mxu0
        %v1379 = vadd.f32 %v1218, %v1378
        %v1380 = vpop.f32.mrf.mxu0
        %v1381 = vpop.f32.mrf.mxu0
        %v1382 = vadd.f32 %v1221, %v1381
        %v1383 = vpop.f32.mrf.mxu0
        %1384 = vmatprep.mubr.bf16.mxu0 %v818
        %1385 = vmatmul.mubr.bf16.gmra.mxu0 %v817
        %v1386 = vpop.f32.mrf.mxu0
        %v1387 = vadd.f32 %v1226, %v1386
        %v1388 = vpop.f32.mrf.mxu0
        %v1389 = vpop.f32.mrf.mxu0
        %v1390 = vadd.f32 %v1229, %v1389
        %v1391 = vpop.f32.mrf.mxu0
        %1392 = vmatprep.mubr.bf16.mxu0 %v822
        %1393 = vmatmul.mubr.bf16.gmra.mxu0 %v821
        %v1394 = vpop.f32.mrf.mxu0
        %v1395 = vadd.f32 %v1234, %v1394
        %v1396 = vpop.f32.mrf.mxu0
        %v1397 = vpop.f32.mrf.mxu0
        %v1398 = vadd.f32 %v1237, %v1397
        %v1399 = vpop.f32.mrf.mxu0
        %1400 = vdwg.mxu0
        %v1401 = vadd.f32 %v407, %v1275
        %v1402 = vadd.f32 %v408, %v1278
        %v1403 = vadd.f32 %v409, %v1283
        %v1404 = vadd.f32 %v410, %v1286
        %v1405 = vadd.f32 %v411, %v1291
        %v1406 = vadd.f32 %v412, %v1294
        %v1407 = vadd.f32 %v413, %v1299
        %v1408 = vadd.f32 %v414, %v1302
        %v1409 = vadd.f32 %v415, %v1307
        %v1410 = vadd.f32 %v416, %v1310
        %v1411 = vadd.f32 %v417, %v1315
        %v1412 = vadd.f32 %v418, %v1318
        %v1413 = vadd.f32 %v419, %v1323
        %v1414 = vadd.f32 %v420, %v1326
        %v1415 = vadd.f32 %v421, %v1331
        %v1416 = vadd.f32 %v422, %v1334
        %v1417 = vadd.f32 %v423, %v1339
        %v1418 = vadd.f32 %v424, %v1342
        %v1419 = vadd.f32 %v425, %v1347
        %v1420 = vadd.f32 %v426, %v1350
        %v1421 = vadd.f32 %v427, %v1355
        %v1422 = vadd.f32 %v428, %v1358
        %v1423 = vadd.f32 %v429, %v1363
        %v1424 = vadd.f32 %v430, %v1366
        %v1425 = vadd.f32 %v431, %v1371
        %v1426 = vadd.f32 %v432, %v1374
        %v1427 = vadd.f32 %v433, %v1379
        %v1428 = vadd.f32 %v434, %v1382
        %v1429 = vadd.f32 %v435, %v1387
        %v1430 = vadd.f32 %v436, %v1390
        %v1431 = vadd.f32 %v437, %v1395
        %v1432 = vadd.f32 %v438, %v1398
        %1433 = vst [vmem:[#allocation2] sm:$0xff] %v1401
        %1434 = vst [vmem:[#allocation2 + $0x8] sm:$0xff] %v1402
        %1435 = vst [vmem:[#allocation2 + $0x10] sm:$0xff] %v1403
        %1436 = vst [vmem:[#allocation2 + $0x18] sm:$0xff] %v1404
        %1437 = vst [vmem:[#allocation2 + $0x20] sm:$0xff] %v1405
        %1438 = vst [vmem:[#allocation2 + $0x28] sm:$0xff] %v1406
        %1439 = vst [vmem:[#allocation2 + $0x30] sm:$0xff] %v1407
        %1440 = vst [vmem:[#allocation2 + $0x38] sm:$0xff] %v1408
        %1441 = vst [vmem:[#allocation2 + $0x40] sm:$0xff] %v1409
        %1442 = vst [vmem:[#allocation2 + $0x48] sm:$0xff] %v1410
        %1443 = vst [vmem:[#allocation2 + $0x50] sm:$0xff] %v1411
        %1444 = vst [vmem:[#allocation2 + $0x58] sm:$0xff] %v1412
        %1445 = vst [vmem:[#allocation2 + $0x60] sm:$0xff] %v1413
        %1446 = vst [vmem:[#allocation2 + $0x68] sm:$0xff] %v1414
        %1447 = vst [vmem:[#allocation2 + $0x70] sm:$0xff] %v1415
        %1448 = vst [vmem:[#allocation2 + $0x78] sm:$0xff] %v1416
        %1449 = vst [vmem:[#allocation2 + $0x80] sm:$0xff] %v1417
        %1450 = vst [vmem:[#allocation2 + $0x88] sm:$0xff] %v1418
        %1451 = vst [vmem:[#allocation2 + $0x90] sm:$0xff] %v1419
        %1452 = vst [vmem:[#allocation2 + $0x98] sm:$0xff] %v1420
        %1453 = vst [vmem:[#allocation2 + $0xa0] sm:$0xff] %v1421
        %1454 = vst [vmem:[#allocation2 + $0xa8] sm:$0xff] %v1422
        %1455 = vst [vmem:[#allocation2 + $0xb0] sm:$0xff] %v1423
        %1456 = vst [vmem:[#allocation2 + $0xb8] sm:$0xff] %v1424
        %1457 = vst [vmem:[#allocation2 + $0xc0] sm:$0xff] %v1425
        %1458 = vst [vmem:[#allocation2 + $0xc8] sm:$0xff] %v1426
        %1459 = vst [vmem:[#allocation2 + $0xd0] sm:$0xff] %v1427
        %1460 = vst [vmem:[#allocation2 + $0xd8] sm:$0xff] %v1428
        %1461 = vst [vmem:[#allocation2 + $0xe0] sm:$0xff] %v1429
        %1462 = vst [vmem:[#allocation2 + $0xe8] sm:$0xff] %v1430
        %1463 = vst [vmem:[#allocation2 + $0xf0] sm:$0xff] %v1431
        %1464 = vst [vmem:[#allocation2 + $0xf8] sm:$0xff] %v1432
        %p1465 = scmp.eq.s32.totalorder %s20, 6
        // Predicated region
        $region56: #{conv3d_1_forward.6} parent=46 // pred_check
          %p1466 = pneg %p1465
        $region57: #{conv3d_1_forward.6} parent=46 // pred_check_branch
          %1468 = sbr.rel (%p1466) target = $region59
        $region58: #{conv3d_1_forward.6} parent=46 // pred_region
          %v1469 = vld [vmem:[#allocation2] sm:$0xff]
          %v1470 = vld [vmem:[#allocation2 + $0x8] sm:$0xff]
          %v1471 = vld [vmem:[#allocation2 + $0x10] sm:$0xff]
          %v1472 = vld [vmem:[#allocation2 + $0x18] sm:$0xff]
          %v1473 = vld [vmem:[#allocation2 + $0x20] sm:$0xff]
          %v1474 = vld [vmem:[#allocation2 + $0x28] sm:$0xff]
          %v1475 = vld [vmem:[#allocation2 + $0x30] sm:$0xff]
          %v1476 = vld [vmem:[#allocation2 + $0x38] sm:$0xff]
          %v1477 = vld [vmem:[#allocation2 + $0x40] sm:$0xff]
          %v1478 = vld [vmem:[#allocation2 + $0x48] sm:$0xff]
          %v1479 = vld [vmem:[#allocation2 + $0x50] sm:$0xff]
          %v1480 = vld [vmem:[#allocation2 + $0x58] sm:$0xff]
          %v1481 = vld [vmem:[#allocation2 + $0x60] sm:$0xff]
          %v1482 = vld [vmem:[#allocation2 + $0x68] sm:$0xff]
          %v1483 = vld [vmem:[#allocation2 + $0x70] sm:$0xff]
          %v1484 = vld [vmem:[#allocation2 + $0x78] sm:$0xff]
          %v1485 = vld [vmem:[#allocation2 + $0x80] sm:$0xff]
          %v1486 = vld [vmem:[#allocation2 + $0x88] sm:$0xff]
          %v1487 = vld [vmem:[#allocation2 + $0x90] sm:$0xff]
          %v1488 = vld [vmem:[#allocation2 + $0x98] sm:$0xff]
          %v1489 = vld [vmem:[#allocation2 + $0xa0] sm:$0xff]
          %v1490 = vld [vmem:[#allocation2 + $0xa8] sm:$0xff]
          %v1491 = vld [vmem:[#allocation2 + $0xb0] sm:$0xff]
          %v1492 = vld [vmem:[#allocation2 + $0xb8] sm:$0xff]
          %v1493 = vld [vmem:[#allocation2 + $0xc0] sm:$0xff]
          %v1494 = vld [vmem:[#allocation2 + $0xc8] sm:$0xff]
          %v1495 = vld [vmem:[#allocation2 + $0xd0] sm:$0xff]
          %v1496 = vld [vmem:[#allocation2 + $0xd8] sm:$0xff]
          %v1497 = vld [vmem:[#allocation2 + $0xe0] sm:$0xff]
          %v1498 = vld [vmem:[#allocation2 + $0xe8] sm:$0xff]
          %v1499 = vld [vmem:[#allocation2 + $0xf0] sm:$0xff]
          %v1500 = vld [vmem:[#allocation2 + $0xf8] sm:$0xff]
          %1501 = vst [vmem:[%s364] sm:$0xff] %v1469
          %1502 = vst [vmem:[%s364 + $0x8] sm:$0xff] %v1470
          %1503 = vst [vmem:[%s364 + $0x10] sm:$0xff] %v1471
          %1504 = vst [vmem:[%s364 + $0x18] sm:$0xff] %v1472
          %1505 = vst [vmem:[%s364 + $0x20] sm:$0xff] %v1473
          %1506 = vst [vmem:[%s364 + $0x28] sm:$0xff] %v1474
          %1507 = vst [vmem:[%s364 + $0x30] sm:$0xff] %v1475
          %1508 = vst [vmem:[%s364 + $0x38] sm:$0xff] %v1476
          %1509 = vst [vmem:[%s364 + $0x40] sm:$0xff] %v1477
          %1510 = vst [vmem:[%s364 + $0x48] sm:$0xff] %v1478
          %1511 = vst [vmem:[%s364 + $0x50] sm:$0xff] %v1479
          %1512 = vst [vmem:[%s364 + $0x58] sm:$0xff] %v1480
          %1513 = vst [vmem:[%s364 + $0x60] sm:$0xff] %v1481
          %1514 = vst [vmem:[%s364 + $0x68] sm:$0xff] %v1482
          %1515 = vst [vmem:[%s364 + $0x70] sm:$0xff] %v1483
          %1516 = vst [vmem:[%s364 + $0x78] sm:$0xff] %v1484
          %1517 = vst [vmem:[%s364 + $0x80] sm:$0xff] %v1485
          %1518 = vst [vmem:[%s364 + $0x88] sm:$0xff] %v1486
          %1519 = vst [vmem:[%s364 + $0x90] sm:$0xff] %v1487
          %1520 = vst [vmem:[%s364 + $0x98] sm:$0xff] %v1488
          %1521 = vst [vmem:[%s364 + $0xa0] sm:$0xff] %v1489
          %1522 = vst [vmem:[%s364 + $0xa8] sm:$0xff] %v1490
          %1523 = vst [vmem:[%s364 + $0xb0] sm:$0xff] %v1491
          %1524 = vst [vmem:[%s364 + $0xb8] sm:$0xff] %v1492
          %1525 = vst [vmem:[%s364 + $0xc0] sm:$0xff] %v1493
          %1526 = vst [vmem:[%s364 + $0xc8] sm:$0xff] %v1494
          %1527 = vst [vmem:[%s364 + $0xd0] sm:$0xff] %v1495
          %1528 = vst [vmem:[%s364 + $0xd8] sm:$0xff] %v1496
          %1529 = vst [vmem:[%s364 + $0xe0] sm:$0xff] %v1497
          %1530 = vst [vmem:[%s364 + $0xe8] sm:$0xff] %v1498
          %1531 = vst [vmem:[%s364 + $0xf0] sm:$0xff] %v1499
          %1532 = vst [vmem:[%s364 + $0xf8] sm:$0xff] %v1500
          %v1533 = vadd.f32 %v1469, %v1470
          %v1534 = vadd.f32 %v1533, %v1471
          %v1535 = vadd.f32 %v1534, %v1472
          %v1536 = vadd.f32 %v1535, %v1473
          %v1537 = vadd.f32 %v1536, %v1474
          %v1538 = vadd.f32 %v1537, %v1475
          %v1539 = vadd.f32 %v1538, %v1476
          %v1540 = vadd.f32 %v1539, %v1477
          %v1541 = vadd.f32 %v1540, %v1478
          %v1542 = vadd.f32 %v1541, %v1479
          %v1543 = vadd.f32 %v1542, %v1480
          %v1544 = vadd.f32 %v1543, %v1481
          %v1545 = vadd.f32 %v1544, %v1482
          %v1546 = vadd.f32 %v1545, %v1483
          %v1547 = vadd.f32 %v1546, %v1484
          %v1548 = vadd.f32 %v1547, %v1485
          %v1549 = vadd.f32 %v1548, %v1486
          %v1550 = vadd.f32 %v1549, %v1487
          %v1551 = vadd.f32 %v1550, %v1488
          %v1552 = vadd.f32 %v1551, %v1489
          %v1553 = vadd.f32 %v1552, %v1490
          %v1554 = vadd.f32 %v1553, %v1491
          %v1555 = vadd.f32 %v1554, %v1492
          %v1556 = vadd.f32 %v1555, %v1493
          %v1557 = vadd.f32 %v1556, %v1494
          %v1558 = vadd.f32 %v1557, %v1495
          %v1559 = vadd.f32 %v1558, %v1496
          %v1560 = vadd.f32 %v1559, %v1497
          %v1561 = vadd.f32 %v1560, %v1498
          %v1562 = vadd.f32 %v1561, %v1499
          %v1563 = vadd.f32 %v1562, %v1500
          %v1564 = vrot.slane %v1563, 4
          %v1565 = vadd.f32 %v1563, %v1564
          %v1566 = vrot.slane %v1565, 2
          %v1567 = vadd.f32 %v1565, %v1566
          %v1568 = vrot.slane %v1567, 1
          %v1569 = vadd.f32 %v1567, %v1568
          %v1570 = vmul.f32 %v1469, %v1469
          %v1571 = vmul.f32 %v1470, %v1470
          %v1572 = vmul.f32 %v1471, %v1471
          %v1573 = vmul.f32 %v1472, %v1472
          %v1574 = vmul.f32 %v1473, %v1473
          %v1575 = vmul.f32 %v1474, %v1474
          %v1576 = vmul.f32 %v1475, %v1475
          %v1577 = vmul.f32 %v1476, %v1476
          %v1578 = vmul.f32 %v1477, %v1477
          %v1579 = vmul.f32 %v1478, %v1478
          %v1580 = vmul.f32 %v1479, %v1479
          %v1581 = vmul.f32 %v1480, %v1480
          %v1582 = vmul.f32 %v1481, %v1481
          %v1583 = vmul.f32 %v1482, %v1482
          %v1584 = vmul.f32 %v1483, %v1483
          %v1585 = vmul.f32 %v1484, %v1484
          %v1586 = vmul.f32 %v1485, %v1485
          %v1587 = vmul.f32 %v1486, %v1486
          %v1588 = vmul.f32 %v1487, %v1487
          %v1589 = vmul.f32 %v1488, %v1488
          %v1590 = vmul.f32 %v1489, %v1489
          %v1591 = vmul.f32 %v1490, %v1490
          %v1592 = vmul.f32 %v1491, %v1491
          %v1593 = vmul.f32 %v1492, %v1492
          %v1594 = vmul.f32 %v1493, %v1493
          %v1595 = vmul.f32 %v1494, %v1494
          %v1596 = vmul.f32 %v1495, %v1495
          %v1597 = vmul.f32 %v1496, %v1496
          %v1598 = vmul.f32 %v1497, %v1497
          %v1599 = vmul.f32 %v1498, %v1498
          %v1600 = vmul.f32 %v1499, %v1499
          %v1601 = vmul.f32 %v1500, %v1500
          %v1602 = vadd.f32 %v1570, %v1571
          %v1603 = vadd.f32 %v1602, %v1572
          %v1604 = vadd.f32 %v1603, %v1573
          %v1605 = vadd.f32 %v1604, %v1574
          %v1606 = vadd.f32 %v1605, %v1575
          %v1607 = vadd.f32 %v1606, %v1576
          %v1608 = vadd.f32 %v1607, %v1577
          %v1609 = vadd.f32 %v1608, %v1578
          %v1610 = vadd.f32 %v1609, %v1579
          %v1611 = vadd.f32 %v1610, %v1580
          %v1612 = vadd.f32 %v1611, %v1581
          %v1613 = vadd.f32 %v1612, %v1582
          %v1614 = vadd.f32 %v1613, %v1583
          %v1615 = vadd.f32 %v1614, %v1584
          %v1616 = vadd.f32 %v1615, %v1585
          %v1617 = vadd.f32 %v1616, %v1586
          %v1618 = vadd.f32 %v1617, %v1587
          %v1619 = vadd.f32 %v1618, %v1588
          %v1620 = vadd.f32 %v1619, %v1589
          %v1621 = vadd.f32 %v1620, %v1590
          %v1622 = vadd.f32 %v1621, %v1591
          %v1623 = vadd.f32 %v1622, %v1592
          %v1624 = vadd.f32 %v1623, %v1593
          %v1625 = vadd.f32 %v1624, %v1594
          %v1626 = vadd.f32 %v1625, %v1595
          %v1627 = vadd.f32 %v1626, %v1596
          %v1628 = vadd.f32 %v1627, %v1597
          %v1629 = vadd.f32 %v1628, %v1598
          %v1630 = vadd.f32 %v1629, %v1599
          %v1631 = vadd.f32 %v1630, %v1600
          %v1632 = vadd.f32 %v1631, %v1601
          %v1633 = vrot.slane %v1632, 4
          %v1634 = vadd.f32 %v1632, %v1633
          %v1635 = vrot.slane %v1634, 2
          %v1636 = vadd.f32 %v1634, %v1635
          %v1637 = vrot.slane %v1636, 1
          %v1638 = vadd.f32 %v1636, %v1637
          %vm1639 = vcmask 1040384
          %v1640 = vsel %vm1639, %v1569, %v1638
          %1641 = vst [vmem:[%s369] sm:$0x3] %v1640
        $region59: #{conv3d_1_forward.6} parent=46 // pred_fallthru
          _
        %s1642 = smul.u32 32, %s19
        %p1643 = scmp.lt.s32.totalorder %s1642, 127
        %s1644 = scalar_select %p1643, %s1642, 127
        %s1645 = smul.addr %s1644, 8
        %s1646 = scalar_lea.vmem %s2, %s1645
        %p1647 = scmp.lt.s32.totalorder %s19, 3
        %s1648 = scalar_select %p1647, %s19, 3
        %s1649 = smul.addr %s1648, 2
        %s1650 = scalar_lea.vmem %s3, %s1649
        // Predicated region
        $region60: #{conv3d_1_forward.6} parent=46 // pred_check
          %p1651 = pneg %p99
        $region61: #{conv3d_1_forward.6} parent=46 // pred_check_branch
          %1653 = sbr.rel (%p1651) target = $region63
        $region62: #{conv3d_1_forward.6} parent=46 // pred_region
          %s1654 = smul.u32 32, %s19
        $region63: #{conv3d_1_forward.6} parent=46 // pred_fallthru
          _
        // Predicated region
        $region64: #{conv3d_1_forward.6} parent=46 // pred_check
          %p1655 = pneg %p125
        $region65: #{conv3d_1_forward.6} parent=46 // pred_check_branch
          %1657 = sbr.rel (%p1655) target = $region67
        $region66: #{conv3d_1_forward.6} parent=46 // pred_region
          _
        $region67: #{conv3d_1_forward.6} parent=46 // pred_fallthru
          _
      $region47: #{conv3d_1_forward.6} parent=5 // pred_fallthru
        _
      %p1658 = scmp.le.s32.totalorder 2, %s10
      // Predicated region
      $region68: #{conv3d_1_forward.6} parent=5 // pred_check
        %p1659 = pneg %p1658
      $region69: #{conv3d_1_forward.6} parent=5 // pred_check_branch
        %1661 = sbr.rel (%p1659) target = $region71
      $region70: #{conv3d_1_forward.6} parent=5 // pred_region
        %s1662 = ssub.s32 %s10, 2
        // Predicated region
        $region72: #{conv3d_1_forward.6} parent=70 // pred_check
          %p1663 = pneg %p105
        $region73: #{conv3d_1_forward.6} parent=70 // pred_check_branch
          %1665 = sbr.rel (%p1663) target = $region75
        $region74: #{conv3d_1_forward.6} parent=70 // pred_region
          %s1666 = smul.u32 32, %s21
          %p1667 = scmp.lt.s32.totalorder %s1666, 127
          %s1668 = scalar_select %p1667, %s1666, 127
          %s1669 = smul.addr %s1668, 8
          %s1670 = scalar_lea.vmem %s2, %s1669
        $region75: #{conv3d_1_forward.6} parent=70 // pred_fallthru
          _
        // Predicated region
        $region76: #{conv3d_1_forward.6} parent=70 // pred_check
          %p1671 = pneg %p131
        $region77: #{conv3d_1_forward.6} parent=70 // pred_check_branch
          %1673 = sbr.rel (%p1671) target = $region79
        $region78: #{conv3d_1_forward.6} parent=70 // pred_region
          %p1674 = scmp.lt.s32.totalorder %s21, 3
          %s1675 = scalar_select %p1674, %s21, 3
          %s1676 = smul.addr %s1675, 2
          %s1677 = scalar_lea.vmem %s3, %s1676
        $region79: #{conv3d_1_forward.6} parent=70 // pred_fallthru
          _
      $region71: #{conv3d_1_forward.6} parent=5 // pred_fallthru
        _
    $region6: #{conv3d_1_forward.6} parent=1 // loop_footer
      %s14 = sadd.s32 1, %s10
    $region7: #{conv3d_1_forward.6} parent=1 // loop_footer_branch
      %9 = sbr.rel target = $region3
    $region8: #{conv3d_1_forward.6} parent=1 // loop_exit
      _

// kernel: conv3d_1_forward.7
$region0: #{conv3d_1_forward.7}
  #allocation0 [shape = 'u32[]', space=smem, size = 0x4, offset = 0x4, fixed_abs, tag = 'smem constant byte address 0x4 - core index']
  #allocation1 [shape = 'u32[144,128]{1,0:T(1,128)}', space=vmem, size = 0x12000, scoped, tag = 'internal scratch']
  %s0 = inlined_call_operand.vmem [shape: f32[1024,128], index: 0, kind: input, shape index: {}]
  %s1 = inlined_call_operand.vmem [shape: f32[1,128], index: 1, kind: input, shape index: {}]
  %s2 = inlined_call_operand.vmem [shape: f32[1,128], index: 2, kind: input, shape index: {}]
  %s3 = inlined_call_operand.hbm [shape: f32[1024,128], index: 3, kind: output, shape index: {}]
  %s4 = sld [smem:[#allocation0]]
  $region45: #{conv3d_1_forward.7} parent=0
    _
  %s6 = ssub.s32 1, %s4
  %s7 = scalar_select 0, %s6, %s4
  $region1: #{conv3d_1_forward.7} parent=0
    #allocation2 [shape = 'u8[262144]{0}', space=vmem, size = 0x40000, scoped, tag = 'output window, operand 0']
    #allocation3 [shape = 's32[2]{0}', space=sflag, size = 0x8, scoped, tag = 'scoped memory for conv3d_1_forward.7']
    %8 = vsyncpa [#allocation3], 0
    %s9 = scalar_lea.sflag [#allocation3], 1
    %10 = vsyncpa %s9, 0
    loop: start=0, step=1, limit=6
    $region2: #{conv3d_1_forward.7} parent=1 // loop_pre_header
      _
    $region3: #{conv3d_1_forward.7} parent=1 // loop_header
      %s12 = sphi 0, %s16
      %p13 = scmp.ge.s32.totalorder %s12, 6
      %s22 = sphi 0, %s24
      %s25 = sphi 0, %s22
      %s26 = sphi 0, %s25
      %s42 = sphi 0, %s26
      %s46 = sphi 0, %s46
      %s48 = sphi 0, %s46
      %s49 = sphi 0, %s48
      %s63 = sphi 0, %s49
      %s67 = sphi 0, %s67
      %s69 = sphi 0, %s67
      %s70 = sphi 0, %s69
      %s84 = sphi 0, %s70
      %s90 = sphi 0, %s92
      %s93 = sphi 0, %s90
      %s94 = sphi 0, %s93
      %s110 = sphi 0, %s94
    $region4: #{conv3d_1_forward.7} parent=1 // loop_header_branch
      %15 = sbr.rel (%p13) target = $region8
    $region5: #{conv3d_1_forward.7} parent=1 // loop_body
      %s17 = ssub.s32 %s12, 1
      %s18 = ssub.s32 %s12, 2
      %s19 = sadd.s32 %s12, 1
      %s20 = ssub.s32 %s12, %s19
      %p21 = scmp.eq.s32.totalorder %s20, 0
      %s23 = sadd.s32 %s22, 1
      %s24 = scalar_select %p21, %s22, %s23
      %p27 = pneg %p21
      %p28 = scmp.eq.s32.totalorder %s12, 3
      %p29 = por %p27, %p28
      %p30 = scmp.ne.s32.totalorder %s22, %s25
      %p31 = scmp.eq.s32.totalorder %s12, 0
      %p32 = por %p30, %p31
      %p33 = scmp.ne.s32.totalorder %s22, %s25
      %p34 = scmp.eq.s32.totalorder %s17, 3
      %p35 = por %p33, %p34
      %p36 = scmp.ne.s32.totalorder %s25, %s26
      %p37 = scmp.eq.s32.totalorder %s17, 0
      %p38 = por %p36, %p37
      %p39 = scmp.ne.s32.totalorder %s25, %s26
      %p40 = scmp.eq.s32.totalorder %s18, 3
      %p41 = por %p39, %p40
      %p43 = scmp.ne.s32.totalorder %s26, %s42
      %p44 = scmp.eq.s32.totalorder %s18, 0
      %p45 = por %p43, %p44
      %s47 = sadd.s32 %s46, 1
      %p50 = scmp.eq.s32.totalorder %s12, 3
      %p51 = scmp.ne.s32.totalorder %s46, %s48
      %p52 = scmp.eq.s32.totalorder %s12, 0
      %p53 = por %p51, %p52
      %p54 = scmp.ne.s32.totalorder %s46, %s48
      %p55 = scmp.eq.s32.totalorder %s17, 3
      %p56 = por %p54, %p55
      %p57 = scmp.ne.s32.totalorder %s48, %s49
      %p58 = scmp.eq.s32.totalorder %s17, 0
      %p59 = por %p57, %p58
      %p60 = scmp.ne.s32.totalorder %s48, %s49
      %p61 = scmp.eq.s32.totalorder %s18, 3
      %p62 = por %p60, %p61
      %p64 = scmp.ne.s32.totalorder %s49, %s63
      %p65 = scmp.eq.s32.totalorder %s18, 0
      %p66 = por %p64, %p65
      %s68 = sadd.s32 %s67, 1
      %p71 = scmp.eq.s32.totalorder %s12, 3
      %p72 = scmp.ne.s32.totalorder %s67, %s69
      %p73 = scmp.eq.s32.totalorder %s12, 0
      %p74 = por %p72, %p73
      %p75 = scmp.ne.s32.totalorder %s67, %s69
      %p76 = scmp.eq.s32.totalorder %s17, 3
      %p77 = por %p75, %p76
      %p78 = scmp.ne.s32.totalorder %s69, %s70
      %p79 = scmp.eq.s32.totalorder %s17, 0
      %p80 = por %p78, %p79
      %p81 = scmp.ne.s32.totalorder %s69, %s70
      %p82 = scmp.eq.s32.totalorder %s18, 3
      %p83 = por %p81, %p82
      %p85 = scmp.ne.s32.totalorder %s70, %s84
      %p86 = scmp.eq.s32.totalorder %s18, 0
      %p87 = por %p85, %p86
      %s88 = ssub.s32 %s12, %s19
      %p89 = scmp.eq.s32.totalorder %s88, 0
      %s91 = sadd.s32 %s90, 1
      %s92 = scalar_select %p89, %s90, %s91
      %p95 = pneg %p89
      %p96 = scmp.eq.s32.totalorder %s12, 3
      %p97 = por %p95, %p96
      %p98 = scmp.ne.s32.totalorder %s90, %s93
      %p99 = scmp.eq.s32.totalorder %s12, 0
      %p100 = por %p98, %p99
      %p101 = scmp.ne.s32.totalorder %s90, %s93
      %p102 = scmp.eq.s32.totalorder %s17, 3
      %p103 = por %p101, %p102
      %p104 = scmp.ne.s32.totalorder %s93, %s94
      %p105 = scmp.eq.s32.totalorder %s17, 0
      %p106 = por %p104, %p105
      %p107 = scmp.ne.s32.totalorder %s93, %s94
      %p108 = scmp.eq.s32.totalorder %s18, 3
      %p109 = por %p107, %p108
      %p111 = scmp.ne.s32.totalorder %s94, %s110
      %p112 = scmp.eq.s32.totalorder %s18, 0
      %p113 = por %p111, %p112
      %p114 = scmp.le.s32.totalorder 1, %s12
      %p115 = scmp.lt.s32.totalorder %s12, 5
      %p116 = pnand %p114, %p115
      %p117 = pneg %p116
      // Predicated region
      $region9: #{conv3d_1_forward.7} parent=5 // pred_check
        _
      $region10: #{conv3d_1_forward.7} parent=5 // pred_check_branch
        %119 = sbr.rel (%p116) target = $region12
      $region11: #{conv3d_1_forward.7} parent=5 // pred_region
        %s120 = ssub.s32 %s12, 1
        // Predicated region
        $region13: #{conv3d_1_forward.7} parent=11 // pred_check
          %p121 = pneg %p59
        $region14: #{conv3d_1_forward.7} parent=11 // pred_check_branch
          %123 = sbr.rel (%p121) target = $region16
        $region15: #{conv3d_1_forward.7} parent=11 // pred_region
          _
        $region16: #{conv3d_1_forward.7} parent=11 // pred_fallthru
          _
        // Predicated region
        $region17: #{conv3d_1_forward.7} parent=11 // pred_check
          %p124 = pneg %p80
        $region18: #{conv3d_1_forward.7} parent=11 // pred_check_branch
          %126 = sbr.rel (%p124) target = $region20
        $region19: #{conv3d_1_forward.7} parent=11 // pred_region
          _
        $region20: #{conv3d_1_forward.7} parent=11 // pred_fallthru
          _
      $region12: #{conv3d_1_forward.7} parent=5 // pred_fallthru
        _
      %p127 = scmp.lt.s32.totalorder %s12, 4
      // Predicated region
      $region21: #{conv3d_1_forward.7} parent=5 // pred_check
        %p128 = pneg %p127
      $region22: #{conv3d_1_forward.7} parent=5 // pred_check_branch
        %130 = sbr.rel (%p128) target = $region24
      $region23: #{conv3d_1_forward.7} parent=5 // pred_region
        // Predicated region
        $region25: #{conv3d_1_forward.7} parent=23 // pred_check
          %p131 = pneg %p32
        $region26: #{conv3d_1_forward.7} parent=23 // pred_check_branch
          %133 = sbr.rel (%p131) target = $region28
        $region27: #{conv3d_1_forward.7} parent=23 // pred_region
          %s134 = smul.u32 32, %s12
          %p135 = scmp.lt.s32.totalorder %s134, 127
          %s136 = scalar_select %p135, %s134, 127
          %s137 = smul.addr %s136, 8
          %s138 = scalar_lea.vmem %s0, %s137
          %s139 = smul.u32 32, %s12
        $region28: #{conv3d_1_forward.7} parent=23 // pred_fallthru
          _
      $region24: #{conv3d_1_forward.7} parent=5 // pred_fallthru
        _
      %p140 = scmp.le.s32.totalorder 1, %s12
      %p141 = scmp.lt.s32.totalorder %s12, 5
      %p142 = pnand %p140, %p141
      %p143 = pneg %p142
      // Predicated region
      $region29: #{conv3d_1_forward.7} parent=5 // pred_check
        _
      $region30: #{conv3d_1_forward.7} parent=5 // pred_check_branch
        %145 = sbr.rel (%p142) target = $region32
      $region31: #{conv3d_1_forward.7} parent=5 // pred_region
        %s146 = ssub.s32 %s12, 1
        %s147 = smul.u32 32, %s17
        %p148 = scmp.lt.s32.totalorder %s147, 127
        %s149 = scalar_select %p148, %s147, 127
        %s150 = smul.addr %s149, 8
        %s151 = scalar_lea.vmem %s0, %s150
        %p152 = pneg %p38
        %p153 = pneg %p35
        %p154 = pneg %p59
        %p155 = pneg %p56
        %p156 = pneg %p80
        %p157 = pneg %p77
        %p158 = pneg %p106
        %p159 = pneg %p103
        %s160 = sand.u32 %s93, 1
        %s161 = scalar_lea.sflag [#allocation3], %s160
        %s162 = sand.u32 %s93, 1
        %s163 = smul.addr %s162, 256
        %s164 = scalar_lea.vmem [#allocation2], %s163
        %s165 = smul.u32 32, %s17
        %p166 = scmp.lt.s32.totalorder %s165, 127
        %s167 = scalar_select %p166, %s165, 127
        %s168 = smul.addr %s167, 8
        %s169 = scalar_lea.vmem %s0, %s168
        %s170 = smul.u32 32, %s17
        %s171 = smul.u32 32, %s17
        %v172 = vld [vmem:[%s169] sm:$0xff]
        %v173 = vld [vmem:[%s169 + $0x8] sm:$0xff]
        %v174 = vld [vmem:[%s169 + $0x10] sm:$0xff]
        %v175 = vld [vmem:[%s169 + $0x18] sm:$0xff]
        %v176 = vld [vmem:[%s169 + $0x20] sm:$0xff]
        %v177 = vld [vmem:[%s169 + $0x28] sm:$0xff]
        %v178 = vld [vmem:[%s169 + $0x30] sm:$0xff]
        %v179 = vld [vmem:[%s169 + $0x38] sm:$0xff]
        %v180 = vld [vmem:[%s169 + $0x40] sm:$0xff]
        %v181 = vld [vmem:[%s169 + $0x48] sm:$0xff]
        %v182 = vld [vmem:[%s169 + $0x50] sm:$0xff]
        %v183 = vld [vmem:[%s169 + $0x58] sm:$0xff]
        %v184 = vld [vmem:[%s169 + $0x60] sm:$0xff]
        %v185 = vld [vmem:[%s169 + $0x68] sm:$0xff]
        %v186 = vld [vmem:[%s169 + $0x70] sm:$0xff]
        %v187 = vld [vmem:[%s169 + $0x78] sm:$0xff]
        %v188 = vld [vmem:[%s169 + $0x80] sm:$0xff]
        %v189 = vld [vmem:[%s169 + $0x88] sm:$0xff]
        %v190 = vld [vmem:[%s169 + $0x90] sm:$0xff]
        %v191 = vld [vmem:[%s169 + $0x98] sm:$0xff]
        %v192 = vld [vmem:[%s169 + $0xa0] sm:$0xff]
        %v193 = vld [vmem:[%s169 + $0xa8] sm:$0xff]
        %v194 = vld [vmem:[%s169 + $0xb0] sm:$0xff]
        %v195 = vld [vmem:[%s169 + $0xb8] sm:$0xff]
        %v196 = vld [vmem:[%s169 + $0xc0] sm:$0xff]
        %v197 = vld [vmem:[%s169 + $0xc8] sm:$0xff]
        %v198 = vld [vmem:[%s169 + $0xd0] sm:$0xff]
        %v199 = vld [vmem:[%s169 + $0xd8] sm:$0xff]
        %v200 = vld [vmem:[%s169 + $0xe0] sm:$0xff]
        %v201 = vld [vmem:[%s169 + $0xe8] sm:$0xff]
        %v202 = vld [vmem:[%s169 + $0xf0] sm:$0xff]
        %v203 = vld [vmem:[%s169 + $0xf8] sm:$0xff]
        %v204 = vld [vmem:[%s1] sm:$0x1]
        %v206 = vlaneseq
        %v207 = vshrl.u32 %v206, 7
        %v208 = vsub.s32 0, %v207
        %v209 = vrot.slane %v204, %v208
        %v211 = vmul.f32 %v172, %v209
        %v212 = vmul.f32 %v173, %v209
        %v213 = vmul.f32 %v174, %v209
        %v214 = vmul.f32 %v175, %v209
        %v215 = vmul.f32 %v176, %v209
        %v216 = vmul.f32 %v177, %v209
        %v217 = vmul.f32 %v178, %v209
        %v218 = vmul.f32 %v179, %v209
        %v219 = vmul.f32 %v180, %v209
        %v220 = vmul.f32 %v181, %v209
        %v221 = vmul.f32 %v182, %v209
        %v222 = vmul.f32 %v183, %v209
        %v223 = vmul.f32 %v184, %v209
        %v224 = vmul.f32 %v185, %v209
        %v225 = vmul.f32 %v186, %v209
        %v226 = vmul.f32 %v187, %v209
        %v227 = vmul.f32 %v188, %v209
        %v228 = vmul.f32 %v189, %v209
        %v229 = vmul.f32 %v190, %v209
        %v230 = vmul.f32 %v191, %v209
        %v231 = vmul.f32 %v192, %v209
        %v232 = vmul.f32 %v193, %v209
        %v233 = vmul.f32 %v194, %v209
        %v234 = vmul.f32 %v195, %v209
        %v235 = vmul.f32 %v196, %v209
        %v236 = vmul.f32 %v197, %v209
        %v237 = vmul.f32 %v198, %v209
        %v238 = vmul.f32 %v199, %v209
        %v239 = vmul.f32 %v200, %v209
        %v240 = vmul.f32 %v201, %v209
        %v241 = vmul.f32 %v202, %v209
        %v242 = vmul.f32 %v203, %v209
        %v243 = vld [vmem:[%s2] sm:$0x1]
        %v245 = vlaneseq
        %v246 = vshrl.u32 %v245, 7
        %v247 = vsub.s32 0, %v246
        %v248 = vrot.slane %v243, %v247
        %v250 = vadd.f32 %v211, %v248
        %v251 = vadd.f32 %v212, %v248
        %v252 = vadd.f32 %v213, %v248
        %v253 = vadd.f32 %v214, %v248
        %v254 = vadd.f32 %v215, %v248
        %v255 = vadd.f32 %v216, %v248
        %v256 = vadd.f32 %v217, %v248
        %v257 = vadd.f32 %v218, %v248
        %v258 = vadd.f32 %v219, %v248
        %v259 = vadd.f32 %v220, %v248
        %v260 = vadd.f32 %v221, %v248
        %v261 = vadd.f32 %v222, %v248
        %v262 = vadd.f32 %v223, %v248
        %v263 = vadd.f32 %v224, %v248
        %v264 = vadd.f32 %v225, %v248
        %v265 = vadd.f32 %v226, %v248
        %v266 = vadd.f32 %v227, %v248
        %v267 = vadd.f32 %v228, %v248
        %v268 = vadd.f32 %v229, %v248
        %v269 = vadd.f32 %v230, %v248
        %v270 = vadd.f32 %v231, %v248
        %v271 = vadd.f32 %v232, %v248
        %v272 = vadd.f32 %v233, %v248
        %v273 = vadd.f32 %v234, %v248
        %v274 = vadd.f32 %v235, %v248
        %v275 = vadd.f32 %v236, %v248
        %v276 = vadd.f32 %v237, %v248
        %v277 = vadd.f32 %v238, %v248
        %v278 = vadd.f32 %v239, %v248
        %v279 = vadd.f32 %v240, %v248
        %v280 = vadd.f32 %v241, %v248
        %v281 = vadd.f32 %v242, %v248
        %v282 = vmax.f32 %v250, 0.0
        %v283 = vmax.f32 %v251, 0.0
        %v284 = vmax.f32 %v252, 0.0
        %v285 = vmax.f32 %v253, 0.0
        %v286 = vmax.f32 %v254, 0.0
        %v287 = vmax.f32 %v255, 0.0
        %v288 = vmax.f32 %v256, 0.0
        %v289 = vmax.f32 %v257, 0.0
        %v290 = vmax.f32 %v258, 0.0
        %v291 = vmax.f32 %v259, 0.0
        %v292 = vmax.f32 %v260, 0.0
        %v293 = vmax.f32 %v261, 0.0
        %v294 = vmax.f32 %v262, 0.0
        %v295 = vmax.f32 %v263, 0.0
        %v296 = vmax.f32 %v264, 0.0
        %v297 = vmax.f32 %v265, 0.0
        %v298 = vmax.f32 %v266, 0.0
        %v299 = vmax.f32 %v267, 0.0
        %v300 = vmax.f32 %v268, 0.0
        %v301 = vmax.f32 %v269, 0.0
        %v302 = vmax.f32 %v270, 0.0
        %v303 = vmax.f32 %v271, 0.0
        %v304 = vmax.f32 %v272, 0.0
        %v305 = vmax.f32 %v273, 0.0
        %v306 = vmax.f32 %v274, 0.0
        %v307 = vmax.f32 %v275, 0.0
        %v308 = vmax.f32 %v276, 0.0
        %v309 = vmax.f32 %v277, 0.0
        %v310 = vmax.f32 %v278, 0.0
        %v311 = vmax.f32 %v279, 0.0
        %v312 = vmax.f32 %v280, 0.0
        %v313 = vmax.f32 %v281, 0.0
        %314 = vst [vmem:[%s164] sm:$0xff] %v282
        %315 = vst [vmem:[%s164 + $0x8] sm:$0xff] %v283
        %316 = vst [vmem:[%s164 + $0x10] sm:$0xff] %v284
        %317 = vst [vmem:[%s164 + $0x18] sm:$0xff] %v285
        %318 = vst [vmem:[%s164 + $0x20] sm:$0xff] %v286
        %319 = vst [vmem:[%s164 + $0x28] sm:$0xff] %v287
        %320 = vst [vmem:[%s164 + $0x30] sm:$0xff] %v288
        %321 = vst [vmem:[%s164 + $0x38] sm:$0xff] %v289
        %322 = vst [vmem:[%s164 + $0x40] sm:$0xff] %v290
        %323 = vst [vmem:[%s164 + $0x48] sm:$0xff] %v291
        %324 = vst [vmem:[%s164 + $0x50] sm:$0xff] %v292
        %325 = vst [vmem:[%s164 + $0x58] sm:$0xff] %v293
        %326 = vst [vmem:[%s164 + $0x60] sm:$0xff] %v294
        %327 = vst [vmem:[%s164 + $0x68] sm:$0xff] %v295
        %328 = vst [vmem:[%s164 + $0x70] sm:$0xff] %v296
        %329 = vst [vmem:[%s164 + $0x78] sm:$0xff] %v297
        %330 = vst [vmem:[%s164 + $0x80] sm:$0xff] %v298
        %331 = vst [vmem:[%s164 + $0x88] sm:$0xff] %v299
        %332 = vst [vmem:[%s164 + $0x90] sm:$0xff] %v300
        %333 = vst [vmem:[%s164 + $0x98] sm:$0xff] %v301
        %334 = vst [vmem:[%s164 + $0xa0] sm:$0xff] %v302
        %335 = vst [vmem:[%s164 + $0xa8] sm:$0xff] %v303
        %336 = vst [vmem:[%s164 + $0xb0] sm:$0xff] %v304
        %337 = vst [vmem:[%s164 + $0xb8] sm:$0xff] %v305
        %338 = vst [vmem:[%s164 + $0xc0] sm:$0xff] %v306
        %339 = vst [vmem:[%s164 + $0xc8] sm:$0xff] %v307
        %340 = vst [vmem:[%s164 + $0xd0] sm:$0xff] %v308
        %341 = vst [vmem:[%s164 + $0xd8] sm:$0xff] %v309
        %342 = vst [vmem:[%s164 + $0xe0] sm:$0xff] %v310
        %343 = vst [vmem:[%s164 + $0xe8] sm:$0xff] %v311
        %344 = vst [vmem:[%s164 + $0xf0] sm:$0xff] %v312
        %345 = vst [vmem:[%s164 + $0xf8] sm:$0xff] %v313
        %s346 = sand.u32 %s93, 1
        %s347 = scalar_lea.sflag [#allocation3], %s346
        %s348 = sand.u32 %s93, 1
        %s349 = smul.addr %s348, 256
        %s350 = scalar_lea.vmem [#allocation2], %s349
        // Predicated region
        $region33: #{conv3d_1_forward.7} parent=31 // pred_check
          %p351 = pneg %p103
        $region34: #{conv3d_1_forward.7} parent=31 // pred_check_branch
          %353 = sbr.rel (%p351) target = $region36
        $region35: #{conv3d_1_forward.7} parent=31 // pred_region
          %s354 = smul.u32 32, %s17
          %s356 = ssub.s32 4096, 4096
          %357 = vsyncadd %s347, %s356
          %s358 = smul.addr %s354, 128
          %s359 = scalar_lea.hbm %s3, %s358
          %s360 = sshll.u32 %s350, 4
          %s361 = int_to_ptr.vmem [resolvable:$true] %s360
          %366 = dma.vmem_to_hbm [thread:$0]  %s361, 4096, %s359, %s347, 128, 128, 8
        $region36: #{conv3d_1_forward.7} parent=31 // pred_fallthru
          _
      $region32: #{conv3d_1_forward.7} parent=5 // pred_fallthru
        _
      %p367 = scmp.le.s32.totalorder 2, %s12
      // Predicated region
      $region37: #{conv3d_1_forward.7} parent=5 // pred_check
        %p368 = pneg %p367
      $region38: #{conv3d_1_forward.7} parent=5 // pred_check_branch
        %370 = sbr.rel (%p368) target = $region40
      $region39: #{conv3d_1_forward.7} parent=5 // pred_region
        %s371 = ssub.s32 %s12, 2
        // Predicated region
        $region41: #{conv3d_1_forward.7} parent=39 // pred_check
          %p372 = pneg %p109
        $region42: #{conv3d_1_forward.7} parent=39 // pred_check_branch
          %374 = sbr.rel (%p372) target = $region44
        $region43: #{conv3d_1_forward.7} parent=39 // pred_region
          %s375 = sand.u32 %s94, 1
          %s376 = scalar_lea.sflag [#allocation3], %s375
          %s377 = sand.u32 %s94, 1
          %s378 = smul.addr %s377, 256
          %s379 = scalar_lea.vmem [#allocation2], %s378
          %380 = dma.done %s376, 4096
        $region44: #{conv3d_1_forward.7} parent=39 // pred_fallthru
          _
      $region40: #{conv3d_1_forward.7} parent=5 // pred_fallthru
        _
    $region6: #{conv3d_1_forward.7} parent=1 // loop_footer
      %s16 = sadd.s32 1, %s12
    $region7: #{conv3d_1_forward.7} parent=1 // loop_footer_branch
      %11 = sbr.rel target = $region3
    $region8: #{conv3d_1_forward.7} parent=1 // loop_exit
      _
    %381 = vsyncpa [#allocation3], 1
    %s382 = scalar_lea.sflag [#allocation3], 1
    %383 = vsyncpa %s382, 1

</llo_original>
